<compile_context>
chip_gen: v7x
topology: tpu7x:2x2x1
jax: 0.10.0
libtpu: 0.0.40
codegen_flags: <defaults>
</compile_context>

<pallas_src>
import functools

import numpy as np
import jax
import jax.numpy as jnp
from jax.experimental import pallas as pl
from jax.experimental.pallas import tpu as pltpu


# --------------------------------------------------------------------------
# Fused per-sample kernel: conv1+ReLU+pool -> conv2+ReLU+pool -> fc1+ReLU -> fc2
# --------------------------------------------------------------------------
def fused_cnn_kernel(x_ref, m1_ref, b1r_ref, sel1_ref,
                     m2_ref, b2r_ref, sel2_ref,
                     w1_ref, b1_ref, w2_ref, b2_ref,          # inputs
                     o_ref,                                   # output
                     x1s_ref, x2s_ref):                       # VMEM scratch
    # x_ref:   [1, 32, 32]   one input image (Cin = 1)
    # m1_ref:  [3, 32, 512]  bf16 per-kernel-row conv1 operators (pool-permuted cols)
    # m2_ref:  [768, 512]    bf16 fused-K conv2 operator (pool-permuted cols)
    # b*r_ref: [1, 512]      f32 conv bias tiled across w
    # sel*:    [2n, 2n]      bf16 row-parity selectors for the H-pool
    # w1/w2:   [2048,128]/[128,128] bf16 fc weights (lane-padded to 128)
    # b1/b2:   [1, 128]      f32 fc biases (lane-padded)
    # o_ref:   [1, 1, 128]   lane-dense logits (sliced outside)
    # x1s_ref: [34, 32]      H-zero-padded conv1 input slab
    # x2s_ref: [18, 256]     H-zero-padded conv2 input slab
    f32, bf16 = jnp.float32, jnp.bfloat16
    H1, W1 = x_ref.shape[1], x_ref.shape[2]        # 32, 32
    H2, H3 = H1 // 2, H1 // 4                      # 16, 8
    C1W = x2s_ref.shape[1]                         # (W1//2)*Cout1 = 256

    # ---------------- layer 1: conv1 + bias + ReLU + 2x2 max-pool ----------
    # Only the two pad rows are zeroed; the body is one 32-row block store.
    x1s_ref[0:1, :] = jnp.zeros((1, W1), f32)
    x1s_ref[H1 + 1:H1 + 2, :] = jnp.zeros((1, W1), f32)
    x1s_ref[1:H1 + 1, :] = x_ref[0]

    # One MXU matmul per kernel row di over all 32 output rows; the di shift
    # is a contiguous offset read of the tiny padded slab.
    y1 = jnp.dot(x1s_ref[0:H1, :].astype(bf16), m1_ref[0],
                 preferred_element_type=f32)
    y1 = y1 + jnp.dot(x1s_ref[1:H1 + 1, :].astype(bf16), m1_ref[1],
                      preferred_element_type=f32)
    y1 = y1 + jnp.dot(x1s_ref[2:H1 + 2, :].astype(bf16), m1_ref[2],
                      preferred_element_type=f32)
    y1 = jnp.maximum(y1 + b1r_ref[...], 0.0)                   # [32, 512]

    # W-pool: operator pre-separates even/odd output columns into the two
    # 256-wide lane halves -> pooling along W is one elementwise max.
    half = y1.shape[1] // 2
    p1w = jnp.maximum(y1[:, :half], y1[:, half:])               # [32, 256]

    # H-pool: one tiny selection matmul gathers even rows into sublanes
    # [0, 16) and odd rows into [16, 32); pool = one aligned sublane-half max.
    t1 = jnp.dot(sel1_ref[...], p1w.astype(bf16),
                 preferred_element_type=f32)                    # [32, 256]
    p1 = jnp.maximum(t1[:H2, :], t1[H2:, :])                    # [16, 256]

    # ---------------- layer 2: conv2 + bias + ReLU + 2x2 max-pool ----------
    x2s_ref[0:1, :] = jnp.zeros((1, C1W), f32)
    x2s_ref[H2 + 1:H2 + 2, :] = jnp.zeros((1, C1W), f32)
    x2s_ref[1:H2 + 1, :] = p1

    # Fused-K conv: the three di-shifted reads are lane-concatenated at
    # 256-aligned offsets and contracted in a single K=768 MXU matmul.
    lhs2 = jnp.concatenate(
        [x2s_ref[0:H2, :], x2s_ref[1:H2 + 1, :], x2s_ref[2:H2 + 2, :]],
        axis=1).astype(bf16)                                    # [16, 768]
    y2 = jnp.dot(lhs2, m2_ref[...], preferred_element_type=f32)
    y2 = jnp.maximum(y2 + b2r_ref[...], 0.0)                    # [16, 512]

    half2 = y2.shape[1] // 2
    p2w = jnp.maximum(y2[:, :half2], y2[:, half2:])             # [16, 256]
    t2 = jnp.dot(sel2_ref[...], p2w.astype(bf16),
                 preferred_element_type=f32)                    # [16, 256]
    p2 = jnp.maximum(t2[:H3, :], t2[H3:, :])                    # [8, 256]

    # ---------------- classifier head: fc1 + ReLU + fc2 --------------------
    # Flatten = lane-concat of the 8 pooled rows (aligned 256-wide pieces);
    # features never round-trip through a scratch buffer.
    feat = jnp.concatenate([p2[j:j + 1, :] for j in range(H3)], axis=1)
    h = jnp.dot(feat.astype(bf16), w1_ref[...],
                preferred_element_type=f32) + b1_ref[...]
    h = jnp.maximum(h, 0.0)
    o_ref[0] = (jnp.dot(h.astype(bf16), w2_ref[...],
                        preferred_element_type=f32) + b2_ref[...])


# --------------------------------------------------------------------------
# pallas_call wrapper (jit-able, purely device-side)
# --------------------------------------------------------------------------
@functools.partial(jax.jit, static_argnames=("num_classes",))
def simple_cnn_forward(x, m1, b1row, sel1, m2f, b2row, sel2,
                       w1p, b1p, w2p, b2p, *, num_classes=4):
    """Forward pass. `x` is NCHW [B, 1, 32, 32]; params from prepare_params()."""
    B, _, H, W = x.shape
    c1w = m1.shape[2] // 2                       # (W//2)*Cout1 = 256
    out = pl.pallas_call(
        fused_cnn_kernel,
        out_shape=jax.ShapeDtypeStruct((B, 1, w2p.shape[1]), jnp.float32),
        grid=(B,),
        in_specs=[
            pl.BlockSpec((1, H, W), lambda b: (b, 0, 0)),     # per-sample image
            pl.BlockSpec(m1.shape, lambda b: (0, 0, 0)),      # conv1 operator
            pl.BlockSpec(b1row.shape, lambda b: (0, 0)),
            pl.BlockSpec(sel1.shape, lambda b: (0, 0)),
            pl.BlockSpec(m2f.shape, lambda b: (0, 0)),        # conv2 operator
            pl.BlockSpec(b2row.shape, lambda b: (0, 0)),
            pl.BlockSpec(sel2.shape, lambda b: (0, 0)),
            pl.BlockSpec(w1p.shape, lambda b: (0, 0)),
            pl.BlockSpec(b1p.shape, lambda b: (0, 0)),
            pl.BlockSpec(w2p.shape, lambda b: (0, 0)),
            pl.BlockSpec(b2p.shape, lambda b: (0, 0)),
        ],
        out_specs=pl.BlockSpec((1, 1, w2p.shape[1]), lambda b: (b, 0, 0)),
        scratch_shapes=[
            pltpu.VMEM((H + 2, W), jnp.float32),          # padded conv1 input slab
            pltpu.VMEM((H // 2 + 2, c1w), jnp.float32),   # padded conv2 input slab
        ],
        compiler_params=pltpu.CompilerParams(
            dimension_semantics=("parallel",)),
    )(x.reshape(B, H, W), m1, b1row, sel1, m2f, b2row, sel2,
      w1p, b1p, w2p, b2p)
    return out[:, 0, :num_classes]


# --------------------------------------------------------------------------
# One-time host-side parameter preparation
# --------------------------------------------------------------------------
def _build_conv_operator(w_oihw, W):
    """Per-kernel-row im2col operator with pool-friendly output columns.

    M[di][wi*Cin + ci, out_col(wo, co)] = w[co, ci, di, dj],  wi = wo + dj - 1
    out_col(wo, co) = (wo % 2) * (W//2)*Cout + (wo // 2)*Cout + co
    Terms with wi outside [0, W) are omitted (== zero padding along W)."""
    w = np.asarray(w_oihw, np.float32)                 # [Cout, Cin, 3, 3]
    Cout, Cin, KH, KW = w.shape
    Wh = W // 2
    M = np.zeros((KH, W * Cin, W * Cout), np.float32)
    for di in range(KH):
        for dj in range(KW):
            wt = w[:, :, di, dj].T                     # [Cin, Cout]
            for wo in range(W):
                wi = wo + dj - 1
                if 0 <= wi < W:
                    c0 = (wo % 2) * Wh * Cout + (wo // 2) * Cout
                    M[di, wi * Cin:(wi + 1) * Cin, c0:c0 + Cout] = wt
    return M


def _build_pool_selector(n):
    """[2n, 2n] matrix: rows [0, n) pick even source rows, rows [n, 2n) pick
    odd source rows, so S @ X separates row parities into aligned sublane
    halves and the 2x2 H-pool becomes a single elementwise max."""
    S = np.zeros((2 * n, 2 * n), np.float32)
    for j in range(n):
        S[j, 2 * j] = 1.0
        S[n + j, 2 * j + 1] = 1.0
    return S


def prepare_params(w1c, b1c, w2c, b2c, w1f, b1f, w2f, b2f,
                   H=32, W=32, mxu_dtype=jnp.bfloat16):
    """Build all kernel operands ONCE on the host."""
    w1c = np.asarray(w1c, np.float32); b1c = np.asarray(b1c, np.float32)
    w2c = np.asarray(w2c, np.float32); b2c = np.asarray(b2c, np.float32)
    w1f = np.asarray(w1f, np.float32); b1f = np.asarray(b1f, np.float32)
    w2f = np.asarray(w2f, np.float32); b2f = np.asarray(b2f, np.float32)

    m1 = _build_conv_operator(w1c, W)                     # [3, 32, 512]
    m2 = _build_conv_operator(w2c, W // 2)                # [3, 256, 512]
    m2f = np.concatenate([m2[0], m2[1], m2[2]], axis=0)   # [768, 512] fused-K
    b1row = np.tile(b1c, W)[None, :]                      # [1, 512]
    b2row = np.tile(b2c, W // 2)[None, :]                 # [1, 512]
    sel1 = _build_pool_selector(H // 2)                   # [32, 32]
    sel2 = _build_pool_selector(H // 4)                   # [16, 16]

    # fc1: reorder columns from PyTorch's NCHW flatten (c*64 + h*8 + w) to the
    # kernel feature layout (h*256 + w*32 + c); pad widths to 128 lanes.
    hidden = w1f.shape[0]                                 # 120
    n_cls = w2f.shape[0]
    C2, H3, W3 = w2c.shape[0], H // 4, W // 4             # 32, 8, 8
    hid_pad = ((hidden + 127) // 128) * 128               # 128
    out_pad = ((n_cls + 127) // 128) * 128                # 128
    w1r = w1f.reshape(hidden, C2, H3, W3).transpose(2, 3, 1, 0)
    w1r = w1r.reshape(H3 * W3 * C2, hidden)
    w1p = np.zeros((w1r.shape[0], hid_pad), np.float32); w1p[:, :hidden] = w1r
    b1p = np.zeros((1, hid_pad), np.float32);            b1p[0, :hidden] = b1f
    w2p = np.zeros((hid_pad, out_pad), np.float32);      w2p[:hidden, :n_cls] = w2f.T
    b2p = np.zeros((1, out_pad), np.float32);            b2p[0, :n_cls] = b2f

    return (jnp.asarray(m1, mxu_dtype), jnp.asarray(b1row),
            jnp.asarray(sel1, mxu_dtype),
            jnp.asarray(m2f, mxu_dtype), jnp.asarray(b2row),
            jnp.asarray(sel2, mxu_dtype),
            jnp.asarray(w1p, mxu_dtype), jnp.asarray(b1p),
            jnp.asarray(w2p, mxu_dtype), jnp.asarray(b2p))


# --------------------------------------------------------------------------
# Pure-JAX reference (numerical sanity check)
# --------------------------------------------------------------------------
def reference_forward(x, w1c, b1c, w2c, b2c, w1f, b1f, w2f, b2f):
    def conv(y, w, b):
        out = jax.lax.conv_general_dilated(
            y, w, (1, 1), ((1, 1), (1, 1)),
            dimension_numbers=('NCHW', 'OIHW', 'NCHW'))
        return out + b[None, :, None, None]

    def pool(y):
        return jax.lax.reduce_window(y, -jnp.inf, jax.lax.max,
                                     (1, 1, 2, 2), (1, 1, 2, 2), 'VALID')

    y = pool(jnp.maximum(conv(x, w1c, b1c), 0.0))
    y = pool(jnp.maximum(conv(y, w2c, b2c), 0.0))
    y = y.reshape(x.shape[0], -1)
    y = jnp.maximum(y @ w1f.T + b1f, 0.0)
    return y @ w2f.T + b2f


# --------------------------------------------------------------------------
if __name__ == "__main__":
    key = jax.random.PRNGKey(0)
    ks = jax.random.split(key, 9)
    num_classes = 4
    B = 2

    # Input consistent with the module: 1 channel, 32x32 (fc1 expects 32*8*8).
    x = jax.random.normal(ks[0], (B, 1, 32, 32), jnp.float32)

    # Deterministic synthetic parameters (shapes from simpleCNN.__init__).
    w1c = jax.random.normal(ks[1], (16, 1, 3, 3), jnp.float32) / np.sqrt(9.0)
    b1c = jax.random.normal(ks[2], (16,), jnp.float32) * 0.1
    w2c = jax.random.normal(ks[3], (32, 16, 3, 3), jnp.float32) / np.sqrt(144.0)
    b2c = jax.random.normal(ks[4], (32,), jnp.float32) * 0.1
    w1f = jax.random.normal(ks[5], (120, 32 * 8 * 8), jnp.float32) / np.sqrt(2048.0)
    b1f = jax.random.normal(ks[6], (120,), jnp.float32) * 0.1
    w2f = jax.random.normal(ks[7], (num_classes, 120), jnp.float32) / np.sqrt(120.0)
    b2f = jax.random.normal(ks[8], (num_classes,), jnp.float32) * 0.1

    # One-time host-side parameter prep, then the fused Pallas forward.
    params = prepare_params(w1c, b1c, w2c, b2c, w1f, b1f, w2f, b2f)
    out = simple_cnn_forward(x, *params, num_classes=num_classes)
    out = jax.block_until_ready(out)

    assert out.shape == (B, num_classes)
    ref = jax.block_until_ready(
        reference_forward(x, w1c, b1c, w2c, b2c, w1f, b1f, w2f, b2f))
    # MXU operands are bf16 (f32 accumulation) -> compare at bf16 tolerance.
    np.testing.assert_allclose(np.asarray(out), np.asarray(ref),
                               atol=2e-2, rtol=2e-2)

    print("KERNEL_OK")
</pallas_src>

<mosaic_0001>
module attributes {stable_mosaic.version = 11 : i64} {
  func.func @fused_cnn_kernel(%arg0: i32, %arg1: memref<1x32x32xf32, #tpu.memory_space<vmem>>, %arg2: memref<3x32x512xbf16, #tpu.memory_space<vmem>>, %arg3: memref<1x512xf32, #tpu.memory_space<vmem>>, %arg4: memref<32x32xbf16, #tpu.memory_space<vmem>>, %arg5: memref<768x512xbf16, #tpu.memory_space<vmem>>, %arg6: memref<1x512xf32, #tpu.memory_space<vmem>>, %arg7: memref<16x16xbf16, #tpu.memory_space<vmem>>, %arg8: memref<2048x128xbf16, #tpu.memory_space<vmem>>, %arg9: memref<1x128xf32, #tpu.memory_space<vmem>>, %arg10: memref<128x128xbf16, #tpu.memory_space<vmem>>, %arg11: memref<1x128xf32, #tpu.memory_space<vmem>>, %arg12: memref<1x1x128xf32, #tpu.memory_space<vmem>>, %arg13: memref<34x32xf32, #tpu.memory_space<vmem>>, %arg14: memref<18x256xf32, #tpu.memory_space<vmem>>) attributes {dimension_semantics = [#tpu.dimension_semantics<parallel>], iteration_bounds = array<i64: 2>, scalar_prefetch = 0 : i64, scratch_operands = 2 : i64, tpu.core_type = #tpu.core_type<tc>, window_params = [{transform_indices = @transform_0, window_bounds = array<i64: 1, 32, 32>}, {pipeline_mode = #tpu.pipeline_mode<synchronous>, transform_indices = @transform_1, window_bounds = array<i64: 3, 32, 512>}, {pipeline_mode = #tpu.pipeline_mode<synchronous>, transform_indices = @transform_2, window_bounds = array<i64: 1, 512>}, {pipeline_mode = #tpu.pipeline_mode<synchronous>, transform_indices = @transform_3, window_bounds = array<i64: 32, 32>}, {pipeline_mode = #tpu.pipeline_mode<synchronous>, transform_indices = @transform_4, window_bounds = array<i64: 768, 512>}, {pipeline_mode = #tpu.pipeline_mode<synchronous>, transform_indices = @transform_5, window_bounds = array<i64: 1, 512>}, {pipeline_mode = #tpu.pipeline_mode<synchronous>, transform_indices = @transform_6, window_bounds = array<i64: 16, 16>}, {pipeline_mode = #tpu.pipeline_mode<synchronous>, transform_indices = @transform_7, window_bounds = array<i64: 2048, 128>}, {pipeline_mode = #tpu.pipeline_mode<synchronous>, transform_indices = @transform_8, window_bounds = array<i64: 1, 128>}, {pipeline_mode = #tpu.pipeline_mode<synchronous>, transform_indices = @transform_9, window_bounds = array<i64: 128, 128>}, {pipeline_mode = #tpu.pipeline_mode<synchronous>, transform_indices = @transform_10, window_bounds = array<i64: 1, 128>}, {transform_indices = @transform_11, window_bounds = array<i64: 1, 1, 128>}]} {
    %cst = arith.constant 0.000000e+00 : f32
    %0 = vector.broadcast %cst : f32 to vector<1x32xf32>
    %c0 = arith.constant 0 : index
    %c0_0 = arith.constant 0 : index
    %1 = vector.load %arg13[%c0, %c0_0] : memref<34x32xf32, #tpu.memory_space<vmem>>, vector<1x32xf32>
    tpu.vector_store %arg13[%c0, %c0_0], %0 {strides = array<i32>} : memref<34x32xf32, #tpu.memory_space<vmem>>, vector<1x32xf32>,
    %cst_1 = arith.constant 0.000000e+00 : f32
    %2 = vector.broadcast %cst_1 : f32 to vector<1x32xf32>
    %c33 = arith.constant 33 : index
    %c0_2 = arith.constant 0 : index
    %3 = vector.load %arg13[%c33, %c0_2] : memref<34x32xf32, #tpu.memory_space<vmem>>, vector<1x32xf32>
    tpu.vector_store %arg13[%c33, %c0_2], %2 {strides = array<i32>} : memref<34x32xf32, #tpu.memory_space<vmem>>, vector<1x32xf32>,
    %c0_3 = arith.constant 0 : index
    %c0_4 = arith.constant 0 : index
    %c0_5 = arith.constant 0 : index
    %4 = vector.load %arg1[%c0_3, %c0_4, %c0_5] : memref<1x32x32xf32, #tpu.memory_space<vmem>>, vector<1x32x32xf32>
    %5 = vector.shape_cast %4 : vector<1x32x32xf32> to vector<32x32xf32>
    %c1 = arith.constant 1 : index
    %c0_6 = arith.constant 0 : index
    %6 = vector.load %arg13[%c1, %c0_6] : memref<34x32xf32, #tpu.memory_space<vmem>>, vector<32x32xf32>
    tpu.vector_store %arg13[%c1, %c0_6], %5 {strides = array<i32>} : memref<34x32xf32, #tpu.memory_space<vmem>>, vector<32x32xf32>,
    %c0_7 = arith.constant 0 : index
    %c0_8 = arith.constant 0 : index
    %7 = vector.load %arg13[%c0_7, %c0_8] : memref<34x32xf32, #tpu.memory_space<vmem>>, vector<32x32xf32>
    %8 = arith.truncf %7 : vector<32x32xf32> to vector<32x32xbf16>
    %c0_9 = arith.constant 0 : index
    %c0_10 = arith.constant 0 : index
    %c0_11 = arith.constant 0 : index
    %9 = vector.load %arg2[%c0_9, %c0_10, %c0_11] : memref<3x32x512xbf16, #tpu.memory_space<vmem>>, vector<1x32x512xbf16>
    %10 = vector.shape_cast %9 : vector<1x32x512xbf16> to vector<32x512xbf16>
    %cst_12 = arith.constant dense<0.000000e+00> : vector<32x512xf32>
    %11 = tpu.matmul %8, %10, %cst_12 {dimension_numbers = #tpu.dot_dimension_numbers<[1], [0], [0], [1], [0, 0, 1, 1], [], []>} : vector<32x32xbf16>, vector<32x512xbf16>, vector<32x512xf32> -> vector<32x512xf32>
    %c1_13 = arith.constant 1 : index
    %c0_14 = arith.constant 0 : index
    %12 = vector.load %arg13[%c1_13, %c0_14] : memref<34x32xf32, #tpu.memory_space<vmem>>, vector<32x32xf32>
    %13 = arith.truncf %12 : vector<32x32xf32> to vector<32x32xbf16>
    %c1_15 = arith.constant 1 : index
    %c0_16 = arith.constant 0 : index
    %c0_17 = arith.constant 0 : index
    %14 = vector.load %arg2[%c1_15, %c0_16, %c0_17] : memref<3x32x512xbf16, #tpu.memory_space<vmem>>, vector<1x32x512xbf16>
    %15 = vector.shape_cast %14 : vector<1x32x512xbf16> to vector<32x512xbf16>
    %cst_18 = arith.constant dense<0.000000e+00> : vector<32x512xf32>
    %16 = tpu.matmul %13, %15, %cst_18 {dimension_numbers = #tpu.dot_dimension_numbers<[1], [0], [0], [1], [0, 0, 1, 1], [], []>} : vector<32x32xbf16>, vector<32x512xbf16>, vector<32x512xf32> -> vector<32x512xf32>
    %17 = arith.addf %11, %16 : vector<32x512xf32>
    %c2 = arith.constant 2 : index
    %c0_19 = arith.constant 0 : index
    %18 = vector.load %arg13[%c2, %c0_19] : memref<34x32xf32, #tpu.memory_space<vmem>>, vector<32x32xf32>
    %19 = arith.truncf %18 : vector<32x32xf32> to vector<32x32xbf16>
    %c2_20 = arith.constant 2 : index
    %c0_21 = arith.constant 0 : index
    %c0_22 = arith.constant 0 : index
    %20 = vector.load %arg2[%c2_20, %c0_21, %c0_22] : memref<3x32x512xbf16, #tpu.memory_space<vmem>>, vector<1x32x512xbf16>
    %21 = vector.shape_cast %20 : vector<1x32x512xbf16> to vector<32x512xbf16>
    %cst_23 = arith.constant dense<0.000000e+00> : vector<32x512xf32>
    %22 = tpu.matmul %19, %21, %cst_23 {dimension_numbers = #tpu.dot_dimension_numbers<[1], [0], [0], [1], [0, 0, 1, 1], [], []>} : vector<32x32xbf16>, vector<32x512xbf16>, vector<32x512xf32> -> vector<32x512xf32>
    %23 = arith.addf %17, %22 : vector<32x512xf32>
    %c0_24 = arith.constant 0 : index
    %c0_25 = arith.constant 0 : index
    %24 = vector.load %arg3[%c0_24, %c0_25] : memref<1x512xf32, #tpu.memory_space<vmem>>, vector<1x512xf32>
    %25 = vector.broadcast %24 : vector<1x512xf32> to vector<32x512xf32>
    %26 = arith.addf %23, %25 : vector<32x512xf32>
    %cst_26 = arith.constant 0.000000e+00 : f32
    %27 = vector.broadcast %cst_26 : f32 to vector<32x512xf32>
    %28 = arith.maximumf %26, %27 : vector<32x512xf32>
    %29 = vector.extract_strided_slice %28 {offsets = [0, 0], sizes = [32, 256], strides = [1, 1]} : vector<32x512xf32> to vector<32x256xf32>
    %30 = vector.extract_strided_slice %28 {offsets = [0, 256], sizes = [32, 256], strides = [1, 1]} : vector<32x512xf32> to vector<32x256xf32>
    %31 = arith.maximumf %29, %30 : vector<32x256xf32>
    %c0_27 = arith.constant 0 : index
    %c0_28 = arith.constant 0 : index
    %32 = vector.load %arg4[%c0_27, %c0_28] : memref<32x32xbf16, #tpu.memory_space<vmem>>, vector<32x32xbf16>
    %33 = arith.truncf %31 : vector<32x256xf32> to vector<32x256xbf16>
    %cst_29 = arith.constant dense<0.000000e+00> : vector<32x256xf32>
    %34 = tpu.matmul %32, %33, %cst_29 {dimension_numbers = #tpu.dot_dimension_numbers<[1], [0], [0], [1], [0, 0, 1, 1], [], []>} : vector<32x32xbf16>, vector<32x256xbf16>, vector<32x256xf32> -> vector<32x256xf32>
    %35 = vector.extract_strided_slice %34 {offsets = [0, 0], sizes = [16, 256], strides = [1, 1]} : vector<32x256xf32> to vector<16x256xf32>
    %36 = vector.extract_strided_slice %34 {offsets = [16, 0], sizes = [16, 256], strides = [1, 1]} : vector<32x256xf32> to vector<16x256xf32>
    %37 = arith.maximumf %35, %36 : vector<16x256xf32>
    %cst_30 = arith.constant 0.000000e+00 : f32
    %38 = vector.broadcast %cst_30 : f32 to vector<1x256xf32>
    %c0_31 = arith.constant 0 : index
    %c0_32 = arith.constant 0 : index
    %39 = vector.load %arg14[%c0_31, %c0_32] : memref<18x256xf32, #tpu.memory_space<vmem>>, vector<1x256xf32>
    tpu.vector_store %arg14[%c0_31, %c0_32], %38 {strides = array<i32>} : memref<18x256xf32, #tpu.memory_space<vmem>>, vector<1x256xf32>,
    %cst_33 = arith.constant 0.000000e+00 : f32
    %40 = vector.broadcast %cst_33 : f32 to vector<1x256xf32>
    %c17 = arith.constant 17 : index
    %c0_34 = arith.constant 0 : index
    %41 = vector.load %arg14[%c17, %c0_34] : memref<18x256xf32, #tpu.memory_space<vmem>>, vector<1x256xf32>
    tpu.vector_store %arg14[%c17, %c0_34], %40 {strides = array<i32>} : memref<18x256xf32, #tpu.memory_space<vmem>>, vector<1x256xf32>,
    %c1_35 = arith.constant 1 : index
    %c0_36 = arith.constant 0 : index
    %42 = vector.load %arg14[%c1_35, %c0_36] : memref<18x256xf32, #tpu.memory_space<vmem>>, vector<16x256xf32>
    tpu.vector_store %arg14[%c1_35, %c0_36], %37 {strides = array<i32>} : memref<18x256xf32, #tpu.memory_space<vmem>>, vector<16x256xf32>,
    %c0_37 = arith.constant 0 : index
    %c0_38 = arith.constant 0 : index
    %43 = vector.load %arg14[%c0_37, %c0_38] : memref<18x256xf32, #tpu.memory_space<vmem>>, vector<16x256xf32>
    %c1_39 = arith.constant 1 : index
    %c0_40 = arith.constant 0 : index
    %44 = vector.load %arg14[%c1_39, %c0_40] : memref<18x256xf32, #tpu.memory_space<vmem>>, vector<16x256xf32>
    %c2_41 = arith.constant 2 : index
    %c0_42 = arith.constant 0 : index
    %45 = vector.load %arg14[%c2_41, %c0_42] : memref<18x256xf32, #tpu.memory_space<vmem>>, vector<16x256xf32>
    %46 = tpu.concatenate %43, %44, %45 in 1 : vector<16x256xf32>, vector<16x256xf32>, vector<16x256xf32> -> vector<16x768xf32>
    %47 = arith.truncf %46 : vector<16x768xf32> to vector<16x768xbf16>
    %c0_43 = arith.constant 0 : index
    %c0_44 = arith.constant 0 : index
    %48 = vector.load %arg5[%c0_43, %c0_44] : memref<768x512xbf16, #tpu.memory_space<vmem>>, vector<768x512xbf16>
    %cst_45 = arith.constant dense<0.000000e+00> : vector<16x512xf32>
    %49 = tpu.matmul %47, %48, %cst_45 {dimension_numbers = #tpu.dot_dimension_numbers<[1], [0], [0], [1], [0, 0, 1, 1], [], []>} : vector<16x768xbf16>, vector<768x512xbf16>, vector<16x512xf32> -> vector<16x512xf32>
    %c0_46 = arith.constant 0 : index
    %c0_47 = arith.constant 0 : index
    %50 = vector.load %arg6[%c0_46, %c0_47] : memref<1x512xf32, #tpu.memory_space<vmem>>, vector<1x512xf32>
    %51 = vector.broadcast %50 : vector<1x512xf32> to vector<16x512xf32>
    %52 = arith.addf %49, %51 : vector<16x512xf32>
    %cst_48 = arith.constant 0.000000e+00 : f32
    %53 = vector.broadcast %cst_48 : f32 to vector<16x512xf32>
    %54 = arith.maximumf %52, %53 : vector<16x512xf32>
    %55 = vector.extract_strided_slice %54 {offsets = [0, 0], sizes = [16, 256], strides = [1, 1]} : vector<16x512xf32> to vector<16x256xf32>
    %56 = vector.extract_strided_slice %54 {offsets = [0, 256], sizes = [16, 256], strides = [1, 1]} : vector<16x512xf32> to vector<16x256xf32>
    %57 = arith.maximumf %55, %56 : vector<16x256xf32>
    %c0_49 = arith.constant 0 : index
    %c0_50 = arith.constant 0 : index
    %58 = vector.load %arg7[%c0_49, %c0_50] : memref<16x16xbf16, #tpu.memory_space<vmem>>, vector<16x16xbf16>
    %59 = arith.truncf %57 : vector<16x256xf32> to vector<16x256xbf16>
    %cst_51 = arith.constant dense<0.000000e+00> : vector<16x256xf32>
    %60 = tpu.matmul %58, %59, %cst_51 {dimension_numbers = #tpu.dot_dimension_numbers<[1], [0], [0], [1], [0, 0, 1, 1], [], []>} : vector<16x16xbf16>, vector<16x256xbf16>, vector<16x256xf32> -> vector<16x256xf32>
    %61 = vector.extract_strided_slice %60 {offsets = [0, 0], sizes = [8, 256], strides = [1, 1]} : vector<16x256xf32> to vector<8x256xf32>
    %62 = vector.extract_strided_slice %60 {offsets = [8, 0], sizes = [8, 256], strides = [1, 1]} : vector<16x256xf32> to vector<8x256xf32>
    %63 = arith.maximumf %61, %62 : vector<8x256xf32>
    %64 = vector.extract_strided_slice %63 {offsets = [0, 0], sizes = [1, 256], strides = [1, 1]} : vector<8x256xf32> to vector<1x256xf32>
    %65 = vector.extract_strided_slice %63 {offsets = [1, 0], sizes = [1, 256], strides = [1, 1]} : vector<8x256xf32> to vector<1x256xf32>
    %66 = vector.extract_strided_slice %63 {offsets = [2, 0], sizes = [1, 256], strides = [1, 1]} : vector<8x256xf32> to vector<1x256xf32>
    %67 = vector.extract_strided_slice %63 {offsets = [3, 0], sizes = [1, 256], strides = [1, 1]} : vector<8x256xf32> to vector<1x256xf32>
    %68 = vector.extract_strided_slice %63 {offsets = [4, 0], sizes = [1, 256], strides = [1, 1]} : vector<8x256xf32> to vector<1x256xf32>
    %69 = vector.extract_strided_slice %63 {offsets = [5, 0], sizes = [1, 256], strides = [1, 1]} : vector<8x256xf32> to vector<1x256xf32>
    %70 = vector.extract_strided_slice %63 {offsets = [6, 0], sizes = [1, 256], strides = [1, 1]} : vector<8x256xf32> to vector<1x256xf32>
    %71 = vector.extract_strided_slice %63 {offsets = [7, 0], sizes = [1, 256], strides = [1, 1]} : vector<8x256xf32> to vector<1x256xf32>
    %72 = tpu.concatenate %64, %65, %66, %67, %68, %69, %70, %71 in 1 : vector<1x256xf32>, vector<1x256xf32>, vector<1x256xf32>, vector<1x256xf32>, vector<1x256xf32>, vector<1x256xf32>, vector<1x256xf32>, vector<1x256xf32> -> vector<1x2048xf32>
    %73 = arith.truncf %72 : vector<1x2048xf32> to vector<1x2048xbf16>
    %c0_52 = arith.constant 0 : index
    %c0_53 = arith.constant 0 : index
    %74 = vector.load %arg8[%c0_52, %c0_53] : memref<2048x128xbf16, #tpu.memory_space<vmem>>, vector<2048x128xbf16>
    %cst_54 = arith.constant dense<0.000000e+00> : vector<1x128xf32>
    %75 = tpu.matmul %73, %74, %cst_54 {dimension_numbers = #tpu.dot_dimension_numbers<[1], [0], [0], [1], [0, 0, 1, 1], [], []>} : vector<1x2048xbf16>, vector<2048x128xbf16>, vector<1x128xf32> -> vector<1x128xf32>
    %c0_55 = arith.constant 0 : index
    %c0_56 = arith.constant 0 : index
    %76 = vector.load %arg9[%c0_55, %c0_56] : memref<1x128xf32, #tpu.memory_space<vmem>>, vector<1x128xf32>
    %77 = arith.addf %75, %76 : vector<1x128xf32>
    %cst_57 = arith.constant 0.000000e+00 : f32
    %78 = vector.broadcast %cst_57 : f32 to vector<1x128xf32>
    %79 = arith.maximumf %77, %78 : vector<1x128xf32>
    %80 = arith.truncf %79 : vector<1x128xf32> to vector<1x128xbf16>
    %c0_58 = arith.constant 0 : index
    %c0_59 = arith.constant 0 : index
    %81 = vector.load %arg10[%c0_58, %c0_59] : memref<128x128xbf16, #tpu.memory_space<vmem>>, vector<128x128xbf16>
    %cst_60 = arith.constant dense<0.000000e+00> : vector<1x128xf32>
    %82 = tpu.matmul %80, %81, %cst_60 {dimension_numbers = #tpu.dot_dimension_numbers<[1], [0], [0], [1], [0, 0, 1, 1], [], []>} : vector<1x128xbf16>, vector<128x128xbf16>, vector<1x128xf32> -> vector<1x128xf32>
    %c0_61 = arith.constant 0 : index
    %c0_62 = arith.constant 0 : index
    %83 = vector.load %arg11[%c0_61, %c0_62] : memref<1x128xf32, #tpu.memory_space<vmem>>, vector<1x128xf32>
    %84 = arith.addf %82, %83 : vector<1x128xf32>
    %c0_63 = arith.constant 0 : index
    %c0_64 = arith.constant 0 : index
    %c0_65 = arith.constant 0 : index
    %85 = vector.load %arg12[%c0_63, %c0_64, %c0_65] : memref<1x1x128xf32, #tpu.memory_space<vmem>>, vector<1x1x128xf32>
    %86 = vector.shape_cast %85 : vector<1x1x128xf32> to vector<1x128xf32>
    %87 = vector.shape_cast %84 : vector<1x128xf32> to vector<1x1x128xf32>
    tpu.vector_store %arg12[%c0_63, %c0_64, %c0_65], %87 {strides = array<i32>} : memref<1x1x128xf32, #tpu.memory_space<vmem>>, vector<1x1x128xf32>,
    return
  }
  func.func @transform_0(%arg0: i32) -> (i32, i32, i32) {
    %c0_i32 = arith.constant 0 : i32
    %c0_i32_0 = arith.constant 0 : i32
    %c0_i32_1 = arith.constant 0 : i32
    return %arg0, %c0_i32, %c0_i32_0 : i32, i32, i32
  }
  func.func @transform_1(%arg0: i32) -> (i32, i32, i32) {
    %c0_i32 = arith.constant 0 : i32
    %c0_i32_0 = arith.constant 0 : i32
    %c0_i32_1 = arith.constant 0 : i32
    %c0_i32_2 = arith.constant 0 : i32
    return %c0_i32, %c0_i32_0, %c0_i32_1 : i32, i32, i32
  }
  func.func @transform_2(%arg0: i32) -> (i32, i32) {
    %c0_i32 = arith.constant 0 : i32
    %c0_i32_0 = arith.constant 0 : i32
    %c0_i32_1 = arith.constant 0 : i32
    return %c0_i32, %c0_i32_0 : i32, i32
  }
  func.func @transform_3(%arg0: i32) -> (i32, i32) {
    %c0_i32 = arith.constant 0 : i32
    %c0_i32_0 = arith.constant 0 : i32
    %c0_i32_1 = arith.constant 0 : i32
    return %c0_i32, %c0_i32_0 : i32, i32
  }
  func.func @transform_4(%arg0: i32) -> (i32, i32) {
    %c0_i32 = arith.constant 0 : i32
    %c0_i32_0 = arith.constant 0 : i32
    %c0_i32_1 = arith.constant 0 : i32
    return %c0_i32, %c0_i32_0 : i32, i32
  }
  func.func @transform_5(%arg0: i32) -> (i32, i32) {
    %c0_i32 = arith.constant 0 : i32
    %c0_i32_0 = arith.constant 0 : i32
    %c0_i32_1 = arith.constant 0 : i32
    return %c0_i32, %c0_i32_0 : i32, i32
  }
  func.func @transform_6(%arg0: i32) -> (i32, i32) {
    %c0_i32 = arith.constant 0 : i32
    %c0_i32_0 = arith.constant 0 : i32
    %c0_i32_1 = arith.constant 0 : i32
    return %c0_i32, %c0_i32_0 : i32, i32
  }
  func.func @transform_7(%arg0: i32) -> (i32, i32) {
    %c0_i32 = arith.constant 0 : i32
    %c0_i32_0 = arith.constant 0 : i32
    %c0_i32_1 = arith.constant 0 : i32
    return %c0_i32, %c0_i32_0 : i32, i32
  }
  func.func @transform_8(%arg0: i32) -> (i32, i32) {
    %c0_i32 = arith.constant 0 : i32
    %c0_i32_0 = arith.constant 0 : i32
    %c0_i32_1 = arith.constant 0 : i32
    return %c0_i32, %c0_i32_0 : i32, i32
  }
  func.func @transform_9(%arg0: i32) -> (i32, i32) {
    %c0_i32 = arith.constant 0 : i32
    %c0_i32_0 = arith.constant 0 : i32
    %c0_i32_1 = arith.constant 0 : i32
    return %c0_i32, %c0_i32_0 : i32, i32
  }
  func.func @transform_10(%arg0: i32) -> (i32, i32) {
    %c0_i32 = arith.constant 0 : i32
    %c0_i32_0 = arith.constant 0 : i32
    %c0_i32_1 = arith.constant 0 : i32
    return %c0_i32, %c0_i32_0 : i32, i32
  }
  func.func @transform_11(%arg0: i32) -> (i32, i32, i32) {
    %c0_i32 = arith.constant 0 : i32
    %c0_i32_0 = arith.constant 0 : i32
    %c0_i32_1 = arith.constant 0 : i32
    return %arg0, %c0_i32, %c0_i32_0 : i32, i32, i32
  }
}

</mosaic_0001>

<llo_original>
// kernel: simple_cnn_forward.1
$region0: #{simple_cnn_forward.1}
  #allocation0 [shape = 'u32[]', space=smem, size = 0x4, offset = 0x4, fixed_abs, tag = 'smem constant byte address 0x4 - core index']
  #allocation1 [shape = 'u32[144,128]{1,0:T(1,128)}', space=vmem, size = 0x12000, scoped, tag = 'internal scratch']
  #allocation2 [shape = 'f32[34,32]{1,0:T(8,128)}', space=vmem, size = 0x5000, scoped, tag = 'scratch operand']
  #allocation3 [shape = 'f32[18,256]{1,0:T(8,128)}', space=vmem, size = 0x6000, scoped, tag = 'scratch operand']
  %s0 = inlined_call_operand.hbm [shape: f32[2,32,32], index: 0, kind: input, shape index: {}]
  %s1 = inlined_call_operand.hbm [shape: bf16[3,32,512], index: 1, kind: input, shape index: {}]
  %s2 = inlined_call_operand.vmem [shape: f32[1,512], index: 2, kind: input, shape index: {}]
  %s3 = inlined_call_operand.hbm [shape: bf16[32,32], index: 3, kind: input, shape index: {}]
  %s4 = inlined_call_operand.hbm [shape: bf16[768,512], index: 4, kind: input, shape index: {}]
  %s5 = inlined_call_operand.vmem [shape: f32[1,512], index: 5, kind: input, shape index: {}]
  %s6 = inlined_call_operand.vmem [shape: bf16[16,16], index: 6, kind: input, shape index: {}]
  %s7 = inlined_call_operand.hbm [shape: bf16[2048,128], index: 7, kind: input, shape index: {}]
  %s8 = inlined_call_operand.vmem [shape: f32[1,128], index: 8, kind: input, shape index: {}]
  %s9 = inlined_call_operand.hbm [shape: bf16[128,128], index: 9, kind: input, shape index: {}]
  %s10 = inlined_call_operand.vmem [shape: f32[1,128], index: 10, kind: input, shape index: {}]
  %s11 = inlined_call_operand.hbm [shape: f32[2,1,128], index: 11, kind: output, shape index: {}]
  %s12 = sld [smem:[#allocation0]]
  $region101: #{simple_cnn_forward.1} parent=0
    _
  %s14 = ssub.s32 1, %s12
  %s15 = scalar_select 0, %s14, %s12
  $region1: #{simple_cnn_forward.1} parent=0
    #allocation4 [shape = 'u8[32768]{0}', space=vmem, size = 0x8000, scoped, tag = 'input window, operand 0']
    #allocation5 [shape = 's32[2]{0}', space=sflag, size = 0x8, scoped, tag = 'scoped memory for simple_cnn_forward.1']
    #allocation6 [shape = 's32[2]{0}', space=sflag, size = 0x8, scoped, tag = 'scoped memory for simple_cnn_forward.1']
    #allocation7 [shape = 'u8[98304]{0}', space=vmem, size = 0x18000, scoped, tag = 'input window, operand 1, single buffered']
    #allocation8 [shape = 's32[1]{0}', space=sflag, size = 0x4, scoped, tag = 'scoped memory for simple_cnn_forward.1']
    #allocation9 [shape = 'u8[8192]{0}', space=vmem, size = 0x2000, scoped, tag = 'input window, operand 3, single buffered']
    #allocation10 [shape = 'u8[786432]{0}', space=vmem, size = 0xc0000, scoped, tag = 'input window, operand 4, single buffered']
    #allocation11 [shape = 's32[1]{0}', space=sflag, size = 0x4, scoped, tag = 'scoped memory for simple_cnn_forward.1']
    #allocation12 [shape = 'u8[524288]{0}', space=vmem, size = 0x80000, scoped, tag = 'input window, operand 7, single buffered']
    #allocation13 [shape = 'u8[32768]{0}', space=vmem, size = 0x8000, scoped, tag = 'input window, operand 9, single buffered']
    #allocation14 [shape = 's32[1]{0}', space=sflag, size = 0x4, scoped, tag = 'scoped memory for simple_cnn_forward.1']
    #allocation15 [shape = 'u8[1024]{0}', space=vmem, size = 0x400, scoped, tag = 'output window, operand 0']
    %16 = vsyncpa [#allocation5], 0
    %s17 = scalar_lea.sflag [#allocation5], 1
    %18 = vsyncpa %s17, 0
    %19 = vsyncpa [#allocation8], 0
    %20 = vsyncpa [#allocation11], 0
    %21 = vsyncpa [#allocation14], 0
    %22 = vsyncpa [#allocation6], 0
    %s23 = scalar_lea.sflag [#allocation6], 1
    %24 = vsyncpa %s23, 0
    loop: start=0, step=1, limit=4
    $region2: #{simple_cnn_forward.1} parent=1 // loop_pre_header
      _
    $region3: #{simple_cnn_forward.1} parent=1 // loop_header
      %s26 = sphi 0, %s30
      %p27 = scmp.ge.s32.totalorder %s26, 4
      %s36 = sphi 0, %s38
      %s39 = sphi 0, %s36
      %s40 = sphi 0, %s39
      %s56 = sphi 0, %s40
      %s60 = sphi 0, %s60
      %s62 = sphi 0, %s60
      %s63 = sphi 0, %s62
      %s77 = sphi 0, %s63
      %s81 = sphi 0, %s81
      %s83 = sphi 0, %s81
      %s84 = sphi 0, %s83
      %s98 = sphi 0, %s84
      %s102 = sphi 0, %s102
      %s104 = sphi 0, %s102
      %s105 = sphi 0, %s104
      %s119 = sphi 0, %s105
      %s123 = sphi 0, %s123
      %s125 = sphi 0, %s123
      %s126 = sphi 0, %s125
      %s140 = sphi 0, %s126
      %s144 = sphi 0, %s144
      %s146 = sphi 0, %s144
      %s147 = sphi 0, %s146
      %s161 = sphi 0, %s147
      %s165 = sphi 0, %s165
      %s167 = sphi 0, %s165
      %s168 = sphi 0, %s167
      %s182 = sphi 0, %s168
      %s186 = sphi 0, %s186
      %s188 = sphi 0, %s186
      %s189 = sphi 0, %s188
      %s203 = sphi 0, %s189
      %s207 = sphi 0, %s207
      %s209 = sphi 0, %s207
      %s210 = sphi 0, %s209
      %s224 = sphi 0, %s210
      %s228 = sphi 0, %s228
      %s230 = sphi 0, %s228
      %s231 = sphi 0, %s230
      %s245 = sphi 0, %s231
      %s249 = sphi 0, %s249
      %s251 = sphi 0, %s249
      %s252 = sphi 0, %s251
      %s266 = sphi 0, %s252
      %s272 = sphi 0, %s274
      %s275 = sphi 0, %s272
      %s276 = sphi 0, %s275
      %s292 = sphi 0, %s276
    $region4: #{simple_cnn_forward.1} parent=1 // loop_header_branch
      %29 = sbr.rel (%p27) target = $region8
    $region5: #{simple_cnn_forward.1} parent=1 // loop_body
      %s31 = ssub.s32 %s26, 1
      %s32 = ssub.s32 %s26, 2
      %s33 = sadd.s32 %s26, 1
      %s34 = ssub.s32 %s26, %s33
      %p35 = scmp.eq.s32.totalorder %s34, 0
      %s37 = sadd.s32 %s36, 1
      %s38 = scalar_select %p35, %s36, %s37
      %p41 = pneg %p35
      %p42 = scmp.eq.s32.totalorder %s26, 1
      %p43 = por %p41, %p42
      %p44 = scmp.ne.s32.totalorder %s36, %s39
      %p45 = scmp.eq.s32.totalorder %s26, 0
      %p46 = por %p44, %p45
      %p47 = scmp.ne.s32.totalorder %s36, %s39
      %p48 = scmp.eq.s32.totalorder %s31, 1
      %p49 = por %p47, %p48
      %p50 = scmp.ne.s32.totalorder %s39, %s40
      %p51 = scmp.eq.s32.totalorder %s31, 0
      %p52 = por %p50, %p51
      %p53 = scmp.ne.s32.totalorder %s39, %s40
      %p54 = scmp.eq.s32.totalorder %s32, 1
      %p55 = por %p53, %p54
      %p57 = scmp.ne.s32.totalorder %s40, %s56
      %p58 = scmp.eq.s32.totalorder %s32, 0
      %p59 = por %p57, %p58
      %s61 = sadd.s32 %s60, 1
      %p64 = scmp.eq.s32.totalorder %s26, 1
      %p65 = scmp.ne.s32.totalorder %s60, %s62
      %p66 = scmp.eq.s32.totalorder %s26, 0
      %p67 = por %p65, %p66
      %p68 = scmp.ne.s32.totalorder %s60, %s62
      %p69 = scmp.eq.s32.totalorder %s31, 1
      %p70 = por %p68, %p69
      %p71 = scmp.ne.s32.totalorder %s62, %s63
      %p72 = scmp.eq.s32.totalorder %s31, 0
      %p73 = por %p71, %p72
      %p74 = scmp.ne.s32.totalorder %s62, %s63
      %p75 = scmp.eq.s32.totalorder %s32, 1
      %p76 = por %p74, %p75
      %p78 = scmp.ne.s32.totalorder %s63, %s77
      %p79 = scmp.eq.s32.totalorder %s32, 0
      %p80 = por %p78, %p79
      %s82 = sadd.s32 %s81, 1
      %p85 = scmp.eq.s32.totalorder %s26, 1
      %p86 = scmp.ne.s32.totalorder %s81, %s83
      %p87 = scmp.eq.s32.totalorder %s26, 0
      %p88 = por %p86, %p87
      %p89 = scmp.ne.s32.totalorder %s81, %s83
      %p90 = scmp.eq.s32.totalorder %s31, 1
      %p91 = por %p89, %p90
      %p92 = scmp.ne.s32.totalorder %s83, %s84
      %p93 = scmp.eq.s32.totalorder %s31, 0
      %p94 = por %p92, %p93
      %p95 = scmp.ne.s32.totalorder %s83, %s84
      %p96 = scmp.eq.s32.totalorder %s32, 1
      %p97 = por %p95, %p96
      %p99 = scmp.ne.s32.totalorder %s84, %s98
      %p100 = scmp.eq.s32.totalorder %s32, 0
      %p101 = por %p99, %p100
      %s103 = sadd.s32 %s102, 1
      %p106 = scmp.eq.s32.totalorder %s26, 1
      %p107 = scmp.ne.s32.totalorder %s102, %s104
      %p108 = scmp.eq.s32.totalorder %s26, 0
      %p109 = por %p107, %p108
      %p110 = scmp.ne.s32.totalorder %s102, %s104
      %p111 = scmp.eq.s32.totalorder %s31, 1
      %p112 = por %p110, %p111
      %p113 = scmp.ne.s32.totalorder %s104, %s105
      %p114 = scmp.eq.s32.totalorder %s31, 0
      %p115 = por %p113, %p114
      %p116 = scmp.ne.s32.totalorder %s104, %s105
      %p117 = scmp.eq.s32.totalorder %s32, 1
      %p118 = por %p116, %p117
      %p120 = scmp.ne.s32.totalorder %s105, %s119
      %p121 = scmp.eq.s32.totalorder %s32, 0
      %p122 = por %p120, %p121
      %s124 = sadd.s32 %s123, 1
      %p127 = scmp.eq.s32.totalorder %s26, 1
      %p128 = scmp.ne.s32.totalorder %s123, %s125
      %p129 = scmp.eq.s32.totalorder %s26, 0
      %p130 = por %p128, %p129
      %p131 = scmp.ne.s32.totalorder %s123, %s125
      %p132 = scmp.eq.s32.totalorder %s31, 1
      %p133 = por %p131, %p132
      %p134 = scmp.ne.s32.totalorder %s125, %s126
      %p135 = scmp.eq.s32.totalorder %s31, 0
      %p136 = por %p134, %p135
      %p137 = scmp.ne.s32.totalorder %s125, %s126
      %p138 = scmp.eq.s32.totalorder %s32, 1
      %p139 = por %p137, %p138
      %p141 = scmp.ne.s32.totalorder %s126, %s140
      %p142 = scmp.eq.s32.totalorder %s32, 0
      %p143 = por %p141, %p142
      %s145 = sadd.s32 %s144, 1
      %p148 = scmp.eq.s32.totalorder %s26, 1
      %p149 = scmp.ne.s32.totalorder %s144, %s146
      %p150 = scmp.eq.s32.totalorder %s26, 0
      %p151 = por %p149, %p150
      %p152 = scmp.ne.s32.totalorder %s144, %s146
      %p153 = scmp.eq.s32.totalorder %s31, 1
      %p154 = por %p152, %p153
      %p155 = scmp.ne.s32.totalorder %s146, %s147
      %p156 = scmp.eq.s32.totalorder %s31, 0
      %p157 = por %p155, %p156
      %p158 = scmp.ne.s32.totalorder %s146, %s147
      %p159 = scmp.eq.s32.totalorder %s32, 1
      %p160 = por %p158, %p159
      %p162 = scmp.ne.s32.totalorder %s147, %s161
      %p163 = scmp.eq.s32.totalorder %s32, 0
      %p164 = por %p162, %p163
      %s166 = sadd.s32 %s165, 1
      %p169 = scmp.eq.s32.totalorder %s26, 1
      %p170 = scmp.ne.s32.totalorder %s165, %s167
      %p171 = scmp.eq.s32.totalorder %s26, 0
      %p172 = por %p170, %p171
      %p173 = scmp.ne.s32.totalorder %s165, %s167
      %p174 = scmp.eq.s32.totalorder %s31, 1
      %p175 = por %p173, %p174
      %p176 = scmp.ne.s32.totalorder %s167, %s168
      %p177 = scmp.eq.s32.totalorder %s31, 0
      %p178 = por %p176, %p177
      %p179 = scmp.ne.s32.totalorder %s167, %s168
      %p180 = scmp.eq.s32.totalorder %s32, 1
      %p181 = por %p179, %p180
      %p183 = scmp.ne.s32.totalorder %s168, %s182
      %p184 = scmp.eq.s32.totalorder %s32, 0
      %p185 = por %p183, %p184
      %s187 = sadd.s32 %s186, 1
      %p190 = scmp.eq.s32.totalorder %s26, 1
      %p191 = scmp.ne.s32.totalorder %s186, %s188
      %p192 = scmp.eq.s32.totalorder %s26, 0
      %p193 = por %p191, %p192
      %p194 = scmp.ne.s32.totalorder %s186, %s188
      %p195 = scmp.eq.s32.totalorder %s31, 1
      %p196 = por %p194, %p195
      %p197 = scmp.ne.s32.totalorder %s188, %s189
      %p198 = scmp.eq.s32.totalorder %s31, 0
      %p199 = por %p197, %p198
      %p200 = scmp.ne.s32.totalorder %s188, %s189
      %p201 = scmp.eq.s32.totalorder %s32, 1
      %p202 = por %p200, %p201
      %p204 = scmp.ne.s32.totalorder %s189, %s203
      %p205 = scmp.eq.s32.totalorder %s32, 0
      %p206 = por %p204, %p205
      %s208 = sadd.s32 %s207, 1
      %p211 = scmp.eq.s32.totalorder %s26, 1
      %p212 = scmp.ne.s32.totalorder %s207, %s209
      %p213 = scmp.eq.s32.totalorder %s26, 0
      %p214 = por %p212, %p213
      %p215 = scmp.ne.s32.totalorder %s207, %s209
      %p216 = scmp.eq.s32.totalorder %s31, 1
      %p217 = por %p215, %p216
      %p218 = scmp.ne.s32.totalorder %s209, %s210
      %p219 = scmp.eq.s32.totalorder %s31, 0
      %p220 = por %p218, %p219
      %p221 = scmp.ne.s32.totalorder %s209, %s210
      %p222 = scmp.eq.s32.totalorder %s32, 1
      %p223 = por %p221, %p222
      %p225 = scmp.ne.s32.totalorder %s210, %s224
      %p226 = scmp.eq.s32.totalorder %s32, 0
      %p227 = por %p225, %p226
      %s229 = sadd.s32 %s228, 1
      %p232 = scmp.eq.s32.totalorder %s26, 1
      %p233 = scmp.ne.s32.totalorder %s228, %s230
      %p234 = scmp.eq.s32.totalorder %s26, 0
      %p235 = por %p233, %p234
      %p236 = scmp.ne.s32.totalorder %s228, %s230
      %p237 = scmp.eq.s32.totalorder %s31, 1
      %p238 = por %p236, %p237
      %p239 = scmp.ne.s32.totalorder %s230, %s231
      %p240 = scmp.eq.s32.totalorder %s31, 0
      %p241 = por %p239, %p240
      %p242 = scmp.ne.s32.totalorder %s230, %s231
      %p243 = scmp.eq.s32.totalorder %s32, 1
      %p244 = por %p242, %p243
      %p246 = scmp.ne.s32.totalorder %s231, %s245
      %p247 = scmp.eq.s32.totalorder %s32, 0
      %p248 = por %p246, %p247
      %s250 = sadd.s32 %s249, 1
      %p253 = scmp.eq.s32.totalorder %s26, 1
      %p254 = scmp.ne.s32.totalorder %s249, %s251
      %p255 = scmp.eq.s32.totalorder %s26, 0
      %p256 = por %p254, %p255
      %p257 = scmp.ne.s32.totalorder %s249, %s251
      %p258 = scmp.eq.s32.totalorder %s31, 1
      %p259 = por %p257, %p258
      %p260 = scmp.ne.s32.totalorder %s251, %s252
      %p261 = scmp.eq.s32.totalorder %s31, 0
      %p262 = por %p260, %p261
      %p263 = scmp.ne.s32.totalorder %s251, %s252
      %p264 = scmp.eq.s32.totalorder %s32, 1
      %p265 = por %p263, %p264
      %p267 = scmp.ne.s32.totalorder %s252, %s266
      %p268 = scmp.eq.s32.totalorder %s32, 0
      %p269 = por %p267, %p268
      %s270 = ssub.s32 %s26, %s33
      %p271 = scmp.eq.s32.totalorder %s270, 0
      %s273 = sadd.s32 %s272, 1
      %s274 = scalar_select %p271, %s272, %s273
      %p277 = pneg %p271
      %p278 = scmp.eq.s32.totalorder %s26, 1
      %p279 = por %p277, %p278
      %p280 = scmp.ne.s32.totalorder %s272, %s275
      %p281 = scmp.eq.s32.totalorder %s26, 0
      %p282 = por %p280, %p281
      %p283 = scmp.ne.s32.totalorder %s272, %s275
      %p284 = scmp.eq.s32.totalorder %s31, 1
      %p285 = por %p283, %p284
      %p286 = scmp.ne.s32.totalorder %s275, %s276
      %p287 = scmp.eq.s32.totalorder %s31, 0
      %p288 = por %p286, %p287
      %p289 = scmp.ne.s32.totalorder %s275, %s276
      %p290 = scmp.eq.s32.totalorder %s32, 1
      %p291 = por %p289, %p290
      %p293 = scmp.ne.s32.totalorder %s276, %s292
      %p294 = scmp.eq.s32.totalorder %s32, 0
      %p295 = por %p293, %p294
      %p296 = scmp.le.s32.totalorder 1, %s26
      %p297 = scmp.lt.s32.totalorder %s26, 3
      %p298 = pnand %p296, %p297
      %p299 = pneg %p298
      // Predicated region
      $region9: #{simple_cnn_forward.1} parent=5 // pred_check
        _
      $region10: #{simple_cnn_forward.1} parent=5 // pred_check_branch
        %301 = sbr.rel (%p298) target = $region12
      $region11: #{simple_cnn_forward.1} parent=5 // pred_region
        %s302 = ssub.s32 %s26, 1
        // Predicated region
        $region13: #{simple_cnn_forward.1} parent=11 // pred_check
          %p303 = pneg %p73
        $region14: #{simple_cnn_forward.1} parent=11 // pred_check_branch
          %305 = sbr.rel (%p303) target = $region16
        $region15: #{simple_cnn_forward.1} parent=11 // pred_region
          %s307 = ssub.s32 3072, 3072
          %308 = vsyncadd [#allocation8], %s307
          %s309 = sshll.u32 [#allocation7], 4
          %s310 = int_to_ptr.vmem [resolvable:$true] %s309
          %315 = dma.hbm_to_vmem [thread:$0]  %s1, 3072, %s310, [#allocation8], 256, 256, 16
        $region16: #{simple_cnn_forward.1} parent=11 // pred_fallthru
          _
        // Predicated region
        $region17: #{simple_cnn_forward.1} parent=11 // pred_check
          %p316 = pneg %p94
        $region18: #{simple_cnn_forward.1} parent=11 // pred_check_branch
          %318 = sbr.rel (%p316) target = $region20
        $region19: #{simple_cnn_forward.1} parent=11 // pred_region
          _
        $region20: #{simple_cnn_forward.1} parent=11 // pred_fallthru
          _
        // Predicated region
        $region21: #{simple_cnn_forward.1} parent=11 // pred_check
          %p319 = pneg %p115
        $region22: #{simple_cnn_forward.1} parent=11 // pred_check_branch
          %321 = sbr.rel (%p319) target = $region24
        $region23: #{simple_cnn_forward.1} parent=11 // pred_region
          %s323 = ssub.s32 256, 256
          %324 = vsyncadd [#allocation8], %s323
          %s325 = sshll.u32 [#allocation9], 4
          %s326 = int_to_ptr.vmem [resolvable:$true] %s325
          %331 = dma.hbm_to_vmem [thread:$0]  %s3, 256, %s326, [#allocation8], 64, 64, 4
        $region24: #{simple_cnn_forward.1} parent=11 // pred_fallthru
          _
        // Predicated region
        $region25: #{simple_cnn_forward.1} parent=11 // pred_check
          %p332 = pneg %p136
        $region26: #{simple_cnn_forward.1} parent=11 // pred_check_branch
          %334 = sbr.rel (%p332) target = $region28
        $region27: #{simple_cnn_forward.1} parent=11 // pred_region
          %s336 = ssub.s32 24576, 24576
          %337 = vsyncadd [#allocation11], %s336
          %s338 = sshll.u32 [#allocation10], 4
          %s339 = int_to_ptr.vmem [resolvable:$true] %s338
          %344 = dma.hbm_to_vmem [thread:$0]  %s4, 24576, %s339, [#allocation11], 256, 256, 16
        $region28: #{simple_cnn_forward.1} parent=11 // pred_fallthru
          _
        // Predicated region
        $region29: #{simple_cnn_forward.1} parent=11 // pred_check
          %p345 = pneg %p157
        $region30: #{simple_cnn_forward.1} parent=11 // pred_check_branch
          %347 = sbr.rel (%p345) target = $region32
        $region31: #{simple_cnn_forward.1} parent=11 // pred_region
          _
        $region32: #{simple_cnn_forward.1} parent=11 // pred_fallthru
          _
        // Predicated region
        $region33: #{simple_cnn_forward.1} parent=11 // pred_check
          %p348 = pneg %p178
        $region34: #{simple_cnn_forward.1} parent=11 // pred_check_branch
          %350 = sbr.rel (%p348) target = $region36
        $region35: #{simple_cnn_forward.1} parent=11 // pred_region
          _
        $region36: #{simple_cnn_forward.1} parent=11 // pred_fallthru
          _
        // Predicated region
        $region37: #{simple_cnn_forward.1} parent=11 // pred_check
          %p351 = pneg %p199
        $region38: #{simple_cnn_forward.1} parent=11 // pred_check_branch
          %353 = sbr.rel (%p351) target = $region40
        $region39: #{simple_cnn_forward.1} parent=11 // pred_region
          %s355 = ssub.s32 16384, 16384
          %356 = vsyncadd [#allocation11], %s355
          %s357 = sshll.u32 [#allocation12], 4
          %s358 = int_to_ptr.vmem [resolvable:$true] %s357
          %363 = dma.hbm_to_vmem [thread:$0]  %s7, 16384, %s358, [#allocation11], 64, 64, 4
        $region40: #{simple_cnn_forward.1} parent=11 // pred_fallthru
          _
        // Predicated region
        $region41: #{simple_cnn_forward.1} parent=11 // pred_check
          %p364 = pneg %p220
        $region42: #{simple_cnn_forward.1} parent=11 // pred_check_branch
          %366 = sbr.rel (%p364) target = $region44
        $region43: #{simple_cnn_forward.1} parent=11 // pred_region
          _
        $region44: #{simple_cnn_forward.1} parent=11 // pred_fallthru
          _
        // Predicated region
        $region45: #{simple_cnn_forward.1} parent=11 // pred_check
          %p367 = pneg %p241
        $region46: #{simple_cnn_forward.1} parent=11 // pred_check_branch
          %369 = sbr.rel (%p367) target = $region48
        $region47: #{simple_cnn_forward.1} parent=11 // pred_region
          %s371 = ssub.s32 1024, 1024
          %372 = vsyncadd [#allocation14], %s371
          %s373 = sshll.u32 [#allocation13], 4
          %s374 = int_to_ptr.vmem [resolvable:$true] %s373
          %379 = dma.hbm_to_vmem [thread:$0]  %s9, 1024, %s374, [#allocation14], 64, 64, 4
        $region48: #{simple_cnn_forward.1} parent=11 // pred_fallthru
          _
        // Predicated region
        $region49: #{simple_cnn_forward.1} parent=11 // pred_check
          %p380 = pneg %p262
        $region50: #{simple_cnn_forward.1} parent=11 // pred_check_branch
          %382 = sbr.rel (%p380) target = $region52
        $region51: #{simple_cnn_forward.1} parent=11 // pred_region
          _
        $region52: #{simple_cnn_forward.1} parent=11 // pred_fallthru
          _
      $region12: #{simple_cnn_forward.1} parent=5 // pred_fallthru
        _
      %p383 = scmp.lt.s32.totalorder %s26, 2
      // Predicated region
      $region53: #{simple_cnn_forward.1} parent=5 // pred_check
        %p384 = pneg %p383
      $region54: #{simple_cnn_forward.1} parent=5 // pred_check_branch
        %386 = sbr.rel (%p384) target = $region56
      $region55: #{simple_cnn_forward.1} parent=5 // pred_region
        // Predicated region
        $region57: #{simple_cnn_forward.1} parent=55 // pred_check
          %p387 = pneg %p46
        $region58: #{simple_cnn_forward.1} parent=55 // pred_check_branch
          %389 = sbr.rel (%p387) target = $region60
        $region59: #{simple_cnn_forward.1} parent=55 // pred_region
          %s390 = sand.u32 %s36, 1
          %s391 = scalar_lea.sflag [#allocation5], %s390
          %s392 = sand.u32 %s36, 1
          %s393 = smul.addr %s392, 32
          %s394 = scalar_lea.vmem [#allocation4], %s393
          %s396 = ssub.s32 512, 512
          %397 = vsyncadd %s391, %s396
          %s398 = smul.addr %s26, 4
          %s399 = smul.addr %s398, 128
          %s400 = scalar_lea.hbm %s0, %s399
          %s401 = sshll.u32 %s394, 4
          %s402 = int_to_ptr.vmem [resolvable:$true] %s401
          %407 = dma.hbm_to_vmem [thread:$0]  %s400, 512, %s402, %s391, 128, 128, 8
        $region60: #{simple_cnn_forward.1} parent=55 // pred_fallthru
          _
      $region56: #{simple_cnn_forward.1} parent=5 // pred_fallthru
        _
      %p408 = scmp.le.s32.totalorder 1, %s26
      %p409 = scmp.lt.s32.totalorder %s26, 3
      %p410 = pnand %p408, %p409
      %p411 = pneg %p410
      // Predicated region
      $region61: #{simple_cnn_forward.1} parent=5 // pred_check
        _
      $region62: #{simple_cnn_forward.1} parent=5 // pred_check_branch
        %413 = sbr.rel (%p410) target = $region64
      $region63: #{simple_cnn_forward.1} parent=5 // pred_region
        %s414 = ssub.s32 %s26, 1
        %s415 = sand.u32 %s39, 1
        %s416 = scalar_lea.sflag [#allocation5], %s415
        %s417 = sand.u32 %s39, 1
        %s418 = smul.addr %s417, 32
        %s419 = scalar_lea.vmem [#allocation4], %s418
        // Predicated region
        $region65: #{simple_cnn_forward.1} parent=63 // pred_check
          %p420 = pneg %p52
        $region66: #{simple_cnn_forward.1} parent=63 // pred_check_branch
          %422 = sbr.rel (%p420) target = $region68
        $region67: #{simple_cnn_forward.1} parent=63 // pred_region
          %423 = dma.done %s416, 512
        $region68: #{simple_cnn_forward.1} parent=63 // pred_fallthru
          _
        // Predicated region
        $region69: #{simple_cnn_forward.1} parent=63 // pred_check
          %p424 = pneg %p73
        $region70: #{simple_cnn_forward.1} parent=63 // pred_check_branch
          %426 = sbr.rel (%p424) target = $region72
        $region71: #{simple_cnn_forward.1} parent=63 // pred_region
          %427 = dma.done [#allocation8], 3072
        $region72: #{simple_cnn_forward.1} parent=63 // pred_fallthru
          _
        // Predicated region
        $region73: #{simple_cnn_forward.1} parent=63 // pred_check
          %p428 = pneg %p115
        $region74: #{simple_cnn_forward.1} parent=63 // pred_check_branch
          %430 = sbr.rel (%p428) target = $region76
        $region75: #{simple_cnn_forward.1} parent=63 // pred_region
          %431 = dma.done [#allocation8], 256
        $region76: #{simple_cnn_forward.1} parent=63 // pred_fallthru
          _
        // Predicated region
        $region77: #{simple_cnn_forward.1} parent=63 // pred_check
          %p432 = pneg %p136
        $region78: #{simple_cnn_forward.1} parent=63 // pred_check_branch
          %434 = sbr.rel (%p432) target = $region80
        $region79: #{simple_cnn_forward.1} parent=63 // pred_region
          %435 = dma.done [#allocation11], 24576
        $region80: #{simple_cnn_forward.1} parent=63 // pred_fallthru
          _
        // Predicated region
        $region81: #{simple_cnn_forward.1} parent=63 // pred_check
          %p436 = pneg %p199
        $region82: #{simple_cnn_forward.1} parent=63 // pred_check_branch
          %438 = sbr.rel (%p436) target = $region84
        $region83: #{simple_cnn_forward.1} parent=63 // pred_region
          %439 = dma.done [#allocation11], 16384
        $region84: #{simple_cnn_forward.1} parent=63 // pred_fallthru
          _
        // Predicated region
        $region85: #{simple_cnn_forward.1} parent=63 // pred_check
          %p440 = pneg %p241
        $region86: #{simple_cnn_forward.1} parent=63 // pred_check_branch
          %442 = sbr.rel (%p440) target = $region88
        $region87: #{simple_cnn_forward.1} parent=63 // pred_region
          %443 = dma.done [#allocation14], 1024
        $region88: #{simple_cnn_forward.1} parent=63 // pred_fallthru
          _
        %s444 = sand.u32 %s39, 1
        %s445 = scalar_lea.sflag [#allocation5], %s444
        %s446 = sand.u32 %s39, 1
        %s447 = smul.addr %s446, 32
        %s448 = scalar_lea.vmem [#allocation4], %s447
        %p449 = pneg %p52
        %p450 = pneg %p49
        %p451 = pneg %p73
        %p452 = pneg %p70
        %p453 = pneg %p94
        %p454 = pneg %p91
        %p455 = pneg %p115
        %p456 = pneg %p112
        %p457 = pneg %p136
        %p458 = pneg %p133
        %p459 = pneg %p157
        %p460 = pneg %p154
        %p461 = pneg %p178
        %p462 = pneg %p175
        %p463 = pneg %p199
        %p464 = pneg %p196
        %p465 = pneg %p220
        %p466 = pneg %p217
        %p467 = pneg %p241
        %p468 = pneg %p238
        %p469 = pneg %p262
        %p470 = pneg %p259
        %p471 = pneg %p288
        %p472 = pneg %p285
        %s473 = sand.u32 %s275, 1
        %s474 = scalar_lea.sflag [#allocation6], %s473
        %s475 = sand.u32 %s275, 1
        %s476 = scalar_lea.vmem [#allocation15], %s475
        %vm478 = vcmask 253952
        %479 = vst.msk [vmem:[#allocation2] sm:$0x1] %vm478, 0.0
        %480 = vst.msk [vmem:[#allocation2 + $0x21] sm:$0x1] %vm478, 0.0
        %v481 = vld [vmem:[%s419] sm:$0xff]
        %v482 = vld [vmem:[%s419 + $0x8] sm:$0xff]
        %v483 = vld [vmem:[%s419 + $0x10] sm:$0xff]
        %v484 = vld [vmem:[%s419 + $0x18] sm:$0xff]
        %vm485 = vcmask 261120
        %486 = vst.msk [vmem:[#allocation2 + $0x1] sm:$0xff] %vm485, %v481
        %487 = vst.msk [vmem:[#allocation2 + $0x9] sm:$0xff] %vm485, %v482
        %488 = vst.msk [vmem:[#allocation2 + $0x11] sm:$0xff] %vm485, %v483
        %489 = vst.msk [vmem:[#allocation2 + $0x19] sm:$0xff] %vm485, %v484
        %v490 = vld [vmem:[#allocation2] sm:$0xff]
        %v491 = vld [vmem:[#allocation2 + $0x8] sm:$0xff]
        %v492 = vld [vmem:[#allocation2 + $0x10] sm:$0xff]
        %v493 = vld [vmem:[#allocation2 + $0x18] sm:$0xff]
        %v494 = vpack.c.bf16 %v491, %v490
        %v495 = vpack.c.bf16 %v493, %v492
        %v496 = vld [vmem:[#allocation7] sm:$0xff]
        %v497 = vld [vmem:[#allocation7 + $0x8] sm:$0xff]
        %v498 = vld [vmem:[#allocation7 + $0x10] sm:$0xff]
        %v499 = vld [vmem:[#allocation7 + $0x18] sm:$0xff]
        %v500 = vld [vmem:[#allocation7 + $0x20] sm:$0xff]
        %v501 = vld [vmem:[#allocation7 + $0x28] sm:$0xff]
        %v502 = vld [vmem:[#allocation7 + $0x30] sm:$0xff]
        %v503 = vld [vmem:[#allocation7 + $0x38] sm:$0xff]
        %v504 = vld [vmem:[#allocation2 + $0x1] sm:$0xff]
        %v505 = vld [vmem:[#allocation2 + $0x9] sm:$0xff]
        %v506 = vld [vmem:[#allocation2 + $0x11] sm:$0xff]
        %v507 = vld [vmem:[#allocation2 + $0x19] sm:$0xff]
        %v508 = vpack.c.bf16 %v505, %v504
        %v509 = vpack.c.bf16 %v507, %v506
        %s510 = scalar_lea.vmem [#allocation7], 64
        %v511 = vld [vmem:[%s510] sm:$0xff]
        %v512 = vld [vmem:[%s510 + $0x8] sm:$0xff]
        %v513 = vld [vmem:[%s510 + $0x10] sm:$0xff]
        %v514 = vld [vmem:[%s510 + $0x18] sm:$0xff]
        %v515 = vld [vmem:[%s510 + $0x20] sm:$0xff]
        %v516 = vld [vmem:[%s510 + $0x28] sm:$0xff]
        %v517 = vld [vmem:[%s510 + $0x30] sm:$0xff]
        %v518 = vld [vmem:[%s510 + $0x38] sm:$0xff]
        %v527 = vunpack.c.l.b16 %v511
        %v528 = vunpack.c.h.b16 %v511
        %v529 = vunpack.c.l.b16 %v512
        %v530 = vunpack.c.h.b16 %v512
        %v531 = vunpack.c.l.b16 %v513
        %v532 = vunpack.c.h.b16 %v513
        %v533 = vunpack.c.l.b16 %v514
        %v534 = vunpack.c.h.b16 %v514
        %v535 = vunpack.c.l.b16 %v515
        %v536 = vunpack.c.h.b16 %v515
        %v537 = vunpack.c.l.b16 %v516
        %v538 = vunpack.c.h.b16 %v516
        %v539 = vunpack.c.l.b16 %v517
        %v540 = vunpack.c.h.b16 %v517
        %v541 = vunpack.c.l.b16 %v518
        %v542 = vunpack.c.h.b16 %v518
        %v543 = vpack.c.b16 %v531, %v527
        %v544 = vpack.c.b16 %v532, %v528
        %v545 = vpack.c.b16 %v533, %v529
        %v546 = vpack.c.b16 %v534, %v530
        %v547 = vpack.c.b16 %v539, %v535
        %v548 = vpack.c.b16 %v540, %v536
        %v549 = vpack.c.b16 %v541, %v537
        %v550 = vpack.c.b16 %v542, %v538
        %v560 = vsel %vm485, %v508, 0
        %v563 = vsel %vm485, %v509, 0
        %565 = vmatprep.subr.bf16.mxu0 %v544
        %566 = vmatpush1.bf16.msra.mxu0 %v543
        %567 = vmatprep.subr.bf16.mxu0 %v548
        %568 = vmatpush1.bf16.msra.mxu0 %v547
        %569 = vmatprep.subr.bf16.mxu0 0
        %570 = vmatpush1.bf16.msra.mxu0 0
        %571 = vmatprep.subr.bf16.mxu0 0
        %572 = vmatpush1.bf16.msra.mxu0 0
        %573 = vmatprep.subr.bf16.mxu0 0
        %574 = vmatpush1.bf16.msra.mxu0 0
        %575 = vmatprep.subr.bf16.mxu0 0
        %576 = vmatpush1.bf16.msra.mxu0 0
        %577 = vmatprep.subr.bf16.mxu0 0
        %578 = vmatpush1.bf16.msra.mxu0 0
        %579 = vmatprep.subr.bf16.mxu0 0
        %580 = vmatpush1.bf16.msra.mxu0 0
        %581 = vmatprep.subr.bf16.mxu0 0
        %582 = vmatpush1.bf16.msra.mxu0 0
        %583 = vmatprep.subr.bf16.mxu0 0
        %584 = vmatpush1.bf16.msra.mxu0 0
        %585 = vmatprep.subr.bf16.mxu0 0
        %586 = vmatpush1.bf16.msra.mxu0 0
        %587 = vmatprep.subr.bf16.mxu0 0
        %588 = vmatpush1.bf16.msra.mxu0 0
        %589 = vmatprep.subr.bf16.mxu0 0
        %590 = vmatpush1.bf16.msra.mxu0 0
        %591 = vmatprep.subr.bf16.mxu0 0
        %592 = vmatpush1.bf16.msra.mxu0 0
        %593 = vmatprep.subr.bf16.mxu0 0
        %594 = vmatpush1.bf16.msra.mxu0 0
        %595 = vmatprep.subr.bf16.mxu0 0
        %596 = vmatpush1.bf16.msra.mxu0 0
        %597 = vmatprep.mubr.bf16.mxu0 0
        %598 = vmatmul.mubr.bf16.gmra.mrb[0].mxu0 %v560
        %v599 = vpop.f32.mrb[0].mxu0
        %v600 = vadd.f32 0.0, %v599
        %v601 = vpop.f32.mrb[0].mxu0
        %v602 = vadd.f32 0.0, %v601
        %v603 = vpop.f32.mrb[0].mxu0
        %v604 = vadd.f32 0.0, %v603
        %v605 = vpop.f32.mrb[0].mxu0
        %v606 = vadd.f32 0.0, %v605
        %607 = vmatprep.mubr.bf16.mxu0 0
        %608 = vmatmul.mubr.bf16.gmra.mrb[0].mxu0 %v563
        %v609 = vpop.f32.mrb[0].mxu0
        %v610 = vadd.f32 0.0, %v609
        %v611 = vpop.f32.mrb[0].mxu0
        %v612 = vadd.f32 0.0, %v611
        %v613 = vpop.f32.mrb[0].mxu0
        %v614 = vadd.f32 0.0, %v613
        %v615 = vpop.f32.mrb[0].mxu0
        %v616 = vadd.f32 0.0, %v615
        %617 = vdwg.mxu0
        %618 = vmatprep.subr.bf16.mxu0 %v546
        %619 = vmatpush1.bf16.msra.mxu0 %v545
        %620 = vmatprep.subr.bf16.mxu0 %v550
        %621 = vmatpush1.bf16.msra.mxu0 %v549
        %622 = vmatprep.subr.bf16.mxu0 0
        %623 = vmatpush1.bf16.msra.mxu0 0
        %624 = vmatprep.subr.bf16.mxu0 0
        %625 = vmatpush1.bf16.msra.mxu0 0
        %626 = vmatprep.subr.bf16.mxu0 0
        %627 = vmatpush1.bf16.msra.mxu0 0
        %628 = vmatprep.subr.bf16.mxu0 0
        %629 = vmatpush1.bf16.msra.mxu0 0
        %630 = vmatprep.subr.bf16.mxu0 0
        %631 = vmatpush1.bf16.msra.mxu0 0
        %632 = vmatprep.subr.bf16.mxu0 0
        %633 = vmatpush1.bf16.msra.mxu0 0
        %634 = vmatprep.subr.bf16.mxu0 0
        %635 = vmatpush1.bf16.msra.mxu0 0
        %636 = vmatprep.subr.bf16.mxu0 0
        %637 = vmatpush1.bf16.msra.mxu0 0
        %638 = vmatprep.subr.bf16.mxu0 0
        %639 = vmatpush1.bf16.msra.mxu0 0
        %640 = vmatprep.subr.bf16.mxu0 0
        %641 = vmatpush1.bf16.msra.mxu0 0
        %642 = vmatprep.subr.bf16.mxu0 0
        %643 = vmatpush1.bf16.msra.mxu0 0
        %644 = vmatprep.subr.bf16.mxu0 0
        %645 = vmatpush1.bf16.msra.mxu0 0
        %646 = vmatprep.subr.bf16.mxu0 0
        %647 = vmatpush1.bf16.msra.mxu0 0
        %648 = vmatprep.subr.bf16.mxu0 0
        %649 = vmatpush1.bf16.msra.mxu0 0
        %650 = vmatprep.mubr.bf16.mxu0 0
        %651 = vmatmul.mubr.bf16.gmra.mrb[0].mxu0 %v560
        %v652 = vpop.f32.mrb[0].mxu0
        %v653 = vadd.f32 0.0, %v652
        %v654 = vpop.f32.mrb[0].mxu0
        %v655 = vadd.f32 0.0, %v654
        %v656 = vpop.f32.mrb[0].mxu0
        %v657 = vadd.f32 0.0, %v656
        %v658 = vpop.f32.mrb[0].mxu0
        %v659 = vadd.f32 0.0, %v658
        %660 = vmatprep.mubr.bf16.mxu0 0
        %661 = vmatmul.mubr.bf16.gmra.mrb[0].mxu0 %v563
        %v662 = vpop.f32.mrb[0].mxu0
        %v663 = vadd.f32 0.0, %v662
        %v664 = vpop.f32.mrb[0].mxu0
        %v665 = vadd.f32 0.0, %v664
        %v666 = vpop.f32.mrb[0].mxu0
        %v667 = vadd.f32 0.0, %v666
        %v668 = vpop.f32.mrb[0].mxu0
        %v669 = vadd.f32 0.0, %v668
        %670 = vdwg.mxu0
        %v679 = vunpack.c.l.b16 %v496
        %v680 = vunpack.c.h.b16 %v496
        %v681 = vunpack.c.l.b16 %v497
        %v682 = vunpack.c.h.b16 %v497
        %v683 = vunpack.c.l.b16 %v498
        %v684 = vunpack.c.h.b16 %v498
        %v685 = vunpack.c.l.b16 %v499
        %v686 = vunpack.c.h.b16 %v499
        %v687 = vunpack.c.l.b16 %v500
        %v688 = vunpack.c.h.b16 %v500
        %v689 = vunpack.c.l.b16 %v501
        %v690 = vunpack.c.h.b16 %v501
        %v691 = vunpack.c.l.b16 %v502
        %v692 = vunpack.c.h.b16 %v502
        %v693 = vunpack.c.l.b16 %v503
        %v694 = vunpack.c.h.b16 %v503
        %v695 = vpack.c.b16 %v683, %v679
        %v696 = vpack.c.b16 %v684, %v680
        %v697 = vpack.c.b16 %v685, %v681
        %v698 = vpack.c.b16 %v686, %v682
        %v699 = vpack.c.b16 %v691, %v687
        %v700 = vpack.c.b16 %v692, %v688
        %v701 = vpack.c.b16 %v693, %v689
        %v702 = vpack.c.b16 %v694, %v690
        %v712 = vsel %vm485, %v494, 0
        %v715 = vsel %vm485, %v495, 0
        %717 = vmatprep.subr.bf16.mxu0 %v696
        %718 = vmatpush1.bf16.msra.mxu0 %v695
        %719 = vmatprep.subr.bf16.mxu0 %v700
        %720 = vmatpush1.bf16.msra.mxu0 %v699
        %721 = vmatprep.subr.bf16.mxu0 0
        %722 = vmatpush1.bf16.msra.mxu0 0
        %723 = vmatprep.subr.bf16.mxu0 0
        %724 = vmatpush1.bf16.msra.mxu0 0
        %725 = vmatprep.subr.bf16.mxu0 0
        %726 = vmatpush1.bf16.msra.mxu0 0
        %727 = vmatprep.subr.bf16.mxu0 0
        %728 = vmatpush1.bf16.msra.mxu0 0
        %729 = vmatprep.subr.bf16.mxu0 0
        %730 = vmatpush1.bf16.msra.mxu0 0
        %731 = vmatprep.subr.bf16.mxu0 0
        %732 = vmatpush1.bf16.msra.mxu0 0
        %733 = vmatprep.subr.bf16.mxu0 0
        %734 = vmatpush1.bf16.msra.mxu0 0
        %735 = vmatprep.subr.bf16.mxu0 0
        %736 = vmatpush1.bf16.msra.mxu0 0
        %737 = vmatprep.subr.bf16.mxu0 0
        %738 = vmatpush1.bf16.msra.mxu0 0
        %739 = vmatprep.subr.bf16.mxu0 0
        %740 = vmatpush1.bf16.msra.mxu0 0
        %741 = vmatprep.subr.bf16.mxu0 0
        %742 = vmatpush1.bf16.msra.mxu0 0
        %743 = vmatprep.subr.bf16.mxu0 0
        %744 = vmatpush1.bf16.msra.mxu0 0
        %745 = vmatprep.subr.bf16.mxu0 0
        %746 = vmatpush1.bf16.msra.mxu0 0
        %747 = vmatprep.subr.bf16.mxu0 0
        %748 = vmatpush1.bf16.msra.mxu0 0
        %749 = vmatprep.mubr.bf16.mxu0 0
        %750 = vmatmul.mubr.bf16.gmra.mrb[0].mxu0 %v712
        %v751 = vpop.f32.mrb[0].mxu0
        %v752 = vadd.f32 %v600, %v751
        %v753 = vpop.f32.mrb[0].mxu0
        %v754 = vadd.f32 %v602, %v753
        %v755 = vpop.f32.mrb[0].mxu0
        %v756 = vadd.f32 %v604, %v755
        %v757 = vpop.f32.mrb[0].mxu0
        %v758 = vadd.f32 %v606, %v757
        %759 = vmatprep.mubr.bf16.mxu0 0
        %760 = vmatmul.mubr.bf16.gmra.mrb[0].mxu0 %v715
        %v761 = vpop.f32.mrb[0].mxu0
        %v762 = vadd.f32 %v610, %v761
        %v763 = vpop.f32.mrb[0].mxu0
        %v764 = vadd.f32 %v612, %v763
        %v765 = vpop.f32.mrb[0].mxu0
        %v766 = vadd.f32 %v614, %v765
        %v767 = vpop.f32.mrb[0].mxu0
        %v768 = vadd.f32 %v616, %v767
        %769 = vdwg.mxu0
        %770 = vmatprep.subr.bf16.mxu0 %v698
        %771 = vmatpush1.bf16.msra.mxu0 %v697
        %772 = vmatprep.subr.bf16.mxu0 %v702
        %773 = vmatpush1.bf16.msra.mxu0 %v701
        %774 = vmatprep.subr.bf16.mxu0 0
        %775 = vmatpush1.bf16.msra.mxu0 0
        %776 = vmatprep.subr.bf16.mxu0 0
        %777 = vmatpush1.bf16.msra.mxu0 0
        %778 = vmatprep.subr.bf16.mxu0 0
        %779 = vmatpush1.bf16.msra.mxu0 0
        %780 = vmatprep.subr.bf16.mxu0 0
        %781 = vmatpush1.bf16.msra.mxu0 0
        %782 = vmatprep.subr.bf16.mxu0 0
        %783 = vmatpush1.bf16.msra.mxu0 0
        %784 = vmatprep.subr.bf16.mxu0 0
        %785 = vmatpush1.bf16.msra.mxu0 0
        %786 = vmatprep.subr.bf16.mxu0 0
        %787 = vmatpush1.bf16.msra.mxu0 0
        %788 = vmatprep.subr.bf16.mxu0 0
        %789 = vmatpush1.bf16.msra.mxu0 0
        %790 = vmatprep.subr.bf16.mxu0 0
        %791 = vmatpush1.bf16.msra.mxu0 0
        %792 = vmatprep.subr.bf16.mxu0 0
        %793 = vmatpush1.bf16.msra.mxu0 0
        %794 = vmatprep.subr.bf16.mxu0 0
        %795 = vmatpush1.bf16.msra.mxu0 0
        %796 = vmatprep.subr.bf16.mxu0 0
        %797 = vmatpush1.bf16.msra.mxu0 0
        %798 = vmatprep.subr.bf16.mxu0 0
        %799 = vmatpush1.bf16.msra.mxu0 0
        %800 = vmatprep.subr.bf16.mxu0 0
        %801 = vmatpush1.bf16.msra.mxu0 0
        %802 = vmatprep.mubr.bf16.mxu0 0
        %803 = vmatmul.mubr.bf16.gmra.mrb[0].mxu0 %v712
        %v804 = vpop.f32.mrb[0].mxu0
        %v805 = vadd.f32 %v653, %v804
        %v806 = vpop.f32.mrb[0].mxu0
        %v807 = vadd.f32 %v655, %v806
        %v808 = vpop.f32.mrb[0].mxu0
        %v809 = vadd.f32 %v657, %v808
        %v810 = vpop.f32.mrb[0].mxu0
        %v811 = vadd.f32 %v659, %v810
        %812 = vmatprep.mubr.bf16.mxu0 0
        %813 = vmatmul.mubr.bf16.gmra.mrb[0].mxu0 %v715
        %v814 = vpop.f32.mrb[0].mxu0
        %v815 = vadd.f32 %v663, %v814
        %v816 = vpop.f32.mrb[0].mxu0
        %v817 = vadd.f32 %v665, %v816
        %v818 = vpop.f32.mrb[0].mxu0
        %v819 = vadd.f32 %v667, %v818
        %v820 = vpop.f32.mrb[0].mxu0
        %v821 = vadd.f32 %v669, %v820
        %822 = vdwg.mxu0
        %v823 = vld [vmem:[#allocation2 + $0x2] sm:$0xff]
        %v824 = vld [vmem:[#allocation2 + $0xa] sm:$0xff]
        %v825 = vld [vmem:[#allocation2 + $0x12] sm:$0xff]
        %v826 = vld [vmem:[#allocation2 + $0x1a] sm:$0xff]
        %v827 = vpack.c.bf16 %v824, %v823
        %v828 = vpack.c.bf16 %v826, %v825
        %s829 = scalar_lea.vmem [#allocation7], 128
        %v830 = vld [vmem:[%s829] sm:$0xff]
        %v831 = vld [vmem:[%s829 + $0x8] sm:$0xff]
        %v832 = vld [vmem:[%s829 + $0x10] sm:$0xff]
        %v833 = vld [vmem:[%s829 + $0x18] sm:$0xff]
        %v834 = vld [vmem:[%s829 + $0x20] sm:$0xff]
        %v835 = vld [vmem:[%s829 + $0x28] sm:$0xff]
        %v836 = vld [vmem:[%s829 + $0x30] sm:$0xff]
        %v837 = vld [vmem:[%s829 + $0x38] sm:$0xff]
        %v846 = vunpack.c.l.b16 %v830
        %v847 = vunpack.c.h.b16 %v830
        %v848 = vunpack.c.l.b16 %v831
        %v849 = vunpack.c.h.b16 %v831
        %v850 = vunpack.c.l.b16 %v832
        %v851 = vunpack.c.h.b16 %v832
        %v852 = vunpack.c.l.b16 %v833
        %v853 = vunpack.c.h.b16 %v833
        %v854 = vunpack.c.l.b16 %v834
        %v855 = vunpack.c.h.b16 %v834
        %v856 = vunpack.c.l.b16 %v835
        %v857 = vunpack.c.h.b16 %v835
        %v858 = vunpack.c.l.b16 %v836
        %v859 = vunpack.c.h.b16 %v836
        %v860 = vunpack.c.l.b16 %v837
        %v861 = vunpack.c.h.b16 %v837
        %v862 = vpack.c.b16 %v850, %v846
        %v863 = vpack.c.b16 %v851, %v847
        %v864 = vpack.c.b16 %v852, %v848
        %v865 = vpack.c.b16 %v853, %v849
        %v866 = vpack.c.b16 %v858, %v854
        %v867 = vpack.c.b16 %v859, %v855
        %v868 = vpack.c.b16 %v860, %v856
        %v869 = vpack.c.b16 %v861, %v857
        %v879 = vsel %vm485, %v827, 0
        %v882 = vsel %vm485, %v828, 0
        %884 = vmatprep.subr.bf16.mxu0 %v863
        %885 = vmatpush1.bf16.msra.mxu0 %v862
        %886 = vmatprep.subr.bf16.mxu0 %v867
        %887 = vmatpush1.bf16.msra.mxu0 %v866
        %888 = vmatprep.subr.bf16.mxu0 0
        %889 = vmatpush1.bf16.msra.mxu0 0
        %890 = vmatprep.subr.bf16.mxu0 0
        %891 = vmatpush1.bf16.msra.mxu0 0
        %892 = vmatprep.subr.bf16.mxu0 0
        %893 = vmatpush1.bf16.msra.mxu0 0
        %894 = vmatprep.subr.bf16.mxu0 0
        %895 = vmatpush1.bf16.msra.mxu0 0
        %896 = vmatprep.subr.bf16.mxu0 0
        %897 = vmatpush1.bf16.msra.mxu0 0
        %898 = vmatprep.subr.bf16.mxu0 0
        %899 = vmatpush1.bf16.msra.mxu0 0
        %900 = vmatprep.subr.bf16.mxu0 0
        %901 = vmatpush1.bf16.msra.mxu0 0
        %902 = vmatprep.subr.bf16.mxu0 0
        %903 = vmatpush1.bf16.msra.mxu0 0
        %904 = vmatprep.subr.bf16.mxu0 0
        %905 = vmatpush1.bf16.msra.mxu0 0
        %906 = vmatprep.subr.bf16.mxu0 0
        %907 = vmatpush1.bf16.msra.mxu0 0
        %908 = vmatprep.subr.bf16.mxu0 0
        %909 = vmatpush1.bf16.msra.mxu0 0
        %910 = vmatprep.subr.bf16.mxu0 0
        %911 = vmatpush1.bf16.msra.mxu0 0
        %912 = vmatprep.subr.bf16.mxu0 0
        %913 = vmatpush1.bf16.msra.mxu0 0
        %914 = vmatprep.subr.bf16.mxu0 0
        %915 = vmatpush1.bf16.msra.mxu0 0
        %916 = vmatprep.mubr.bf16.mxu0 0
        %917 = vmatmul.mubr.bf16.gmra.mrb[0].mxu0 %v879
        %v918 = vpop.f32.mrb[0].mxu0
        %v919 = vadd.f32 0.0, %v918
        %v920 = vpop.f32.mrb[0].mxu0
        %v921 = vadd.f32 0.0, %v920
        %v922 = vpop.f32.mrb[0].mxu0
        %v923 = vadd.f32 0.0, %v922
        %v924 = vpop.f32.mrb[0].mxu0
        %v925 = vadd.f32 0.0, %v924
        %926 = vmatprep.mubr.bf16.mxu0 0
        %927 = vmatmul.mubr.bf16.gmra.mrb[0].mxu0 %v882
        %v928 = vpop.f32.mrb[0].mxu0
        %v929 = vadd.f32 0.0, %v928
        %v930 = vpop.f32.mrb[0].mxu0
        %v931 = vadd.f32 0.0, %v930
        %v932 = vpop.f32.mrb[0].mxu0
        %v933 = vadd.f32 0.0, %v932
        %v934 = vpop.f32.mrb[0].mxu0
        %v935 = vadd.f32 0.0, %v934
        %936 = vdwg.mxu0
        %937 = vmatprep.subr.bf16.mxu0 %v865
        %938 = vmatpush1.bf16.msra.mxu0 %v864
        %939 = vmatprep.subr.bf16.mxu0 %v869
        %940 = vmatpush1.bf16.msra.mxu0 %v868
        %941 = vmatprep.subr.bf16.mxu0 0
        %942 = vmatpush1.bf16.msra.mxu0 0
        %943 = vmatprep.subr.bf16.mxu0 0
        %944 = vmatpush1.bf16.msra.mxu0 0
        %945 = vmatprep.subr.bf16.mxu0 0
        %946 = vmatpush1.bf16.msra.mxu0 0
        %947 = vmatprep.subr.bf16.mxu0 0
        %948 = vmatpush1.bf16.msra.mxu0 0
        %949 = vmatprep.subr.bf16.mxu0 0
        %950 = vmatpush1.bf16.msra.mxu0 0
        %951 = vmatprep.subr.bf16.mxu0 0
        %952 = vmatpush1.bf16.msra.mxu0 0
        %953 = vmatprep.subr.bf16.mxu0 0
        %954 = vmatpush1.bf16.msra.mxu0 0
        %955 = vmatprep.subr.bf16.mxu0 0
        %956 = vmatpush1.bf16.msra.mxu0 0
        %957 = vmatprep.subr.bf16.mxu0 0
        %958 = vmatpush1.bf16.msra.mxu0 0
        %959 = vmatprep.subr.bf16.mxu0 0
        %960 = vmatpush1.bf16.msra.mxu0 0
        %961 = vmatprep.subr.bf16.mxu0 0
        %962 = vmatpush1.bf16.msra.mxu0 0
        %963 = vmatprep.subr.bf16.mxu0 0
        %964 = vmatpush1.bf16.msra.mxu0 0
        %965 = vmatprep.subr.bf16.mxu0 0
        %966 = vmatpush1.bf16.msra.mxu0 0
        %967 = vmatprep.subr.bf16.mxu0 0
        %968 = vmatpush1.bf16.msra.mxu0 0
        %969 = vmatprep.mubr.bf16.mxu0 0
        %970 = vmatmul.mubr.bf16.gmra.mrb[0].mxu0 %v879
        %v971 = vpop.f32.mrb[0].mxu0
        %v972 = vadd.f32 0.0, %v971
        %v973 = vpop.f32.mrb[0].mxu0
        %v974 = vadd.f32 0.0, %v973
        %v975 = vpop.f32.mrb[0].mxu0
        %v976 = vadd.f32 0.0, %v975
        %v977 = vpop.f32.mrb[0].mxu0
        %v978 = vadd.f32 0.0, %v977
        %979 = vmatprep.mubr.bf16.mxu0 0
        %980 = vmatmul.mubr.bf16.gmra.mrb[0].mxu0 %v882
        %v981 = vpop.f32.mrb[0].mxu0
        %v982 = vadd.f32 0.0, %v981
        %v983 = vpop.f32.mrb[0].mxu0
        %v984 = vadd.f32 0.0, %v983
        %v985 = vpop.f32.mrb[0].mxu0
        %v986 = vadd.f32 0.0, %v985
        %v987 = vpop.f32.mrb[0].mxu0
        %v988 = vadd.f32 0.0, %v987
        %989 = vdwg.mxu0
        %v990 = vadd.f32 %v752, %v919
        %v991 = vadd.f32 %v754, %v921
        %v992 = vadd.f32 %v805, %v972
        %v993 = vadd.f32 %v807, %v974
        %v994 = vadd.f32 %v756, %v923
        %v995 = vadd.f32 %v758, %v925
        %v996 = vadd.f32 %v809, %v976
        %v997 = vadd.f32 %v811, %v978
        %v998 = vadd.f32 %v762, %v929
        %v999 = vadd.f32 %v764, %v931
        %v1000 = vadd.f32 %v815, %v982
        %v1001 = vadd.f32 %v817, %v984
        %v1002 = vadd.f32 %v766, %v933
        %v1003 = vadd.f32 %v768, %v935
        %v1004 = vadd.f32 %v819, %v986
        %v1005 = vadd.f32 %v821, %v988
        %v1006 = vld [vmem:[%s2] sm:$0xf]
        %v1008 = vlaneseq
        %v1009 = vshrl.u32 %v1008, 7
        %v1010 = vsub.s32 0, %v1009
        %v1011 = vrot.slane %v1006, %v1010
        %v1012 = vlaneseq
        %v1013 = vshrl.u32 %v1012, 7
        %v1014 = vsub.s32 1, %v1013
        %v1015 = vrot.slane %v1006, %v1014
        %v1016 = vlaneseq
        %v1017 = vshrl.u32 %v1016, 7
        %v1018 = vsub.s32 2, %v1017
        %v1019 = vrot.slane %v1006, %v1018
        %v1020 = vlaneseq
        %v1021 = vshrl.u32 %v1020, 7
        %v1022 = vsub.s32 3, %v1021
        %v1023 = vrot.slane %v1006, %v1022
        %v1028 = vadd.f32 %v990, %v1011
        %v1029 = vadd.f32 %v991, %v1015
        %v1030 = vadd.f32 %v992, %v1019
        %v1031 = vadd.f32 %v993, %v1023
        %v1032 = vadd.f32 %v994, %v1011
        %v1033 = vadd.f32 %v995, %v1015
        %v1034 = vadd.f32 %v996, %v1019
        %v1035 = vadd.f32 %v997, %v1023
        %v1036 = vadd.f32 %v998, %v1011
        %v1037 = vadd.f32 %v999, %v1015
        %v1038 = vadd.f32 %v1000, %v1019
        %v1039 = vadd.f32 %v1001, %v1023
        %v1040 = vadd.f32 %v1002, %v1011
        %v1041 = vadd.f32 %v1003, %v1015
        %v1042 = vadd.f32 %v1004, %v1019
        %v1043 = vadd.f32 %v1005, %v1023
        %v1044 = vmax.f32 %v1028, 0.0
        %v1045 = vmax.f32 %v1029, 0.0
        %v1046 = vmax.f32 %v1030, 0.0
        %v1047 = vmax.f32 %v1031, 0.0
        %v1048 = vmax.f32 %v1032, 0.0
        %v1049 = vmax.f32 %v1033, 0.0
        %v1050 = vmax.f32 %v1034, 0.0
        %v1051 = vmax.f32 %v1035, 0.0
        %v1052 = vmax.f32 %v1036, 0.0
        %v1053 = vmax.f32 %v1037, 0.0
        %v1054 = vmax.f32 %v1038, 0.0
        %v1055 = vmax.f32 %v1039, 0.0
        %v1056 = vmax.f32 %v1040, 0.0
        %v1057 = vmax.f32 %v1041, 0.0
        %v1058 = vmax.f32 %v1042, 0.0
        %v1059 = vmax.f32 %v1043, 0.0
        %v1060 = vmax.f32 %v1044, %v1046
        %v1061 = vmax.f32 %v1045, %v1047
        %v1062 = vmax.f32 %v1048, %v1050
        %v1063 = vmax.f32 %v1049, %v1051
        %v1064 = vmax.f32 %v1052, %v1054
        %v1065 = vmax.f32 %v1053, %v1055
        %v1066 = vmax.f32 %v1056, %v1058
        %v1067 = vmax.f32 %v1057, %v1059
        %v1068 = vld [vmem:[#allocation9] sm:$0xf]
        %v1069 = vld [vmem:[#allocation9 + $0x4] sm:$0xf]
        %v1070 = vld [vmem:[#allocation9 + $0x8] sm:$0xf]
        %v1071 = vld [vmem:[#allocation9 + $0xc] sm:$0xf]
        %v1072 = vpack.c.bf16 %v1062, %v1060
        %v1073 = vpack.c.bf16 %v1063, %v1061
        %v1074 = vpack.c.bf16 %v1066, %v1064
        %v1075 = vpack.c.bf16 %v1067, %v1065
        %v1080 = vunpack.c.l.b16 %v1068
        %v1081 = vunpack.c.l.b16 %v1069
        %v1082 = vunpack.c.l.b16 %v1070
        %v1083 = vunpack.c.l.b16 %v1071
        %v1084 = vpack.c.b16 %v1081, %v1080
        %v1085 = vpack.c.b16 %v1083, %v1082
        %v1087 = vsel %vm485, %v1084, 0
        %v1090 = vsel %vm485, %v1085, 0
        %1092 = vmatprep.subr.bf16.mxu0 %v1073
        %1093 = vmatpush1.bf16.msra.mxu0 %v1072
        %1094 = vmatprep.subr.bf16.mxu0 %v1075
        %1095 = vmatpush1.bf16.msra.mxu0 %v1074
        %1096 = vmatprep.subr.bf16.mxu0 0
        %1097 = vmatpush1.bf16.msra.mxu0 0
        %1098 = vmatprep.subr.bf16.mxu0 0
        %1099 = vmatpush1.bf16.msra.mxu0 0
        %1100 = vmatprep.subr.bf16.mxu0 0
        %1101 = vmatpush1.bf16.msra.mxu0 0
        %1102 = vmatprep.subr.bf16.mxu0 0
        %1103 = vmatpush1.bf16.msra.mxu0 0
        %1104 = vmatprep.subr.bf16.mxu0 0
        %1105 = vmatpush1.bf16.msra.mxu0 0
        %1106 = vmatprep.subr.bf16.mxu0 0
        %1107 = vmatpush1.bf16.msra.mxu0 0
        %1108 = vmatprep.subr.bf16.mxu0 0
        %1109 = vmatpush1.bf16.msra.mxu0 0
        %1110 = vmatprep.subr.bf16.mxu0 0
        %1111 = vmatpush1.bf16.msra.mxu0 0
        %1112 = vmatprep.subr.bf16.mxu0 0
        %1113 = vmatpush1.bf16.msra.mxu0 0
        %1114 = vmatprep.subr.bf16.mxu0 0
        %1115 = vmatpush1.bf16.msra.mxu0 0
        %1116 = vmatprep.subr.bf16.mxu0 0
        %1117 = vmatpush1.bf16.msra.mxu0 0
        %1118 = vmatprep.subr.bf16.mxu0 0
        %1119 = vmatpush1.bf16.msra.mxu0 0
        %1120 = vmatprep.subr.bf16.mxu0 0
        %1121 = vmatpush1.bf16.msra.mxu0 0
        %1122 = vmatprep.subr.bf16.mxu0 0
        %1123 = vmatpush1.bf16.msra.mxu0 0
        %1124 = vmatprep.mubr.bf16.mxu0 0
        %1125 = vmatmul.mubr.bf16.gmra.mrb[0].mxu0 %v1087
        %v1126 = vpop.f32.mrb[0].mxu0
        %v1127 = vadd.f32 0.0, %v1126
        %v1128 = vpop.f32.mrb[0].mxu0
        %v1129 = vadd.f32 0.0, %v1128
        %v1130 = vpop.f32.mrb[0].mxu0
        %v1131 = vadd.f32 0.0, %v1130
        %v1132 = vpop.f32.mrb[0].mxu0
        %v1133 = vadd.f32 0.0, %v1132
        %1134 = vmatprep.mubr.bf16.mxu0 0
        %1135 = vmatmul.mubr.bf16.gmra.mrb[0].mxu0 %v1090
        %v1136 = vpop.f32.mrb[0].mxu0
        %v1137 = vadd.f32 0.0, %v1136
        %v1138 = vpop.f32.mrb[0].mxu0
        %v1139 = vadd.f32 0.0, %v1138
        %v1140 = vpop.f32.mrb[0].mxu0
        %v1141 = vadd.f32 0.0, %v1140
        %v1142 = vpop.f32.mrb[0].mxu0
        %v1143 = vadd.f32 0.0, %v1142
        %1144 = vdwg.mxu0
        %v1145 = vmax.f32 %v1127, %v1137
        %v1146 = vmax.f32 %v1129, %v1139
        %v1147 = vmax.f32 %v1131, %v1141
        %v1148 = vmax.f32 %v1133, %v1143
        %v1149 = vlaneseq
        %vm1150 = vcmp.ge.s32.totalorder %v1149, 0
        %vm1151 = vcmp.lt.s32.totalorder %v1149, 256
        %vm1152 = vmand %vm1150, %vm1151
        %1153 = vst.msk [vmem:[#allocation3] ss:$8 sm:$0x3] %vm1152, 0.0
        %1154 = vst.msk [vmem:[#allocation3] ss:$8 sm:$0x0] %vm1152, 0.0
        %s1155 = scalar_lea.vmem [#allocation3], 33
        %1156 = vst.msk [vmem:[%s1155] ss:$8 sm:$0x3] %vm1152, 0.0
        %1157 = vst.msk [vmem:[%s1155] ss:$8 sm:$0x0] %vm1152, 0.0
        %vm1162 = vcmask 1040384
        %v1163 = vrot.slane %v1145, 7
        %v1164 = vrot.slane %v1146, 7
        %v1165 = vrot.slane %v1147, 7
        %v1166 = vsel %vm1162, %v1163, %v1165
        %v1167 = vrot.slane %v1148, 7
        %v1168 = vsel %vm1162, %v1164, %v1167
        %1175 = vst [vmem:[#allocation3] sm:$0xfe] %v1163
        %1176 = vst [vmem:[#allocation3 + $0x8] sm:$0xfe] %v1164
        %1177 = vst [vmem:[#allocation3 + $0x10] sm:$0xff] %v1166
        %1178 = vst [vmem:[#allocation3 + $0x18] sm:$0xff] %v1168
        %1179 = vst [vmem:[#allocation3 + $0x20] sm:$0x1] %v1165
        %1180 = vst [vmem:[#allocation3 + $0x28] sm:$0x1] %v1167
        %v1181 = vld [vmem:[#allocation3] sm:$0xff]
        %v1182 = vld [vmem:[#allocation3 + $0x8] sm:$0xff]
        %v1183 = vld [vmem:[#allocation3 + $0x10] sm:$0xff]
        %v1184 = vld [vmem:[#allocation3 + $0x18] sm:$0xff]
        %v1185 = vld [vmem:[#allocation3] sm:$0xfe]
        %v1186 = vld [vmem:[#allocation3 + $0x8] sm:$0xfe]
        %v1187 = vld [vmem:[#allocation3 + $0x20] sm:$0x1]
        %v1188 = vld [vmem:[#allocation3 + $0x28] sm:$0x1]
        %v1189 = vld [vmem:[#allocation3] sm:$0xfc]
        %v1190 = vld [vmem:[#allocation3 + $0x8] sm:$0xfc]
        %v1191 = vld [vmem:[#allocation3 + $0x20] sm:$0x3]
        %v1192 = vld [vmem:[#allocation3 + $0x28] sm:$0x3]
        %vm1199 = vcmask 1046528
        %v1200 = vrot.slane %v1185, 1
        %v1201 = vrot.slane %v1183, 1
        %v1202 = vsel %vm1199, %v1200, %v1201
        %v1203 = vrot.slane %v1186, 1
        %v1204 = vrot.slane %v1184, 1
        %v1205 = vsel %vm1199, %v1203, %v1204
        %v1206 = vrot.slane %v1187, 1
        %v1207 = vsel %vm1199, %v1201, %v1206
        %v1208 = vrot.slane %v1188, 1
        %v1209 = vsel %vm1199, %v1204, %v1208
        %vm1218 = vcmask 1045504
        %v1219 = vrot.slane %v1189, 2
        %v1220 = vrot.slane %v1183, 2
        %v1221 = vsel %vm1218, %v1219, %v1220
        %v1222 = vrot.slane %v1190, 2
        %v1223 = vrot.slane %v1184, 2
        %v1224 = vsel %vm1218, %v1222, %v1223
        %v1225 = vrot.slane %v1191, 2
        %v1226 = vsel %vm1218, %v1220, %v1225
        %v1227 = vrot.slane %v1192, 2
        %v1228 = vsel %vm1218, %v1223, %v1227
        %v1233 = vpack.c.bf16 %v1183, %v1181
        %v1234 = vpack.c.bf16 %v1184, %v1182
        %v1235 = vpack.c.bf16 %v1207, %v1202
        %v1236 = vpack.c.bf16 %v1209, %v1205
        %v1237 = vpack.c.bf16 %v1226, %v1221
        %v1238 = vpack.c.bf16 %v1228, %v1224
        %v1239 = vld [vmem:[#allocation10] sm:$0xff]
        %v1240 = vld [vmem:[#allocation10 + $0x8] sm:$0xff]
        %v1241 = vld [vmem:[#allocation10 + $0x10] sm:$0xff]
        %v1242 = vld [vmem:[#allocation10 + $0x18] sm:$0xff]
        %v1243 = vld [vmem:[#allocation10 + $0x20] sm:$0xff]
        %v1244 = vld [vmem:[#allocation10 + $0x28] sm:$0xff]
        %v1245 = vld [vmem:[#allocation10 + $0x30] sm:$0xff]
        %v1246 = vld [vmem:[#allocation10 + $0x38] sm:$0xff]
        %v1247 = vld [vmem:[#allocation10 + $0x40] sm:$0xff]
        %v1248 = vld [vmem:[#allocation10 + $0x48] sm:$0xff]
        %v1249 = vld [vmem:[#allocation10 + $0x50] sm:$0xff]
        %v1250 = vld [vmem:[#allocation10 + $0x58] sm:$0xff]
        %v1251 = vld [vmem:[#allocation10 + $0x60] sm:$0xff]
        %v1252 = vld [vmem:[#allocation10 + $0x68] sm:$0xff]
        %v1253 = vld [vmem:[#allocation10 + $0x70] sm:$0xff]
        %v1254 = vld [vmem:[#allocation10 + $0x78] sm:$0xff]
        %v1255 = vld [vmem:[#allocation10 + $0x80] sm:$0xff]
        %v1256 = vld [vmem:[#allocation10 + $0x88] sm:$0xff]
        %v1257 = vld [vmem:[#allocation10 + $0x90] sm:$0xff]
        %v1258 = vld [vmem:[#allocation10 + $0x98] sm:$0xff]
        %v1259 = vld [vmem:[#allocation10 + $0xa0] sm:$0xff]
        %v1260 = vld [vmem:[#allocation10 + $0xa8] sm:$0xff]
        %v1261 = vld [vmem:[#allocation10 + $0xb0] sm:$0xff]
        %v1262 = vld [vmem:[#allocation10 + $0xb8] sm:$0xff]
        %v1263 = vld [vmem:[#allocation10 + $0xc0] sm:$0xff]
        %v1264 = vld [vmem:[#allocation10 + $0xc8] sm:$0xff]
        %v1265 = vld [vmem:[#allocation10 + $0xd0] sm:$0xff]
        %v1266 = vld [vmem:[#allocation10 + $0xd8] sm:$0xff]
        %v1267 = vld [vmem:[#allocation10 + $0xe0] sm:$0xff]
        %v1268 = vld [vmem:[#allocation10 + $0xe8] sm:$0xff]
        %v1269 = vld [vmem:[#allocation10 + $0xf0] sm:$0xff]
        %v1270 = vld [vmem:[#allocation10 + $0xf8] sm:$0xff]
        %v1271 = vld [vmem:[#allocation10 + $0x100] sm:$0xff]
        %v1272 = vld [vmem:[#allocation10 + $0x108] sm:$0xff]
        %v1273 = vld [vmem:[#allocation10 + $0x110] sm:$0xff]
        %v1274 = vld [vmem:[#allocation10 + $0x118] sm:$0xff]
        %v1275 = vld [vmem:[#allocation10 + $0x120] sm:$0xff]
        %v1276 = vld [vmem:[#allocation10 + $0x128] sm:$0xff]
        %v1277 = vld [vmem:[#allocation10 + $0x130] sm:$0xff]
        %v1278 = vld [vmem:[#allocation10 + $0x138] sm:$0xff]
        %v1279 = vld [vmem:[#allocation10 + $0x140] sm:$0xff]
        %v1280 = vld [vmem:[#allocation10 + $0x148] sm:$0xff]
        %v1281 = vld [vmem:[#allocation10 + $0x150] sm:$0xff]
        %v1282 = vld [vmem:[#allocation10 + $0x158] sm:$0xff]
        %v1283 = vld [vmem:[#allocation10 + $0x160] sm:$0xff]
        %v1284 = vld [vmem:[#allocation10 + $0x168] sm:$0xff]
        %v1285 = vld [vmem:[#allocation10 + $0x170] sm:$0xff]
        %v1286 = vld [vmem:[#allocation10 + $0x178] sm:$0xff]
        %v1287 = vld [vmem:[#allocation10 + $0x180] sm:$0xff]
        %v1288 = vld [vmem:[#allocation10 + $0x188] sm:$0xff]
        %v1289 = vld [vmem:[#allocation10 + $0x190] sm:$0xff]
        %v1290 = vld [vmem:[#allocation10 + $0x198] sm:$0xff]
        %v1291 = vld [vmem:[#allocation10 + $0x1a0] sm:$0xff]
        %v1292 = vld [vmem:[#allocation10 + $0x1a8] sm:$0xff]
        %v1293 = vld [vmem:[#allocation10 + $0x1b0] sm:$0xff]
        %v1294 = vld [vmem:[#allocation10 + $0x1b8] sm:$0xff]
        %v1295 = vld [vmem:[#allocation10 + $0x1c0] sm:$0xff]
        %v1296 = vld [vmem:[#allocation10 + $0x1c8] sm:$0xff]
        %v1297 = vld [vmem:[#allocation10 + $0x1d0] sm:$0xff]
        %v1298 = vld [vmem:[#allocation10 + $0x1d8] sm:$0xff]
        %v1299 = vld [vmem:[#allocation10 + $0x1e0] sm:$0xff]
        %v1300 = vld [vmem:[#allocation10 + $0x1e8] sm:$0xff]
        %v1301 = vld [vmem:[#allocation10 + $0x1f0] sm:$0xff]
        %v1302 = vld [vmem:[#allocation10 + $0x1f8] sm:$0xff]
        %v1303 = vld [vmem:[#allocation10 + $0x200] sm:$0xff]
        %v1304 = vld [vmem:[#allocation10 + $0x208] sm:$0xff]
        %v1305 = vld [vmem:[#allocation10 + $0x210] sm:$0xff]
        %v1306 = vld [vmem:[#allocation10 + $0x218] sm:$0xff]
        %v1307 = vld [vmem:[#allocation10 + $0x220] sm:$0xff]
        %v1308 = vld [vmem:[#allocation10 + $0x228] sm:$0xff]
        %v1309 = vld [vmem:[#allocation10 + $0x230] sm:$0xff]
        %v1310 = vld [vmem:[#allocation10 + $0x238] sm:$0xff]
        %v1311 = vld [vmem:[#allocation10 + $0x240] sm:$0xff]
        %v1312 = vld [vmem:[#allocation10 + $0x248] sm:$0xff]
        %v1313 = vld [vmem:[#allocation10 + $0x250] sm:$0xff]
        %v1314 = vld [vmem:[#allocation10 + $0x258] sm:$0xff]
        %v1315 = vld [vmem:[#allocation10 + $0x260] sm:$0xff]
        %v1316 = vld [vmem:[#allocation10 + $0x268] sm:$0xff]
        %v1317 = vld [vmem:[#allocation10 + $0x270] sm:$0xff]
        %v1318 = vld [vmem:[#allocation10 + $0x278] sm:$0xff]
        %v1319 = vld [vmem:[#allocation10 + $0x280] sm:$0xff]
        %v1320 = vld [vmem:[#allocation10 + $0x288] sm:$0xff]
        %v1321 = vld [vmem:[#allocation10 + $0x290] sm:$0xff]
        %v1322 = vld [vmem:[#allocation10 + $0x298] sm:$0xff]
        %v1323 = vld [vmem:[#allocation10 + $0x2a0] sm:$0xff]
        %v1324 = vld [vmem:[#allocation10 + $0x2a8] sm:$0xff]
        %v1325 = vld [vmem:[#allocation10 + $0x2b0] sm:$0xff]
        %v1326 = vld [vmem:[#allocation10 + $0x2b8] sm:$0xff]
        %v1327 = vld [vmem:[#allocation10 + $0x2c0] sm:$0xff]
        %v1328 = vld [vmem:[#allocation10 + $0x2c8] sm:$0xff]
        %v1329 = vld [vmem:[#allocation10 + $0x2d0] sm:$0xff]
        %v1330 = vld [vmem:[#allocation10 + $0x2d8] sm:$0xff]
        %v1331 = vld [vmem:[#allocation10 + $0x2e0] sm:$0xff]
        %v1332 = vld [vmem:[#allocation10 + $0x2e8] sm:$0xff]
        %v1333 = vld [vmem:[#allocation10 + $0x2f0] sm:$0xff]
        %v1334 = vld [vmem:[#allocation10 + $0x2f8] sm:$0xff]
        %v1335 = vld [vmem:[#allocation10 + $0x300] sm:$0xff]
        %v1336 = vld [vmem:[#allocation10 + $0x308] sm:$0xff]
        %v1337 = vld [vmem:[#allocation10 + $0x310] sm:$0xff]
        %v1338 = vld [vmem:[#allocation10 + $0x318] sm:$0xff]
        %v1339 = vld [vmem:[#allocation10 + $0x320] sm:$0xff]
        %v1340 = vld [vmem:[#allocation10 + $0x328] sm:$0xff]
        %v1341 = vld [vmem:[#allocation10 + $0x330] sm:$0xff]
        %v1342 = vld [vmem:[#allocation10 + $0x338] sm:$0xff]
        %v1343 = vld [vmem:[#allocation10 + $0x340] sm:$0xff]
        %v1344 = vld [vmem:[#allocation10 + $0x348] sm:$0xff]
        %v1345 = vld [vmem:[#allocation10 + $0x350] sm:$0xff]
        %v1346 = vld [vmem:[#allocation10 + $0x358] sm:$0xff]
        %v1347 = vld [vmem:[#allocation10 + $0x360] sm:$0xff]
        %v1348 = vld [vmem:[#allocation10 + $0x368] sm:$0xff]
        %v1349 = vld [vmem:[#allocation10 + $0x370] sm:$0xff]
        %v1350 = vld [vmem:[#allocation10 + $0x378] sm:$0xff]
        %v1351 = vld [vmem:[#allocation10 + $0x380] sm:$0xff]
        %v1352 = vld [vmem:[#allocation10 + $0x388] sm:$0xff]
        %v1353 = vld [vmem:[#allocation10 + $0x390] sm:$0xff]
        %v1354 = vld [vmem:[#allocation10 + $0x398] sm:$0xff]
        %v1355 = vld [vmem:[#allocation10 + $0x3a0] sm:$0xff]
        %v1356 = vld [vmem:[#allocation10 + $0x3a8] sm:$0xff]
        %v1357 = vld [vmem:[#allocation10 + $0x3b0] sm:$0xff]
        %v1358 = vld [vmem:[#allocation10 + $0x3b8] sm:$0xff]
        %v1359 = vld [vmem:[#allocation10 + $0x3c0] sm:$0xff]
        %v1360 = vld [vmem:[#allocation10 + $0x3c8] sm:$0xff]
        %v1361 = vld [vmem:[#allocation10 + $0x3d0] sm:$0xff]
        %v1362 = vld [vmem:[#allocation10 + $0x3d8] sm:$0xff]
        %v1363 = vld [vmem:[#allocation10 + $0x3e0] sm:$0xff]
        %v1364 = vld [vmem:[#allocation10 + $0x3e8] sm:$0xff]
        %v1365 = vld [vmem:[#allocation10 + $0x3f0] sm:$0xff]
        %v1366 = vld [vmem:[#allocation10 + $0x3f8] sm:$0xff]
        %v1367 = vld [vmem:[#allocation10 + $0x400] sm:$0xff]
        %v1368 = vld [vmem:[#allocation10 + $0x408] sm:$0xff]
        %v1369 = vld [vmem:[#allocation10 + $0x410] sm:$0xff]
        %v1370 = vld [vmem:[#allocation10 + $0x418] sm:$0xff]
        %v1371 = vld [vmem:[#allocation10 + $0x420] sm:$0xff]
        %v1372 = vld [vmem:[#allocation10 + $0x428] sm:$0xff]
        %v1373 = vld [vmem:[#allocation10 + $0x430] sm:$0xff]
        %v1374 = vld [vmem:[#allocation10 + $0x438] sm:$0xff]
        %v1375 = vld [vmem:[#allocation10 + $0x440] sm:$0xff]
        %v1376 = vld [vmem:[#allocation10 + $0x448] sm:$0xff]
        %v1377 = vld [vmem:[#allocation10 + $0x450] sm:$0xff]
        %v1378 = vld [vmem:[#allocation10 + $0x458] sm:$0xff]
        %v1379 = vld [vmem:[#allocation10 + $0x460] sm:$0xff]
        %v1380 = vld [vmem:[#allocation10 + $0x468] sm:$0xff]
        %v1381 = vld [vmem:[#allocation10 + $0x470] sm:$0xff]
        %v1382 = vld [vmem:[#allocation10 + $0x478] sm:$0xff]
        %v1383 = vld [vmem:[#allocation10 + $0x480] sm:$0xff]
        %v1384 = vld [vmem:[#allocation10 + $0x488] sm:$0xff]
        %v1385 = vld [vmem:[#allocation10 + $0x490] sm:$0xff]
        %v1386 = vld [vmem:[#allocation10 + $0x498] sm:$0xff]
        %v1387 = vld [vmem:[#allocation10 + $0x4a0] sm:$0xff]
        %v1388 = vld [vmem:[#allocation10 + $0x4a8] sm:$0xff]
        %v1389 = vld [vmem:[#allocation10 + $0x4b0] sm:$0xff]
        %v1390 = vld [vmem:[#allocation10 + $0x4b8] sm:$0xff]
        %v1391 = vld [vmem:[#allocation10 + $0x4c0] sm:$0xff]
        %v1392 = vld [vmem:[#allocation10 + $0x4c8] sm:$0xff]
        %v1393 = vld [vmem:[#allocation10 + $0x4d0] sm:$0xff]
        %v1394 = vld [vmem:[#allocation10 + $0x4d8] sm:$0xff]
        %v1395 = vld [vmem:[#allocation10 + $0x4e0] sm:$0xff]
        %v1396 = vld [vmem:[#allocation10 + $0x4e8] sm:$0xff]
        %v1397 = vld [vmem:[#allocation10 + $0x4f0] sm:$0xff]
        %v1398 = vld [vmem:[#allocation10 + $0x4f8] sm:$0xff]
        %v1399 = vld [vmem:[#allocation10 + $0x500] sm:$0xff]
        %v1400 = vld [vmem:[#allocation10 + $0x508] sm:$0xff]
        %v1401 = vld [vmem:[#allocation10 + $0x510] sm:$0xff]
        %v1402 = vld [vmem:[#allocation10 + $0x518] sm:$0xff]
        %v1403 = vld [vmem:[#allocation10 + $0x520] sm:$0xff]
        %v1404 = vld [vmem:[#allocation10 + $0x528] sm:$0xff]
        %v1405 = vld [vmem:[#allocation10 + $0x530] sm:$0xff]
        %v1406 = vld [vmem:[#allocation10 + $0x538] sm:$0xff]
        %v1407 = vld [vmem:[#allocation10 + $0x540] sm:$0xff]
        %v1408 = vld [vmem:[#allocation10 + $0x548] sm:$0xff]
        %v1409 = vld [vmem:[#allocation10 + $0x550] sm:$0xff]
        %v1410 = vld [vmem:[#allocation10 + $0x558] sm:$0xff]
        %v1411 = vld [vmem:[#allocation10 + $0x560] sm:$0xff]
        %v1412 = vld [vmem:[#allocation10 + $0x568] sm:$0xff]
        %v1413 = vld [vmem:[#allocation10 + $0x570] sm:$0xff]
        %v1414 = vld [vmem:[#allocation10 + $0x578] sm:$0xff]
        %v1415 = vld [vmem:[#allocation10 + $0x580] sm:$0xff]
        %v1416 = vld [vmem:[#allocation10 + $0x588] sm:$0xff]
        %v1417 = vld [vmem:[#allocation10 + $0x590] sm:$0xff]
        %v1418 = vld [vmem:[#allocation10 + $0x598] sm:$0xff]
        %v1419 = vld [vmem:[#allocation10 + $0x5a0] sm:$0xff]
        %v1420 = vld [vmem:[#allocation10 + $0x5a8] sm:$0xff]
        %v1421 = vld [vmem:[#allocation10 + $0x5b0] sm:$0xff]
        %v1422 = vld [vmem:[#allocation10 + $0x5b8] sm:$0xff]
        %v1423 = vld [vmem:[#allocation10 + $0x5c0] sm:$0xff]
        %v1424 = vld [vmem:[#allocation10 + $0x5c8] sm:$0xff]
        %v1425 = vld [vmem:[#allocation10 + $0x5d0] sm:$0xff]
        %v1426 = vld [vmem:[#allocation10 + $0x5d8] sm:$0xff]
        %v1427 = vld [vmem:[#allocation10 + $0x5e0] sm:$0xff]
        %v1428 = vld [vmem:[#allocation10 + $0x5e8] sm:$0xff]
        %v1429 = vld [vmem:[#allocation10 + $0x5f0] sm:$0xff]
        %v1430 = vld [vmem:[#allocation10 + $0x5f8] sm:$0xff]
        %v1431 = vld [vmem:[%s5] sm:$0xf]
        %v1433 = vlaneseq
        %v1434 = vshrl.u32 %v1433, 7
        %v1435 = vsub.s32 0, %v1434
        %v1436 = vrot.slane %v1431, %v1435
        %v1437 = vlaneseq
        %v1438 = vshrl.u32 %v1437, 7
        %v1439 = vsub.s32 1, %v1438
        %v1440 = vrot.slane %v1431, %v1439
        %v1441 = vlaneseq
        %v1442 = vshrl.u32 %v1441, 7
        %v1443 = vsub.s32 2, %v1442
        %v1444 = vrot.slane %v1431, %v1443
        %v1445 = vlaneseq
        %v1446 = vshrl.u32 %v1445, 7
        %v1447 = vsub.s32 3, %v1446
        %v1448 = vrot.slane %v1431, %v1447
        %v1645 = vunpack.c.l.b16 %v1239
        %v1646 = vunpack.c.h.b16 %v1239
        %v1647 = vunpack.c.l.b16 %v1240
        %v1648 = vunpack.c.h.b16 %v1240
        %v1649 = vunpack.c.l.b16 %v1241
        %v1650 = vunpack.c.h.b16 %v1241
        %v1651 = vunpack.c.l.b16 %v1242
        %v1652 = vunpack.c.h.b16 %v1242
        %v1653 = vunpack.c.l.b16 %v1243
        %v1654 = vunpack.c.h.b16 %v1243
        %v1655 = vunpack.c.l.b16 %v1244
        %v1656 = vunpack.c.h.b16 %v1244
        %v1657 = vunpack.c.l.b16 %v1245
        %v1658 = vunpack.c.h.b16 %v1245
        %v1659 = vunpack.c.l.b16 %v1246
        %v1660 = vunpack.c.h.b16 %v1246
        %v1661 = vunpack.c.l.b16 %v1247
        %v1662 = vunpack.c.h.b16 %v1247
        %v1663 = vunpack.c.l.b16 %v1248
        %v1664 = vunpack.c.h.b16 %v1248
        %v1665 = vunpack.c.l.b16 %v1249
        %v1666 = vunpack.c.h.b16 %v1249
        %v1667 = vunpack.c.l.b16 %v1250
        %v1668 = vunpack.c.h.b16 %v1250
        %v1669 = vunpack.c.l.b16 %v1251
        %v1670 = vunpack.c.h.b16 %v1251
        %v1671 = vunpack.c.l.b16 %v1252
        %v1672 = vunpack.c.h.b16 %v1252
        %v1673 = vunpack.c.l.b16 %v1253
        %v1674 = vunpack.c.h.b16 %v1253
        %v1675 = vunpack.c.l.b16 %v1254
        %v1676 = vunpack.c.h.b16 %v1254
        %v1677 = vunpack.c.l.b16 %v1255
        %v1678 = vunpack.c.h.b16 %v1255
        %v1679 = vunpack.c.l.b16 %v1256
        %v1680 = vunpack.c.h.b16 %v1256
        %v1681 = vunpack.c.l.b16 %v1257
        %v1682 = vunpack.c.h.b16 %v1257
        %v1683 = vunpack.c.l.b16 %v1258
        %v1684 = vunpack.c.h.b16 %v1258
        %v1685 = vunpack.c.l.b16 %v1259
        %v1686 = vunpack.c.h.b16 %v1259
        %v1687 = vunpack.c.l.b16 %v1260
        %v1688 = vunpack.c.h.b16 %v1260
        %v1689 = vunpack.c.l.b16 %v1261
        %v1690 = vunpack.c.h.b16 %v1261
        %v1691 = vunpack.c.l.b16 %v1262
        %v1692 = vunpack.c.h.b16 %v1262
        %v1693 = vunpack.c.l.b16 %v1263
        %v1694 = vunpack.c.h.b16 %v1263
        %v1695 = vunpack.c.l.b16 %v1264
        %v1696 = vunpack.c.h.b16 %v1264
        %v1697 = vunpack.c.l.b16 %v1265
        %v1698 = vunpack.c.h.b16 %v1265
        %v1699 = vunpack.c.l.b16 %v1266
        %v1700 = vunpack.c.h.b16 %v1266
        %v1701 = vunpack.c.l.b16 %v1267
        %v1702 = vunpack.c.h.b16 %v1267
        %v1703 = vunpack.c.l.b16 %v1268
        %v1704 = vunpack.c.h.b16 %v1268
        %v1705 = vunpack.c.l.b16 %v1269
        %v1706 = vunpack.c.h.b16 %v1269
        %v1707 = vunpack.c.l.b16 %v1270
        %v1708 = vunpack.c.h.b16 %v1270
        %v1709 = vunpack.c.l.b16 %v1271
        %v1710 = vunpack.c.h.b16 %v1271
        %v1711 = vunpack.c.l.b16 %v1272
        %v1712 = vunpack.c.h.b16 %v1272
        %v1713 = vunpack.c.l.b16 %v1273
        %v1714 = vunpack.c.h.b16 %v1273
        %v1715 = vunpack.c.l.b16 %v1274
        %v1716 = vunpack.c.h.b16 %v1274
        %v1717 = vunpack.c.l.b16 %v1275
        %v1718 = vunpack.c.h.b16 %v1275
        %v1719 = vunpack.c.l.b16 %v1276
        %v1720 = vunpack.c.h.b16 %v1276
        %v1721 = vunpack.c.l.b16 %v1277
        %v1722 = vunpack.c.h.b16 %v1277
        %v1723 = vunpack.c.l.b16 %v1278
        %v1724 = vunpack.c.h.b16 %v1278
        %v1725 = vunpack.c.l.b16 %v1279
        %v1726 = vunpack.c.h.b16 %v1279
        %v1727 = vunpack.c.l.b16 %v1280
        %v1728 = vunpack.c.h.b16 %v1280
        %v1729 = vunpack.c.l.b16 %v1281
        %v1730 = vunpack.c.h.b16 %v1281
        %v1731 = vunpack.c.l.b16 %v1282
        %v1732 = vunpack.c.h.b16 %v1282
        %v1733 = vunpack.c.l.b16 %v1283
        %v1734 = vunpack.c.h.b16 %v1283
        %v1735 = vunpack.c.l.b16 %v1284
        %v1736 = vunpack.c.h.b16 %v1284
        %v1737 = vunpack.c.l.b16 %v1285
        %v1738 = vunpack.c.h.b16 %v1285
        %v1739 = vunpack.c.l.b16 %v1286
        %v1740 = vunpack.c.h.b16 %v1286
        %v1741 = vunpack.c.l.b16 %v1287
        %v1742 = vunpack.c.h.b16 %v1287
        %v1743 = vunpack.c.l.b16 %v1288
        %v1744 = vunpack.c.h.b16 %v1288
        %v1745 = vunpack.c.l.b16 %v1289
        %v1746 = vunpack.c.h.b16 %v1289
        %v1747 = vunpack.c.l.b16 %v1290
        %v1748 = vunpack.c.h.b16 %v1290
        %v1749 = vunpack.c.l.b16 %v1291
        %v1750 = vunpack.c.h.b16 %v1291
        %v1751 = vunpack.c.l.b16 %v1292
        %v1752 = vunpack.c.h.b16 %v1292
        %v1753 = vunpack.c.l.b16 %v1293
        %v1754 = vunpack.c.h.b16 %v1293
        %v1755 = vunpack.c.l.b16 %v1294
        %v1756 = vunpack.c.h.b16 %v1294
        %v1757 = vunpack.c.l.b16 %v1295
        %v1758 = vunpack.c.h.b16 %v1295
        %v1759 = vunpack.c.l.b16 %v1296
        %v1760 = vunpack.c.h.b16 %v1296
        %v1761 = vunpack.c.l.b16 %v1297
        %v1762 = vunpack.c.h.b16 %v1297
        %v1763 = vunpack.c.l.b16 %v1298
        %v1764 = vunpack.c.h.b16 %v1298
        %v1765 = vunpack.c.l.b16 %v1299
        %v1766 = vunpack.c.h.b16 %v1299
        %v1767 = vunpack.c.l.b16 %v1300
        %v1768 = vunpack.c.h.b16 %v1300
        %v1769 = vunpack.c.l.b16 %v1301
        %v1770 = vunpack.c.h.b16 %v1301
        %v1771 = vunpack.c.l.b16 %v1302
        %v1772 = vunpack.c.h.b16 %v1302
        %v1773 = vunpack.c.l.b16 %v1303
        %v1774 = vunpack.c.h.b16 %v1303
        %v1775 = vunpack.c.l.b16 %v1304
        %v1776 = vunpack.c.h.b16 %v1304
        %v1777 = vunpack.c.l.b16 %v1305
        %v1778 = vunpack.c.h.b16 %v1305
        %v1779 = vunpack.c.l.b16 %v1306
        %v1780 = vunpack.c.h.b16 %v1306
        %v1781 = vunpack.c.l.b16 %v1307
        %v1782 = vunpack.c.h.b16 %v1307
        %v1783 = vunpack.c.l.b16 %v1308
        %v1784 = vunpack.c.h.b16 %v1308
        %v1785 = vunpack.c.l.b16 %v1309
        %v1786 = vunpack.c.h.b16 %v1309
        %v1787 = vunpack.c.l.b16 %v1310
        %v1788 = vunpack.c.h.b16 %v1310
        %v1789 = vunpack.c.l.b16 %v1311
        %v1790 = vunpack.c.h.b16 %v1311
        %v1791 = vunpack.c.l.b16 %v1312
        %v1792 = vunpack.c.h.b16 %v1312
        %v1793 = vunpack.c.l.b16 %v1313
        %v1794 = vunpack.c.h.b16 %v1313
        %v1795 = vunpack.c.l.b16 %v1314
        %v1796 = vunpack.c.h.b16 %v1314
        %v1797 = vunpack.c.l.b16 %v1315
        %v1798 = vunpack.c.h.b16 %v1315
        %v1799 = vunpack.c.l.b16 %v1316
        %v1800 = vunpack.c.h.b16 %v1316
        %v1801 = vunpack.c.l.b16 %v1317
        %v1802 = vunpack.c.h.b16 %v1317
        %v1803 = vunpack.c.l.b16 %v1318
        %v1804 = vunpack.c.h.b16 %v1318
        %v1805 = vunpack.c.l.b16 %v1319
        %v1806 = vunpack.c.h.b16 %v1319
        %v1807 = vunpack.c.l.b16 %v1320
        %v1808 = vunpack.c.h.b16 %v1320
        %v1809 = vunpack.c.l.b16 %v1321
        %v1810 = vunpack.c.h.b16 %v1321
        %v1811 = vunpack.c.l.b16 %v1322
        %v1812 = vunpack.c.h.b16 %v1322
        %v1813 = vunpack.c.l.b16 %v1323
        %v1814 = vunpack.c.h.b16 %v1323
        %v1815 = vunpack.c.l.b16 %v1324
        %v1816 = vunpack.c.h.b16 %v1324
        %v1817 = vunpack.c.l.b16 %v1325
        %v1818 = vunpack.c.h.b16 %v1325
        %v1819 = vunpack.c.l.b16 %v1326
        %v1820 = vunpack.c.h.b16 %v1326
        %v1821 = vunpack.c.l.b16 %v1327
        %v1822 = vunpack.c.h.b16 %v1327
        %v1823 = vunpack.c.l.b16 %v1328
        %v1824 = vunpack.c.h.b16 %v1328
        %v1825 = vunpack.c.l.b16 %v1329
        %v1826 = vunpack.c.h.b16 %v1329
        %v1827 = vunpack.c.l.b16 %v1330
        %v1828 = vunpack.c.h.b16 %v1330
        %v1829 = vunpack.c.l.b16 %v1331
        %v1830 = vunpack.c.h.b16 %v1331
        %v1831 = vunpack.c.l.b16 %v1332
        %v1832 = vunpack.c.h.b16 %v1332
        %v1833 = vunpack.c.l.b16 %v1333
        %v1834 = vunpack.c.h.b16 %v1333
        %v1835 = vunpack.c.l.b16 %v1334
        %v1836 = vunpack.c.h.b16 %v1334
        %v1837 = vunpack.c.l.b16 %v1335
        %v1838 = vunpack.c.h.b16 %v1335
        %v1839 = vunpack.c.l.b16 %v1336
        %v1840 = vunpack.c.h.b16 %v1336
        %v1841 = vunpack.c.l.b16 %v1337
        %v1842 = vunpack.c.h.b16 %v1337
        %v1843 = vunpack.c.l.b16 %v1338
        %v1844 = vunpack.c.h.b16 %v1338
        %v1845 = vunpack.c.l.b16 %v1339
        %v1846 = vunpack.c.h.b16 %v1339
        %v1847 = vunpack.c.l.b16 %v1340
        %v1848 = vunpack.c.h.b16 %v1340
        %v1849 = vunpack.c.l.b16 %v1341
        %v1850 = vunpack.c.h.b16 %v1341
        %v1851 = vunpack.c.l.b16 %v1342
        %v1852 = vunpack.c.h.b16 %v1342
        %v1853 = vunpack.c.l.b16 %v1343
        %v1854 = vunpack.c.h.b16 %v1343
        %v1855 = vunpack.c.l.b16 %v1344
        %v1856 = vunpack.c.h.b16 %v1344
        %v1857 = vunpack.c.l.b16 %v1345
        %v1858 = vunpack.c.h.b16 %v1345
        %v1859 = vunpack.c.l.b16 %v1346
        %v1860 = vunpack.c.h.b16 %v1346
        %v1861 = vunpack.c.l.b16 %v1347
        %v1862 = vunpack.c.h.b16 %v1347
        %v1863 = vunpack.c.l.b16 %v1348
        %v1864 = vunpack.c.h.b16 %v1348
        %v1865 = vunpack.c.l.b16 %v1349
        %v1866 = vunpack.c.h.b16 %v1349
        %v1867 = vunpack.c.l.b16 %v1350
        %v1868 = vunpack.c.h.b16 %v1350
        %v1869 = vunpack.c.l.b16 %v1351
        %v1870 = vunpack.c.h.b16 %v1351
        %v1871 = vunpack.c.l.b16 %v1352
        %v1872 = vunpack.c.h.b16 %v1352
        %v1873 = vunpack.c.l.b16 %v1353
        %v1874 = vunpack.c.h.b16 %v1353
        %v1875 = vunpack.c.l.b16 %v1354
        %v1876 = vunpack.c.h.b16 %v1354
        %v1877 = vunpack.c.l.b16 %v1355
        %v1878 = vunpack.c.h.b16 %v1355
        %v1879 = vunpack.c.l.b16 %v1356
        %v1880 = vunpack.c.h.b16 %v1356
        %v1881 = vunpack.c.l.b16 %v1357
        %v1882 = vunpack.c.h.b16 %v1357
        %v1883 = vunpack.c.l.b16 %v1358
        %v1884 = vunpack.c.h.b16 %v1358
        %v1885 = vunpack.c.l.b16 %v1359
        %v1886 = vunpack.c.h.b16 %v1359
        %v1887 = vunpack.c.l.b16 %v1360
        %v1888 = vunpack.c.h.b16 %v1360
        %v1889 = vunpack.c.l.b16 %v1361
        %v1890 = vunpack.c.h.b16 %v1361
        %v1891 = vunpack.c.l.b16 %v1362
        %v1892 = vunpack.c.h.b16 %v1362
        %v1893 = vunpack.c.l.b16 %v1363
        %v1894 = vunpack.c.h.b16 %v1363
        %v1895 = vunpack.c.l.b16 %v1364
        %v1896 = vunpack.c.h.b16 %v1364
        %v1897 = vunpack.c.l.b16 %v1365
        %v1898 = vunpack.c.h.b16 %v1365
        %v1899 = vunpack.c.l.b16 %v1366
        %v1900 = vunpack.c.h.b16 %v1366
        %v1901 = vunpack.c.l.b16 %v1367
        %v1902 = vunpack.c.h.b16 %v1367
        %v1903 = vunpack.c.l.b16 %v1368
        %v1904 = vunpack.c.h.b16 %v1368
        %v1905 = vunpack.c.l.b16 %v1369
        %v1906 = vunpack.c.h.b16 %v1369
        %v1907 = vunpack.c.l.b16 %v1370
        %v1908 = vunpack.c.h.b16 %v1370
        %v1909 = vunpack.c.l.b16 %v1371
        %v1910 = vunpack.c.h.b16 %v1371
        %v1911 = vunpack.c.l.b16 %v1372
        %v1912 = vunpack.c.h.b16 %v1372
        %v1913 = vunpack.c.l.b16 %v1373
        %v1914 = vunpack.c.h.b16 %v1373
        %v1915 = vunpack.c.l.b16 %v1374
        %v1916 = vunpack.c.h.b16 %v1374
        %v1917 = vunpack.c.l.b16 %v1375
        %v1918 = vunpack.c.h.b16 %v1375
        %v1919 = vunpack.c.l.b16 %v1376
        %v1920 = vunpack.c.h.b16 %v1376
        %v1921 = vunpack.c.l.b16 %v1377
        %v1922 = vunpack.c.h.b16 %v1377
        %v1923 = vunpack.c.l.b16 %v1378
        %v1924 = vunpack.c.h.b16 %v1378
        %v1925 = vunpack.c.l.b16 %v1379
        %v1926 = vunpack.c.h.b16 %v1379
        %v1927 = vunpack.c.l.b16 %v1380
        %v1928 = vunpack.c.h.b16 %v1380
        %v1929 = vunpack.c.l.b16 %v1381
        %v1930 = vunpack.c.h.b16 %v1381
        %v1931 = vunpack.c.l.b16 %v1382
        %v1932 = vunpack.c.h.b16 %v1382
        %v1933 = vunpack.c.l.b16 %v1383
        %v1934 = vunpack.c.h.b16 %v1383
        %v1935 = vunpack.c.l.b16 %v1384
        %v1936 = vunpack.c.h.b16 %v1384
        %v1937 = vunpack.c.l.b16 %v1385
        %v1938 = vunpack.c.h.b16 %v1385
        %v1939 = vunpack.c.l.b16 %v1386
        %v1940 = vunpack.c.h.b16 %v1386
        %v1941 = vunpack.c.l.b16 %v1387
        %v1942 = vunpack.c.h.b16 %v1387
        %v1943 = vunpack.c.l.b16 %v1388
        %v1944 = vunpack.c.h.b16 %v1388
        %v1945 = vunpack.c.l.b16 %v1389
        %v1946 = vunpack.c.h.b16 %v1389
        %v1947 = vunpack.c.l.b16 %v1390
        %v1948 = vunpack.c.h.b16 %v1390
        %v1949 = vunpack.c.l.b16 %v1391
        %v1950 = vunpack.c.h.b16 %v1391
        %v1951 = vunpack.c.l.b16 %v1392
        %v1952 = vunpack.c.h.b16 %v1392
        %v1953 = vunpack.c.l.b16 %v1393
        %v1954 = vunpack.c.h.b16 %v1393
        %v1955 = vunpack.c.l.b16 %v1394
        %v1956 = vunpack.c.h.b16 %v1394
        %v1957 = vunpack.c.l.b16 %v1395
        %v1958 = vunpack.c.h.b16 %v1395
        %v1959 = vunpack.c.l.b16 %v1396
        %v1960 = vunpack.c.h.b16 %v1396
        %v1961 = vunpack.c.l.b16 %v1397
        %v1962 = vunpack.c.h.b16 %v1397
        %v1963 = vunpack.c.l.b16 %v1398
        %v1964 = vunpack.c.h.b16 %v1398
        %v1965 = vunpack.c.l.b16 %v1399
        %v1966 = vunpack.c.h.b16 %v1399
        %v1967 = vunpack.c.l.b16 %v1400
        %v1968 = vunpack.c.h.b16 %v1400
        %v1969 = vunpack.c.l.b16 %v1401
        %v1970 = vunpack.c.h.b16 %v1401
        %v1971 = vunpack.c.l.b16 %v1402
        %v1972 = vunpack.c.h.b16 %v1402
        %v1973 = vunpack.c.l.b16 %v1403
        %v1974 = vunpack.c.h.b16 %v1403
        %v1975 = vunpack.c.l.b16 %v1404
        %v1976 = vunpack.c.h.b16 %v1404
        %v1977 = vunpack.c.l.b16 %v1405
        %v1978 = vunpack.c.h.b16 %v1405
        %v1979 = vunpack.c.l.b16 %v1406
        %v1980 = vunpack.c.h.b16 %v1406
        %v1981 = vunpack.c.l.b16 %v1407
        %v1982 = vunpack.c.h.b16 %v1407
        %v1983 = vunpack.c.l.b16 %v1408
        %v1984 = vunpack.c.h.b16 %v1408
        %v1985 = vunpack.c.l.b16 %v1409
        %v1986 = vunpack.c.h.b16 %v1409
        %v1987 = vunpack.c.l.b16 %v1410
        %v1988 = vunpack.c.h.b16 %v1410
        %v1989 = vunpack.c.l.b16 %v1411
        %v1990 = vunpack.c.h.b16 %v1411
        %v1991 = vunpack.c.l.b16 %v1412
        %v1992 = vunpack.c.h.b16 %v1412
        %v1993 = vunpack.c.l.b16 %v1413
        %v1994 = vunpack.c.h.b16 %v1413
        %v1995 = vunpack.c.l.b16 %v1414
        %v1996 = vunpack.c.h.b16 %v1414
        %v1997 = vunpack.c.l.b16 %v1415
        %v1998 = vunpack.c.h.b16 %v1415
        %v1999 = vunpack.c.l.b16 %v1416
        %v2000 = vunpack.c.h.b16 %v1416
        %v2001 = vunpack.c.l.b16 %v1417
        %v2002 = vunpack.c.h.b16 %v1417
        %v2003 = vunpack.c.l.b16 %v1418
        %v2004 = vunpack.c.h.b16 %v1418
        %v2005 = vunpack.c.l.b16 %v1419
        %v2006 = vunpack.c.h.b16 %v1419
        %v2007 = vunpack.c.l.b16 %v1420
        %v2008 = vunpack.c.h.b16 %v1420
        %v2009 = vunpack.c.l.b16 %v1421
        %v2010 = vunpack.c.h.b16 %v1421
        %v2011 = vunpack.c.l.b16 %v1422
        %v2012 = vunpack.c.h.b16 %v1422
        %v2013 = vunpack.c.l.b16 %v1423
        %v2014 = vunpack.c.h.b16 %v1423
        %v2015 = vunpack.c.l.b16 %v1424
        %v2016 = vunpack.c.h.b16 %v1424
        %v2017 = vunpack.c.l.b16 %v1425
        %v2018 = vunpack.c.h.b16 %v1425
        %v2019 = vunpack.c.l.b16 %v1426
        %v2020 = vunpack.c.h.b16 %v1426
        %v2021 = vunpack.c.l.b16 %v1427
        %v2022 = vunpack.c.h.b16 %v1427
        %v2023 = vunpack.c.l.b16 %v1428
        %v2024 = vunpack.c.h.b16 %v1428
        %v2025 = vunpack.c.l.b16 %v1429
        %v2026 = vunpack.c.h.b16 %v1429
        %v2027 = vunpack.c.l.b16 %v1430
        %v2028 = vunpack.c.h.b16 %v1430
        %v2029 = vpack.c.b16 %v1649, %v1645
        %v2030 = vpack.c.b16 %v1650, %v1646
        %v2031 = vpack.c.b16 %v1651, %v1647
        %v2032 = vpack.c.b16 %v1652, %v1648
        %v2033 = vpack.c.b16 %v1657, %v1653
        %v2034 = vpack.c.b16 %v1658, %v1654
        %v2035 = vpack.c.b16 %v1659, %v1655
        %v2036 = vpack.c.b16 %v1660, %v1656
        %v2037 = vpack.c.b16 %v1665, %v1661
        %v2038 = vpack.c.b16 %v1666, %v1662
        %v2039 = vpack.c.b16 %v1667, %v1663
        %v2040 = vpack.c.b16 %v1668, %v1664
        %v2041 = vpack.c.b16 %v1673, %v1669
        %v2042 = vpack.c.b16 %v1674, %v1670
        %v2043 = vpack.c.b16 %v1675, %v1671
        %v2044 = vpack.c.b16 %v1676, %v1672
        %v2045 = vpack.c.b16 %v1681, %v1677
        %v2046 = vpack.c.b16 %v1682, %v1678
        %v2047 = vpack.c.b16 %v1683, %v1679
        %v2048 = vpack.c.b16 %v1684, %v1680
        %v2049 = vpack.c.b16 %v1689, %v1685
        %v2050 = vpack.c.b16 %v1690, %v1686
        %v2051 = vpack.c.b16 %v1691, %v1687
        %v2052 = vpack.c.b16 %v1692, %v1688
        %v2053 = vpack.c.b16 %v1697, %v1693
        %v2054 = vpack.c.b16 %v1698, %v1694
        %v2055 = vpack.c.b16 %v1699, %v1695
        %v2056 = vpack.c.b16 %v1700, %v1696
        %v2057 = vpack.c.b16 %v1705, %v1701
        %v2058 = vpack.c.b16 %v1706, %v1702
        %v2059 = vpack.c.b16 %v1707, %v1703
        %v2060 = vpack.c.b16 %v1708, %v1704
        %v2061 = vpack.c.b16 %v1713, %v1709
        %v2062 = vpack.c.b16 %v1714, %v1710
        %v2063 = vpack.c.b16 %v1715, %v1711
        %v2064 = vpack.c.b16 %v1716, %v1712
        %v2065 = vpack.c.b16 %v1721, %v1717
        %v2066 = vpack.c.b16 %v1722, %v1718
        %v2067 = vpack.c.b16 %v1723, %v1719
        %v2068 = vpack.c.b16 %v1724, %v1720
        %v2069 = vpack.c.b16 %v1729, %v1725
        %v2070 = vpack.c.b16 %v1730, %v1726
        %v2071 = vpack.c.b16 %v1731, %v1727
        %v2072 = vpack.c.b16 %v1732, %v1728
        %v2073 = vpack.c.b16 %v1737, %v1733
        %v2074 = vpack.c.b16 %v1738, %v1734
        %v2075 = vpack.c.b16 %v1739, %v1735
        %v2076 = vpack.c.b16 %v1740, %v1736
        %v2077 = vpack.c.b16 %v1745, %v1741
        %v2078 = vpack.c.b16 %v1746, %v1742
        %v2079 = vpack.c.b16 %v1747, %v1743
        %v2080 = vpack.c.b16 %v1748, %v1744
        %v2081 = vpack.c.b16 %v1753, %v1749
        %v2082 = vpack.c.b16 %v1754, %v1750
        %v2083 = vpack.c.b16 %v1755, %v1751
        %v2084 = vpack.c.b16 %v1756, %v1752
        %v2085 = vpack.c.b16 %v1761, %v1757
        %v2086 = vpack.c.b16 %v1762, %v1758
        %v2087 = vpack.c.b16 %v1763, %v1759
        %v2088 = vpack.c.b16 %v1764, %v1760
        %v2089 = vpack.c.b16 %v1769, %v1765
        %v2090 = vpack.c.b16 %v1770, %v1766
        %v2091 = vpack.c.b16 %v1771, %v1767
        %v2092 = vpack.c.b16 %v1772, %v1768
        %v2093 = vpack.c.b16 %v1777, %v1773
        %v2094 = vpack.c.b16 %v1778, %v1774
        %v2095 = vpack.c.b16 %v1779, %v1775
        %v2096 = vpack.c.b16 %v1780, %v1776
        %v2097 = vpack.c.b16 %v1785, %v1781
        %v2098 = vpack.c.b16 %v1786, %v1782
        %v2099 = vpack.c.b16 %v1787, %v1783
        %v2100 = vpack.c.b16 %v1788, %v1784
        %v2101 = vpack.c.b16 %v1793, %v1789
        %v2102 = vpack.c.b16 %v1794, %v1790
        %v2103 = vpack.c.b16 %v1795, %v1791
        %v2104 = vpack.c.b16 %v1796, %v1792
        %v2105 = vpack.c.b16 %v1801, %v1797
        %v2106 = vpack.c.b16 %v1802, %v1798
        %v2107 = vpack.c.b16 %v1803, %v1799
        %v2108 = vpack.c.b16 %v1804, %v1800
        %v2109 = vpack.c.b16 %v1809, %v1805
        %v2110 = vpack.c.b16 %v1810, %v1806
        %v2111 = vpack.c.b16 %v1811, %v1807
        %v2112 = vpack.c.b16 %v1812, %v1808
        %v2113 = vpack.c.b16 %v1817, %v1813
        %v2114 = vpack.c.b16 %v1818, %v1814
        %v2115 = vpack.c.b16 %v1819, %v1815
        %v2116 = vpack.c.b16 %v1820, %v1816
        %v2117 = vpack.c.b16 %v1825, %v1821
        %v2118 = vpack.c.b16 %v1826, %v1822
        %v2119 = vpack.c.b16 %v1827, %v1823
        %v2120 = vpack.c.b16 %v1828, %v1824
        %v2121 = vpack.c.b16 %v1833, %v1829
        %v2122 = vpack.c.b16 %v1834, %v1830
        %v2123 = vpack.c.b16 %v1835, %v1831
        %v2124 = vpack.c.b16 %v1836, %v1832
        %v2125 = vpack.c.b16 %v1841, %v1837
        %v2126 = vpack.c.b16 %v1842, %v1838
        %v2127 = vpack.c.b16 %v1843, %v1839
        %v2128 = vpack.c.b16 %v1844, %v1840
        %v2129 = vpack.c.b16 %v1849, %v1845
        %v2130 = vpack.c.b16 %v1850, %v1846
        %v2131 = vpack.c.b16 %v1851, %v1847
        %v2132 = vpack.c.b16 %v1852, %v1848
        %v2133 = vpack.c.b16 %v1857, %v1853
        %v2134 = vpack.c.b16 %v1858, %v1854
        %v2135 = vpack.c.b16 %v1859, %v1855
        %v2136 = vpack.c.b16 %v1860, %v1856
        %v2137 = vpack.c.b16 %v1865, %v1861
        %v2138 = vpack.c.b16 %v1866, %v1862
        %v2139 = vpack.c.b16 %v1867, %v1863
        %v2140 = vpack.c.b16 %v1868, %v1864
        %v2141 = vpack.c.b16 %v1873, %v1869
        %v2142 = vpack.c.b16 %v1874, %v1870
        %v2143 = vpack.c.b16 %v1875, %v1871
        %v2144 = vpack.c.b16 %v1876, %v1872
        %v2145 = vpack.c.b16 %v1881, %v1877
        %v2146 = vpack.c.b16 %v1882, %v1878
        %v2147 = vpack.c.b16 %v1883, %v1879
        %v2148 = vpack.c.b16 %v1884, %v1880
        %v2149 = vpack.c.b16 %v1889, %v1885
        %v2150 = vpack.c.b16 %v1890, %v1886
        %v2151 = vpack.c.b16 %v1891, %v1887
        %v2152 = vpack.c.b16 %v1892, %v1888
        %v2153 = vpack.c.b16 %v1897, %v1893
        %v2154 = vpack.c.b16 %v1898, %v1894
        %v2155 = vpack.c.b16 %v1899, %v1895
        %v2156 = vpack.c.b16 %v1900, %v1896
        %v2157 = vpack.c.b16 %v1905, %v1901
        %v2158 = vpack.c.b16 %v1906, %v1902
        %v2159 = vpack.c.b16 %v1907, %v1903
        %v2160 = vpack.c.b16 %v1908, %v1904
        %v2161 = vpack.c.b16 %v1913, %v1909
        %v2162 = vpack.c.b16 %v1914, %v1910
        %v2163 = vpack.c.b16 %v1915, %v1911
        %v2164 = vpack.c.b16 %v1916, %v1912
        %v2165 = vpack.c.b16 %v1921, %v1917
        %v2166 = vpack.c.b16 %v1922, %v1918
        %v2167 = vpack.c.b16 %v1923, %v1919
        %v2168 = vpack.c.b16 %v1924, %v1920
        %v2169 = vpack.c.b16 %v1929, %v1925
        %v2170 = vpack.c.b16 %v1930, %v1926
        %v2171 = vpack.c.b16 %v1931, %v1927
        %v2172 = vpack.c.b16 %v1932, %v1928
        %v2173 = vpack.c.b16 %v1937, %v1933
        %v2174 = vpack.c.b16 %v1938, %v1934
        %v2175 = vpack.c.b16 %v1939, %v1935
        %v2176 = vpack.c.b16 %v1940, %v1936
        %v2177 = vpack.c.b16 %v1945, %v1941
        %v2178 = vpack.c.b16 %v1946, %v1942
        %v2179 = vpack.c.b16 %v1947, %v1943
        %v2180 = vpack.c.b16 %v1948, %v1944
        %v2181 = vpack.c.b16 %v1953, %v1949
        %v2182 = vpack.c.b16 %v1954, %v1950
        %v2183 = vpack.c.b16 %v1955, %v1951
        %v2184 = vpack.c.b16 %v1956, %v1952
        %v2185 = vpack.c.b16 %v1961, %v1957
        %v2186 = vpack.c.b16 %v1962, %v1958
        %v2187 = vpack.c.b16 %v1963, %v1959
        %v2188 = vpack.c.b16 %v1964, %v1960
        %v2189 = vpack.c.b16 %v1969, %v1965
        %v2190 = vpack.c.b16 %v1970, %v1966
        %v2191 = vpack.c.b16 %v1971, %v1967
        %v2192 = vpack.c.b16 %v1972, %v1968
        %v2193 = vpack.c.b16 %v1977, %v1973
        %v2194 = vpack.c.b16 %v1978, %v1974
        %v2195 = vpack.c.b16 %v1979, %v1975
        %v2196 = vpack.c.b16 %v1980, %v1976
        %v2197 = vpack.c.b16 %v1985, %v1981
        %v2198 = vpack.c.b16 %v1986, %v1982
        %v2199 = vpack.c.b16 %v1987, %v1983
        %v2200 = vpack.c.b16 %v1988, %v1984
        %v2201 = vpack.c.b16 %v1993, %v1989
        %v2202 = vpack.c.b16 %v1994, %v1990
        %v2203 = vpack.c.b16 %v1995, %v1991
        %v2204 = vpack.c.b16 %v1996, %v1992
        %v2205 = vpack.c.b16 %v2001, %v1997
        %v2206 = vpack.c.b16 %v2002, %v1998
        %v2207 = vpack.c.b16 %v2003, %v1999
        %v2208 = vpack.c.b16 %v2004, %v2000
        %v2209 = vpack.c.b16 %v2009, %v2005
        %v2210 = vpack.c.b16 %v2010, %v2006
        %v2211 = vpack.c.b16 %v2011, %v2007
        %v2212 = vpack.c.b16 %v2012, %v2008
        %v2213 = vpack.c.b16 %v2017, %v2013
        %v2214 = vpack.c.b16 %v2018, %v2014
        %v2215 = vpack.c.b16 %v2019, %v2015
        %v2216 = vpack.c.b16 %v2020, %v2016
        %v2217 = vpack.c.b16 %v2025, %v2021
        %v2218 = vpack.c.b16 %v2026, %v2022
        %v2219 = vpack.c.b16 %v2027, %v2023
        %v2220 = vpack.c.b16 %v2028, %v2024
        %2413 = vmatprep.subr.bf16.mxu0 %v2030
        %2414 = vmatpush1.bf16.msra.mxu0 %v2029
        %2415 = vmatprep.subr.bf16.mxu0 %v2034
        %2416 = vmatpush1.bf16.msra.mxu0 %v2033
        %2417 = vmatprep.subr.bf16.mxu0 %v2038
        %2418 = vmatpush1.bf16.msra.mxu0 %v2037
        %2419 = vmatprep.subr.bf16.mxu0 %v2042
        %2420 = vmatpush1.bf16.msra.mxu0 %v2041
        %2421 = vmatprep.subr.bf16.mxu0 %v2046
        %2422 = vmatpush1.bf16.msra.mxu0 %v2045
        %2423 = vmatprep.subr.bf16.mxu0 %v2050
        %2424 = vmatpush1.bf16.msra.mxu0 %v2049
        %2425 = vmatprep.subr.bf16.mxu0 %v2054
        %2426 = vmatpush1.bf16.msra.mxu0 %v2053
        %2427 = vmatprep.subr.bf16.mxu0 %v2058
        %2428 = vmatpush1.bf16.msra.mxu0 %v2057
        %2429 = vmatprep.subr.bf16.mxu0 %v2062
        %2430 = vmatpush1.bf16.msra.mxu0 %v2061
        %2431 = vmatprep.subr.bf16.mxu0 %v2066
        %2432 = vmatpush1.bf16.msra.mxu0 %v2065
        %2433 = vmatprep.subr.bf16.mxu0 %v2070
        %2434 = vmatpush1.bf16.msra.mxu0 %v2069
        %2435 = vmatprep.subr.bf16.mxu0 %v2074
        %2436 = vmatpush1.bf16.msra.mxu0 %v2073
        %2437 = vmatprep.subr.bf16.mxu0 %v2078
        %2438 = vmatpush1.bf16.msra.mxu0 %v2077
        %2439 = vmatprep.subr.bf16.mxu0 %v2082
        %2440 = vmatpush1.bf16.msra.mxu0 %v2081
        %2441 = vmatprep.subr.bf16.mxu0 %v2086
        %2442 = vmatpush1.bf16.msra.mxu0 %v2085
        %2443 = vmatprep.subr.bf16.mxu0 %v2090
        %2444 = vmatpush1.bf16.msra.mxu0 %v2089
        %2445 = vmatprep.mubr.bf16.mxu0 %v1234
        %2446 = vmatmul.mubr.bf16.gmra.mrb[0].mxu0 %v1233
        %v2447 = vpop.f32.mrb[0].mxu0
        %v2448 = vadd.f32 %v1436, %v2447
        %v2449 = vpop.f32.mrb[0].mxu0
        %v2450 = vadd.f32 %v1440, %v2449
        %v2451 = vpop.f32.mrb[0].mxu0
        %v2452 = vadd.f32 %v1436, %v2451
        %v2453 = vpop.f32.mrb[0].mxu0
        %v2454 = vadd.f32 %v1440, %v2453
        %2455 = vdwg.mxu0
        %2456 = vmatprep.subr.bf16.mxu0 %v2094
        %2457 = vmatpush1.bf16.msra.mxu0 %v2093
        %2458 = vmatprep.subr.bf16.mxu0 %v2098
        %2459 = vmatpush1.bf16.msra.mxu0 %v2097
        %2460 = vmatprep.subr.bf16.mxu0 %v2102
        %2461 = vmatpush1.bf16.msra.mxu0 %v2101
        %2462 = vmatprep.subr.bf16.mxu0 %v2106
        %2463 = vmatpush1.bf16.msra.mxu0 %v2105
        %2464 = vmatprep.subr.bf16.mxu0 %v2110
        %2465 = vmatpush1.bf16.msra.mxu0 %v2109
        %2466 = vmatprep.subr.bf16.mxu0 %v2114
        %2467 = vmatpush1.bf16.msra.mxu0 %v2113
        %2468 = vmatprep.subr.bf16.mxu0 %v2118
        %2469 = vmatpush1.bf16.msra.mxu0 %v2117
        %2470 = vmatprep.subr.bf16.mxu0 %v2122
        %2471 = vmatpush1.bf16.msra.mxu0 %v2121
        %2472 = vmatprep.subr.bf16.mxu0 %v2126
        %2473 = vmatpush1.bf16.msra.mxu0 %v2125
        %2474 = vmatprep.subr.bf16.mxu0 %v2130
        %2475 = vmatpush1.bf16.msra.mxu0 %v2129
        %2476 = vmatprep.subr.bf16.mxu0 %v2134
        %2477 = vmatpush1.bf16.msra.mxu0 %v2133
        %2478 = vmatprep.subr.bf16.mxu0 %v2138
        %2479 = vmatpush1.bf16.msra.mxu0 %v2137
        %2480 = vmatprep.subr.bf16.mxu0 %v2142
        %2481 = vmatpush1.bf16.msra.mxu0 %v2141
        %2482 = vmatprep.subr.bf16.mxu0 %v2146
        %2483 = vmatpush1.bf16.msra.mxu0 %v2145
        %2484 = vmatprep.subr.bf16.mxu0 %v2150
        %2485 = vmatpush1.bf16.msra.mxu0 %v2149
        %2486 = vmatprep.subr.bf16.mxu0 %v2154
        %2487 = vmatpush1.bf16.msra.mxu0 %v2153
        %2488 = vmatprep.mubr.bf16.mxu0 %v1236
        %2489 = vmatmul.mubr.bf16.gmra.mrb[0].mxu0 %v1235
        %v2490 = vpop.f32.mrb[0].mxu0
        %v2491 = vadd.f32 %v2448, %v2490
        %v2492 = vpop.f32.mrb[0].mxu0
        %v2493 = vadd.f32 %v2450, %v2492
        %v2494 = vpop.f32.mrb[0].mxu0
        %v2495 = vadd.f32 %v2452, %v2494
        %v2496 = vpop.f32.mrb[0].mxu0
        %v2497 = vadd.f32 %v2454, %v2496
        %2498 = vdwg.mxu0
        %2499 = vmatprep.subr.bf16.mxu0 %v2158
        %2500 = vmatpush1.bf16.msra.mxu0 %v2157
        %2501 = vmatprep.subr.bf16.mxu0 %v2162
        %2502 = vmatpush1.bf16.msra.mxu0 %v2161
        %2503 = vmatprep.subr.bf16.mxu0 %v2166
        %2504 = vmatpush1.bf16.msra.mxu0 %v2165
        %2505 = vmatprep.subr.bf16.mxu0 %v2170
        %2506 = vmatpush1.bf16.msra.mxu0 %v2169
        %2507 = vmatprep.subr.bf16.mxu0 %v2174
        %2508 = vmatpush1.bf16.msra.mxu0 %v2173
        %2509 = vmatprep.subr.bf16.mxu0 %v2178
        %2510 = vmatpush1.bf16.msra.mxu0 %v2177
        %2511 = vmatprep.subr.bf16.mxu0 %v2182
        %2512 = vmatpush1.bf16.msra.mxu0 %v2181
        %2513 = vmatprep.subr.bf16.mxu0 %v2186
        %2514 = vmatpush1.bf16.msra.mxu0 %v2185
        %2515 = vmatprep.subr.bf16.mxu0 %v2190
        %2516 = vmatpush1.bf16.msra.mxu0 %v2189
        %2517 = vmatprep.subr.bf16.mxu0 %v2194
        %2518 = vmatpush1.bf16.msra.mxu0 %v2193
        %2519 = vmatprep.subr.bf16.mxu0 %v2198
        %2520 = vmatpush1.bf16.msra.mxu0 %v2197
        %2521 = vmatprep.subr.bf16.mxu0 %v2202
        %2522 = vmatpush1.bf16.msra.mxu0 %v2201
        %2523 = vmatprep.subr.bf16.mxu0 %v2206
        %2524 = vmatpush1.bf16.msra.mxu0 %v2205
        %2525 = vmatprep.subr.bf16.mxu0 %v2210
        %2526 = vmatpush1.bf16.msra.mxu0 %v2209
        %2527 = vmatprep.subr.bf16.mxu0 %v2214
        %2528 = vmatpush1.bf16.msra.mxu0 %v2213
        %2529 = vmatprep.subr.bf16.mxu0 %v2218
        %2530 = vmatpush1.bf16.msra.mxu0 %v2217
        %2531 = vmatprep.mubr.bf16.mxu0 %v1238
        %2532 = vmatmul.mubr.bf16.gmra.mrb[0].mxu0 %v1237
        %v2533 = vpop.f32.mrb[0].mxu0
        %v2534 = vadd.f32 %v2491, %v2533
        %v2535 = vpop.f32.mrb[0].mxu0
        %v2536 = vadd.f32 %v2493, %v2535
        %v2537 = vpop.f32.mrb[0].mxu0
        %v2538 = vadd.f32 %v2495, %v2537
        %v2539 = vpop.f32.mrb[0].mxu0
        %v2540 = vadd.f32 %v2497, %v2539
        %2541 = vdwg.mxu0
        %2542 = vmatprep.subr.bf16.mxu0 %v2032
        %2543 = vmatpush1.bf16.msra.mxu0 %v2031
        %2544 = vmatprep.subr.bf16.mxu0 %v2036
        %2545 = vmatpush1.bf16.msra.mxu0 %v2035
        %2546 = vmatprep.subr.bf16.mxu0 %v2040
        %2547 = vmatpush1.bf16.msra.mxu0 %v2039
        %2548 = vmatprep.subr.bf16.mxu0 %v2044
        %2549 = vmatpush1.bf16.msra.mxu0 %v2043
        %2550 = vmatprep.subr.bf16.mxu0 %v2048
        %2551 = vmatpush1.bf16.msra.mxu0 %v2047
        %2552 = vmatprep.subr.bf16.mxu0 %v2052
        %2553 = vmatpush1.bf16.msra.mxu0 %v2051
        %2554 = vmatprep.subr.bf16.mxu0 %v2056
        %2555 = vmatpush1.bf16.msra.mxu0 %v2055
        %2556 = vmatprep.subr.bf16.mxu0 %v2060
        %2557 = vmatpush1.bf16.msra.mxu0 %v2059
        %2558 = vmatprep.subr.bf16.mxu0 %v2064
        %2559 = vmatpush1.bf16.msra.mxu0 %v2063
        %2560 = vmatprep.subr.bf16.mxu0 %v2068
        %2561 = vmatpush1.bf16.msra.mxu0 %v2067
        %2562 = vmatprep.subr.bf16.mxu0 %v2072
        %2563 = vmatpush1.bf16.msra.mxu0 %v2071
        %2564 = vmatprep.subr.bf16.mxu0 %v2076
        %2565 = vmatpush1.bf16.msra.mxu0 %v2075
        %2566 = vmatprep.subr.bf16.mxu0 %v2080
        %2567 = vmatpush1.bf16.msra.mxu0 %v2079
        %2568 = vmatprep.subr.bf16.mxu0 %v2084
        %2569 = vmatpush1.bf16.msra.mxu0 %v2083
        %2570 = vmatprep.subr.bf16.mxu0 %v2088
        %2571 = vmatpush1.bf16.msra.mxu0 %v2087
        %2572 = vmatprep.subr.bf16.mxu0 %v2092
        %2573 = vmatpush1.bf16.msra.mxu0 %v2091
        %2574 = vmatprep.mubr.bf16.mxu0 %v1234
        %2575 = vmatmul.mubr.bf16.gmra.mrb[0].mxu0 %v1233
        %v2576 = vpop.f32.mrb[0].mxu0
        %v2577 = vadd.f32 %v1444, %v2576
        %v2578 = vpop.f32.mrb[0].mxu0
        %v2579 = vadd.f32 %v1448, %v2578
        %v2580 = vpop.f32.mrb[0].mxu0
        %v2581 = vadd.f32 %v1444, %v2580
        %v2582 = vpop.f32.mrb[0].mxu0
        %v2583 = vadd.f32 %v1448, %v2582
        %2584 = vdwg.mxu0
        %2585 = vmatprep.subr.bf16.mxu0 %v2096
        %2586 = vmatpush1.bf16.msra.mxu0 %v2095
        %2587 = vmatprep.subr.bf16.mxu0 %v2100
        %2588 = vmatpush1.bf16.msra.mxu0 %v2099
        %2589 = vmatprep.subr.bf16.mxu0 %v2104
        %2590 = vmatpush1.bf16.msra.mxu0 %v2103
        %2591 = vmatprep.subr.bf16.mxu0 %v2108
        %2592 = vmatpush1.bf16.msra.mxu0 %v2107
        %2593 = vmatprep.subr.bf16.mxu0 %v2112
        %2594 = vmatpush1.bf16.msra.mxu0 %v2111
        %2595 = vmatprep.subr.bf16.mxu0 %v2116
        %2596 = vmatpush1.bf16.msra.mxu0 %v2115
        %2597 = vmatprep.subr.bf16.mxu0 %v2120
        %2598 = vmatpush1.bf16.msra.mxu0 %v2119
        %2599 = vmatprep.subr.bf16.mxu0 %v2124
        %2600 = vmatpush1.bf16.msra.mxu0 %v2123
        %2601 = vmatprep.subr.bf16.mxu0 %v2128
        %2602 = vmatpush1.bf16.msra.mxu0 %v2127
        %2603 = vmatprep.subr.bf16.mxu0 %v2132
        %2604 = vmatpush1.bf16.msra.mxu0 %v2131
        %2605 = vmatprep.subr.bf16.mxu0 %v2136
        %2606 = vmatpush1.bf16.msra.mxu0 %v2135
        %2607 = vmatprep.subr.bf16.mxu0 %v2140
        %2608 = vmatpush1.bf16.msra.mxu0 %v2139
        %2609 = vmatprep.subr.bf16.mxu0 %v2144
        %2610 = vmatpush1.bf16.msra.mxu0 %v2143
        %2611 = vmatprep.subr.bf16.mxu0 %v2148
        %2612 = vmatpush1.bf16.msra.mxu0 %v2147
        %2613 = vmatprep.subr.bf16.mxu0 %v2152
        %2614 = vmatpush1.bf16.msra.mxu0 %v2151
        %2615 = vmatprep.subr.bf16.mxu0 %v2156
        %2616 = vmatpush1.bf16.msra.mxu0 %v2155
        %2617 = vmatprep.mubr.bf16.mxu0 %v1236
        %2618 = vmatmul.mubr.bf16.gmra.mrb[0].mxu0 %v1235
        %v2619 = vpop.f32.mrb[0].mxu0
        %v2620 = vadd.f32 %v2577, %v2619
        %v2621 = vpop.f32.mrb[0].mxu0
        %v2622 = vadd.f32 %v2579, %v2621
        %v2623 = vpop.f32.mrb[0].mxu0
        %v2624 = vadd.f32 %v2581, %v2623
        %v2625 = vpop.f32.mrb[0].mxu0
        %v2626 = vadd.f32 %v2583, %v2625
        %2627 = vdwg.mxu0
        %2628 = vmatprep.subr.bf16.mxu0 %v2160
        %2629 = vmatpush1.bf16.msra.mxu0 %v2159
        %2630 = vmatprep.subr.bf16.mxu0 %v2164
        %2631 = vmatpush1.bf16.msra.mxu0 %v2163
        %2632 = vmatprep.subr.bf16.mxu0 %v2168
        %2633 = vmatpush1.bf16.msra.mxu0 %v2167
        %2634 = vmatprep.subr.bf16.mxu0 %v2172
        %2635 = vmatpush1.bf16.msra.mxu0 %v2171
        %2636 = vmatprep.subr.bf16.mxu0 %v2176
        %2637 = vmatpush1.bf16.msra.mxu0 %v2175
        %2638 = vmatprep.subr.bf16.mxu0 %v2180
        %2639 = vmatpush1.bf16.msra.mxu0 %v2179
        %2640 = vmatprep.subr.bf16.mxu0 %v2184
        %2641 = vmatpush1.bf16.msra.mxu0 %v2183
        %2642 = vmatprep.subr.bf16.mxu0 %v2188
        %2643 = vmatpush1.bf16.msra.mxu0 %v2187
        %2644 = vmatprep.subr.bf16.mxu0 %v2192
        %2645 = vmatpush1.bf16.msra.mxu0 %v2191
        %2646 = vmatprep.subr.bf16.mxu0 %v2196
        %2647 = vmatpush1.bf16.msra.mxu0 %v2195
        %2648 = vmatprep.subr.bf16.mxu0 %v2200
        %2649 = vmatpush1.bf16.msra.mxu0 %v2199
        %2650 = vmatprep.subr.bf16.mxu0 %v2204
        %2651 = vmatpush1.bf16.msra.mxu0 %v2203
        %2652 = vmatprep.subr.bf16.mxu0 %v2208
        %2653 = vmatpush1.bf16.msra.mxu0 %v2207
        %2654 = vmatprep.subr.bf16.mxu0 %v2212
        %2655 = vmatpush1.bf16.msra.mxu0 %v2211
        %2656 = vmatprep.subr.bf16.mxu0 %v2216
        %2657 = vmatpush1.bf16.msra.mxu0 %v2215
        %2658 = vmatprep.subr.bf16.mxu0 %v2220
        %2659 = vmatpush1.bf16.msra.mxu0 %v2219
        %2660 = vmatprep.mubr.bf16.mxu0 %v1238
        %2661 = vmatmul.mubr.bf16.gmra.mrb[0].mxu0 %v1237
        %v2662 = vpop.f32.mrb[0].mxu0
        %v2663 = vadd.f32 %v2620, %v2662
        %v2664 = vpop.f32.mrb[0].mxu0
        %v2665 = vadd.f32 %v2622, %v2664
        %v2666 = vpop.f32.mrb[0].mxu0
        %v2667 = vadd.f32 %v2624, %v2666
        %v2668 = vpop.f32.mrb[0].mxu0
        %v2669 = vadd.f32 %v2626, %v2668
        %2670 = vdwg.mxu0
        %v2671 = vmax.f32 %v2534, 0.0
        %v2672 = vmax.f32 %v2536, 0.0
        %v2673 = vmax.f32 %v2663, 0.0
        %v2674 = vmax.f32 %v2665, 0.0
        %v2675 = vmax.f32 %v2538, 0.0
        %v2676 = vmax.f32 %v2540, 0.0
        %v2677 = vmax.f32 %v2667, 0.0
        %v2678 = vmax.f32 %v2669, 0.0
        %v2679 = vmax.f32 %v2671, %v2673
        %v2680 = vmax.f32 %v2672, %v2674
        %v2681 = vmax.f32 %v2675, %v2677
        %v2682 = vmax.f32 %v2676, %v2678
        %v2683 = vld [vmem:[%s6] sm:$0xf]
        %v2684 = vld [vmem:[%s6 + $0x4] sm:$0xf]
        %v2685 = vpack.c.bf16 %v2681, %v2679
        %v2686 = vpack.c.bf16 %v2682, %v2680
        %v2689 = vunpack.c.l.b16 %v2683
        %v2690 = vunpack.c.l.b16 %v2684
        %v2691 = vpack.c.b16 %v2690, %v2689
        %vm2692 = vcmask 130048
        %v2694 = vsel %vm2692, %v2691, 0
        %2696 = vmatprep.subr.bf16.mxu0 %v2686
        %2697 = vmatpush1.bf16.msra.mxu0 %v2685
        %2698 = vmatprep.subr.bf16.mxu0 0
        %2699 = vmatpush1.bf16.msra.mxu0 0
        %2700 = vmatprep.subr.bf16.mxu0 0
        %2701 = vmatpush1.bf16.msra.mxu0 0
        %2702 = vmatprep.subr.bf16.mxu0 0
        %2703 = vmatpush1.bf16.msra.mxu0 0
        %2704 = vmatprep.subr.bf16.mxu0 0
        %2705 = vmatpush1.bf16.msra.mxu0 0
        %2706 = vmatprep.subr.bf16.mxu0 0
        %2707 = vmatpush1.bf16.msra.mxu0 0
        %2708 = vmatprep.subr.bf16.mxu0 0
        %2709 = vmatpush1.bf16.msra.mxu0 0
        %2710 = vmatprep.subr.bf16.mxu0 0
        %2711 = vmatpush1.bf16.msra.mxu0 0
        %2712 = vmatprep.subr.bf16.mxu0 0
        %2713 = vmatpush1.bf16.msra.mxu0 0
        %2714 = vmatprep.subr.bf16.mxu0 0
        %2715 = vmatpush1.bf16.msra.mxu0 0
        %2716 = vmatprep.subr.bf16.mxu0 0
        %2717 = vmatpush1.bf16.msra.mxu0 0
        %2718 = vmatprep.subr.bf16.mxu0 0
        %2719 = vmatpush1.bf16.msra.mxu0 0
        %2720 = vmatprep.subr.bf16.mxu0 0
        %2721 = vmatpush1.bf16.msra.mxu0 0
        %2722 = vmatprep.subr.bf16.mxu0 0
        %2723 = vmatpush1.bf16.msra.mxu0 0
        %2724 = vmatprep.subr.bf16.mxu0 0
        %2725 = vmatpush1.bf16.msra.mxu0 0
        %2726 = vmatprep.subr.bf16.mxu0 0
        %2727 = vmatpush1.bf16.msra.mxu0 0
        %2728 = vmatprep.mubr.bf16.mxu0 0
        %2729 = vmatmul.mubr.bf16.gmra.mrb[0].mxu0 %v2694
        %v2730 = vpop.f32.mrb[0].mxu0
        %v2731 = vadd.f32 0.0, %v2730
        %v2732 = vpop.f32.mrb[0].mxu0
        %v2733 = vadd.f32 0.0, %v2732
        %v2734 = vpop.f32.mrb[0].mxu0
        %v2735 = vadd.f32 0.0, %v2734
        %v2736 = vpop.f32.mrb[0].mxu0
        %v2737 = vadd.f32 0.0, %v2736
        %2738 = vdwg.mxu0
        %v2739 = vmax.f32 %v2731, %v2735
        %v2740 = vmax.f32 %v2733, %v2737
        %v2743 = vrot.slane %v2739, 1
        %v2744 = vrot.slane %v2740, 1
        %v2747 = vrot.slane %v2739, 2
        %v2748 = vrot.slane %v2740, 2
        %v2751 = vrot.slane %v2739, 3
        %v2752 = vrot.slane %v2740, 3
        %v2755 = vrot.slane %v2739, 4
        %v2756 = vrot.slane %v2740, 4
        %v2759 = vrot.slane %v2739, 5
        %v2760 = vrot.slane %v2740, 5
        %v2763 = vrot.slane %v2739, 6
        %v2764 = vrot.slane %v2740, 6
        %v2767 = vrot.slane %v2739, 7
        %v2768 = vrot.slane %v2740, 7
        %v2771 = vpack.c.bf16 %v2739, %v2739
        %v2772 = vpack.c.bf16 %v2740, %v2740
        %v2773 = vpack.c.bf16 %v2743, %v2743
        %v2774 = vpack.c.bf16 %v2744, %v2744
        %v2775 = vpack.c.bf16 %v2747, %v2747
        %v2776 = vpack.c.bf16 %v2748, %v2748
        %v2777 = vpack.c.bf16 %v2751, %v2751
        %v2778 = vpack.c.bf16 %v2752, %v2752
        %v2779 = vpack.c.bf16 %v2755, %v2755
        %v2780 = vpack.c.bf16 %v2756, %v2756
        %v2781 = vpack.c.bf16 %v2759, %v2759
        %v2782 = vpack.c.bf16 %v2760, %v2760
        %v2783 = vpack.c.bf16 %v2763, %v2763
        %v2784 = vpack.c.bf16 %v2764, %v2764
        %v2785 = vpack.c.bf16 %v2767, %v2767
        %v2786 = vpack.c.bf16 %v2768, %v2768
        %v2787 = vld [vmem:[#allocation12] sm:$0xf]
        %v2788 = vld [vmem:[#allocation12 + $0x4] sm:$0xf]
        %v2789 = vld [vmem:[#allocation12 + $0x8] sm:$0xf]
        %v2790 = vld [vmem:[#allocation12 + $0xc] sm:$0xf]
        %v2791 = vld [vmem:[#allocation12 + $0x10] sm:$0xf]
        %v2792 = vld [vmem:[#allocation12 + $0x14] sm:$0xf]
        %v2793 = vld [vmem:[#allocation12 + $0x18] sm:$0xf]
        %v2794 = vld [vmem:[#allocation12 + $0x1c] sm:$0xf]
        %v2795 = vld [vmem:[#allocation12 + $0x20] sm:$0xf]
        %v2796 = vld [vmem:[#allocation12 + $0x24] sm:$0xf]
        %v2797 = vld [vmem:[#allocation12 + $0x28] sm:$0xf]
        %v2798 = vld [vmem:[#allocation12 + $0x2c] sm:$0xf]
        %v2799 = vld [vmem:[#allocation12 + $0x30] sm:$0xf]
        %v2800 = vld [vmem:[#allocation12 + $0x34] sm:$0xf]
        %v2801 = vld [vmem:[#allocation12 + $0x38] sm:$0xf]
        %v2802 = vld [vmem:[#allocation12 + $0x3c] sm:$0xf]
        %v2803 = vld [vmem:[#allocation12 + $0x40] sm:$0xf]
        %v2804 = vld [vmem:[#allocation12 + $0x44] sm:$0xf]
        %v2805 = vld [vmem:[#allocation12 + $0x48] sm:$0xf]
        %v2806 = vld [vmem:[#allocation12 + $0x4c] sm:$0xf]
        %v2807 = vld [vmem:[#allocation12 + $0x50] sm:$0xf]
        %v2808 = vld [vmem:[#allocation12 + $0x54] sm:$0xf]
        %v2809 = vld [vmem:[#allocation12 + $0x58] sm:$0xf]
        %v2810 = vld [vmem:[#allocation12 + $0x5c] sm:$0xf]
        %v2811 = vld [vmem:[#allocation12 + $0x60] sm:$0xf]
        %v2812 = vld [vmem:[#allocation12 + $0x64] sm:$0xf]
        %v2813 = vld [vmem:[#allocation12 + $0x68] sm:$0xf]
        %v2814 = vld [vmem:[#allocation12 + $0x6c] sm:$0xf]
        %v2815 = vld [vmem:[#allocation12 + $0x70] sm:$0xf]
        %v2816 = vld [vmem:[#allocation12 + $0x74] sm:$0xf]
        %v2817 = vld [vmem:[#allocation12 + $0x78] sm:$0xf]
        %v2818 = vld [vmem:[#allocation12 + $0x7c] sm:$0xf]
        %v2819 = vld [vmem:[#allocation12 + $0x80] sm:$0xf]
        %v2820 = vld [vmem:[#allocation12 + $0x84] sm:$0xf]
        %v2821 = vld [vmem:[#allocation12 + $0x88] sm:$0xf]
        %v2822 = vld [vmem:[#allocation12 + $0x8c] sm:$0xf]
        %v2823 = vld [vmem:[#allocation12 + $0x90] sm:$0xf]
        %v2824 = vld [vmem:[#allocation12 + $0x94] sm:$0xf]
        %v2825 = vld [vmem:[#allocation12 + $0x98] sm:$0xf]
        %v2826 = vld [vmem:[#allocation12 + $0x9c] sm:$0xf]
        %v2827 = vld [vmem:[#allocation12 + $0xa0] sm:$0xf]
        %v2828 = vld [vmem:[#allocation12 + $0xa4] sm:$0xf]
        %v2829 = vld [vmem:[#allocation12 + $0xa8] sm:$0xf]
        %v2830 = vld [vmem:[#allocation12 + $0xac] sm:$0xf]
        %v2831 = vld [vmem:[#allocation12 + $0xb0] sm:$0xf]
        %v2832 = vld [vmem:[#allocation12 + $0xb4] sm:$0xf]
        %v2833 = vld [vmem:[#allocation12 + $0xb8] sm:$0xf]
        %v2834 = vld [vmem:[#allocation12 + $0xbc] sm:$0xf]
        %v2835 = vld [vmem:[#allocation12 + $0xc0] sm:$0xf]
        %v2836 = vld [vmem:[#allocation12 + $0xc4] sm:$0xf]
        %v2837 = vld [vmem:[#allocation12 + $0xc8] sm:$0xf]
        %v2838 = vld [vmem:[#allocation12 + $0xcc] sm:$0xf]
        %v2839 = vld [vmem:[#allocation12 + $0xd0] sm:$0xf]
        %v2840 = vld [vmem:[#allocation12 + $0xd4] sm:$0xf]
        %v2841 = vld [vmem:[#allocation12 + $0xd8] sm:$0xf]
        %v2842 = vld [vmem:[#allocation12 + $0xdc] sm:$0xf]
        %v2843 = vld [vmem:[#allocation12 + $0xe0] sm:$0xf]
        %v2844 = vld [vmem:[#allocation12 + $0xe4] sm:$0xf]
        %v2845 = vld [vmem:[#allocation12 + $0xe8] sm:$0xf]
        %v2846 = vld [vmem:[#allocation12 + $0xec] sm:$0xf]
        %v2847 = vld [vmem:[#allocation12 + $0xf0] sm:$0xf]
        %v2848 = vld [vmem:[#allocation12 + $0xf4] sm:$0xf]
        %v2849 = vld [vmem:[#allocation12 + $0xf8] sm:$0xf]
        %v2850 = vld [vmem:[#allocation12 + $0xfc] sm:$0xf]
        %v2851 = vld [vmem:[#allocation12 + $0x100] sm:$0xf]
        %v2852 = vld [vmem:[#allocation12 + $0x104] sm:$0xf]
        %v2853 = vld [vmem:[#allocation12 + $0x108] sm:$0xf]
        %v2854 = vld [vmem:[#allocation12 + $0x10c] sm:$0xf]
        %v2855 = vld [vmem:[#allocation12 + $0x110] sm:$0xf]
        %v2856 = vld [vmem:[#allocation12 + $0x114] sm:$0xf]
        %v2857 = vld [vmem:[#allocation12 + $0x118] sm:$0xf]
        %v2858 = vld [vmem:[#allocation12 + $0x11c] sm:$0xf]
        %v2859 = vld [vmem:[#allocation12 + $0x120] sm:$0xf]
        %v2860 = vld [vmem:[#allocation12 + $0x124] sm:$0xf]
        %v2861 = vld [vmem:[#allocation12 + $0x128] sm:$0xf]
        %v2862 = vld [vmem:[#allocation12 + $0x12c] sm:$0xf]
        %v2863 = vld [vmem:[#allocation12 + $0x130] sm:$0xf]
        %v2864 = vld [vmem:[#allocation12 + $0x134] sm:$0xf]
        %v2865 = vld [vmem:[#allocation12 + $0x138] sm:$0xf]
        %v2866 = vld [vmem:[#allocation12 + $0x13c] sm:$0xf]
        %v2867 = vld [vmem:[#allocation12 + $0x140] sm:$0xf]
        %v2868 = vld [vmem:[#allocation12 + $0x144] sm:$0xf]
        %v2869 = vld [vmem:[#allocation12 + $0x148] sm:$0xf]
        %v2870 = vld [vmem:[#allocation12 + $0x14c] sm:$0xf]
        %v2871 = vld [vmem:[#allocation12 + $0x150] sm:$0xf]
        %v2872 = vld [vmem:[#allocation12 + $0x154] sm:$0xf]
        %v2873 = vld [vmem:[#allocation12 + $0x158] sm:$0xf]
        %v2874 = vld [vmem:[#allocation12 + $0x15c] sm:$0xf]
        %v2875 = vld [vmem:[#allocation12 + $0x160] sm:$0xf]
        %v2876 = vld [vmem:[#allocation12 + $0x164] sm:$0xf]
        %v2877 = vld [vmem:[#allocation12 + $0x168] sm:$0xf]
        %v2878 = vld [vmem:[#allocation12 + $0x16c] sm:$0xf]
        %v2879 = vld [vmem:[#allocation12 + $0x170] sm:$0xf]
        %v2880 = vld [vmem:[#allocation12 + $0x174] sm:$0xf]
        %v2881 = vld [vmem:[#allocation12 + $0x178] sm:$0xf]
        %v2882 = vld [vmem:[#allocation12 + $0x17c] sm:$0xf]
        %v2883 = vld [vmem:[#allocation12 + $0x180] sm:$0xf]
        %v2884 = vld [vmem:[#allocation12 + $0x184] sm:$0xf]
        %v2885 = vld [vmem:[#allocation12 + $0x188] sm:$0xf]
        %v2886 = vld [vmem:[#allocation12 + $0x18c] sm:$0xf]
        %v2887 = vld [vmem:[#allocation12 + $0x190] sm:$0xf]
        %v2888 = vld [vmem:[#allocation12 + $0x194] sm:$0xf]
        %v2889 = vld [vmem:[#allocation12 + $0x198] sm:$0xf]
        %v2890 = vld [vmem:[#allocation12 + $0x19c] sm:$0xf]
        %v2891 = vld [vmem:[#allocation12 + $0x1a0] sm:$0xf]
        %v2892 = vld [vmem:[#allocation12 + $0x1a4] sm:$0xf]
        %v2893 = vld [vmem:[#allocation12 + $0x1a8] sm:$0xf]
        %v2894 = vld [vmem:[#allocation12 + $0x1ac] sm:$0xf]
        %v2895 = vld [vmem:[#allocation12 + $0x1b0] sm:$0xf]
        %v2896 = vld [vmem:[#allocation12 + $0x1b4] sm:$0xf]
        %v2897 = vld [vmem:[#allocation12 + $0x1b8] sm:$0xf]
        %v2898 = vld [vmem:[#allocation12 + $0x1bc] sm:$0xf]
        %v2899 = vld [vmem:[#allocation12 + $0x1c0] sm:$0xf]
        %v2900 = vld [vmem:[#allocation12 + $0x1c4] sm:$0xf]
        %v2901 = vld [vmem:[#allocation12 + $0x1c8] sm:$0xf]
        %v2902 = vld [vmem:[#allocation12 + $0x1cc] sm:$0xf]
        %v2903 = vld [vmem:[#allocation12 + $0x1d0] sm:$0xf]
        %v2904 = vld [vmem:[#allocation12 + $0x1d4] sm:$0xf]
        %v2905 = vld [vmem:[#allocation12 + $0x1d8] sm:$0xf]
        %v2906 = vld [vmem:[#allocation12 + $0x1dc] sm:$0xf]
        %v2907 = vld [vmem:[#allocation12 + $0x1e0] sm:$0xf]
        %v2908 = vld [vmem:[#allocation12 + $0x1e4] sm:$0xf]
        %v2909 = vld [vmem:[#allocation12 + $0x1e8] sm:$0xf]
        %v2910 = vld [vmem:[#allocation12 + $0x1ec] sm:$0xf]
        %v2911 = vld [vmem:[#allocation12 + $0x1f0] sm:$0xf]
        %v2912 = vld [vmem:[#allocation12 + $0x1f4] sm:$0xf]
        %v2913 = vld [vmem:[#allocation12 + $0x1f8] sm:$0xf]
        %v2914 = vld [vmem:[#allocation12 + $0x1fc] sm:$0xf]
        %v2915 = vld [vmem:[#allocation12 + $0x200] sm:$0xf]
        %v2916 = vld [vmem:[#allocation12 + $0x204] sm:$0xf]
        %v2917 = vld [vmem:[#allocation12 + $0x208] sm:$0xf]
        %v2918 = vld [vmem:[#allocation12 + $0x20c] sm:$0xf]
        %v2919 = vld [vmem:[#allocation12 + $0x210] sm:$0xf]
        %v2920 = vld [vmem:[#allocation12 + $0x214] sm:$0xf]
        %v2921 = vld [vmem:[#allocation12 + $0x218] sm:$0xf]
        %v2922 = vld [vmem:[#allocation12 + $0x21c] sm:$0xf]
        %v2923 = vld [vmem:[#allocation12 + $0x220] sm:$0xf]
        %v2924 = vld [vmem:[#allocation12 + $0x224] sm:$0xf]
        %v2925 = vld [vmem:[#allocation12 + $0x228] sm:$0xf]
        %v2926 = vld [vmem:[#allocation12 + $0x22c] sm:$0xf]
        %v2927 = vld [vmem:[#allocation12 + $0x230] sm:$0xf]
        %v2928 = vld [vmem:[#allocation12 + $0x234] sm:$0xf]
        %v2929 = vld [vmem:[#allocation12 + $0x238] sm:$0xf]
        %v2930 = vld [vmem:[#allocation12 + $0x23c] sm:$0xf]
        %v2931 = vld [vmem:[#allocation12 + $0x240] sm:$0xf]
        %v2932 = vld [vmem:[#allocation12 + $0x244] sm:$0xf]
        %v2933 = vld [vmem:[#allocation12 + $0x248] sm:$0xf]
        %v2934 = vld [vmem:[#allocation12 + $0x24c] sm:$0xf]
        %v2935 = vld [vmem:[#allocation12 + $0x250] sm:$0xf]
        %v2936 = vld [vmem:[#allocation12 + $0x254] sm:$0xf]
        %v2937 = vld [vmem:[#allocation12 + $0x258] sm:$0xf]
        %v2938 = vld [vmem:[#allocation12 + $0x25c] sm:$0xf]
        %v2939 = vld [vmem:[#allocation12 + $0x260] sm:$0xf]
        %v2940 = vld [vmem:[#allocation12 + $0x264] sm:$0xf]
        %v2941 = vld [vmem:[#allocation12 + $0x268] sm:$0xf]
        %v2942 = vld [vmem:[#allocation12 + $0x26c] sm:$0xf]
        %v2943 = vld [vmem:[#allocation12 + $0x270] sm:$0xf]
        %v2944 = vld [vmem:[#allocation12 + $0x274] sm:$0xf]
        %v2945 = vld [vmem:[#allocation12 + $0x278] sm:$0xf]
        %v2946 = vld [vmem:[#allocation12 + $0x27c] sm:$0xf]
        %v2947 = vld [vmem:[#allocation12 + $0x280] sm:$0xf]
        %v2948 = vld [vmem:[#allocation12 + $0x284] sm:$0xf]
        %v2949 = vld [vmem:[#allocation12 + $0x288] sm:$0xf]
        %v2950 = vld [vmem:[#allocation12 + $0x28c] sm:$0xf]
        %v2951 = vld [vmem:[#allocation12 + $0x290] sm:$0xf]
        %v2952 = vld [vmem:[#allocation12 + $0x294] sm:$0xf]
        %v2953 = vld [vmem:[#allocation12 + $0x298] sm:$0xf]
        %v2954 = vld [vmem:[#allocation12 + $0x29c] sm:$0xf]
        %v2955 = vld [vmem:[#allocation12 + $0x2a0] sm:$0xf]
        %v2956 = vld [vmem:[#allocation12 + $0x2a4] sm:$0xf]
        %v2957 = vld [vmem:[#allocation12 + $0x2a8] sm:$0xf]
        %v2958 = vld [vmem:[#allocation12 + $0x2ac] sm:$0xf]
        %v2959 = vld [vmem:[#allocation12 + $0x2b0] sm:$0xf]
        %v2960 = vld [vmem:[#allocation12 + $0x2b4] sm:$0xf]
        %v2961 = vld [vmem:[#allocation12 + $0x2b8] sm:$0xf]
        %v2962 = vld [vmem:[#allocation12 + $0x2bc] sm:$0xf]
        %v2963 = vld [vmem:[#allocation12 + $0x2c0] sm:$0xf]
        %v2964 = vld [vmem:[#allocation12 + $0x2c4] sm:$0xf]
        %v2965 = vld [vmem:[#allocation12 + $0x2c8] sm:$0xf]
        %v2966 = vld [vmem:[#allocation12 + $0x2cc] sm:$0xf]
        %v2967 = vld [vmem:[#allocation12 + $0x2d0] sm:$0xf]
        %v2968 = vld [vmem:[#allocation12 + $0x2d4] sm:$0xf]
        %v2969 = vld [vmem:[#allocation12 + $0x2d8] sm:$0xf]
        %v2970 = vld [vmem:[#allocation12 + $0x2dc] sm:$0xf]
        %v2971 = vld [vmem:[#allocation12 + $0x2e0] sm:$0xf]
        %v2972 = vld [vmem:[#allocation12 + $0x2e4] sm:$0xf]
        %v2973 = vld [vmem:[#allocation12 + $0x2e8] sm:$0xf]
        %v2974 = vld [vmem:[#allocation12 + $0x2ec] sm:$0xf]
        %v2975 = vld [vmem:[#allocation12 + $0x2f0] sm:$0xf]
        %v2976 = vld [vmem:[#allocation12 + $0x2f4] sm:$0xf]
        %v2977 = vld [vmem:[#allocation12 + $0x2f8] sm:$0xf]
        %v2978 = vld [vmem:[#allocation12 + $0x2fc] sm:$0xf]
        %v2979 = vld [vmem:[#allocation12 + $0x300] sm:$0xf]
        %v2980 = vld [vmem:[#allocation12 + $0x304] sm:$0xf]
        %v2981 = vld [vmem:[#allocation12 + $0x308] sm:$0xf]
        %v2982 = vld [vmem:[#allocation12 + $0x30c] sm:$0xf]
        %v2983 = vld [vmem:[#allocation12 + $0x310] sm:$0xf]
        %v2984 = vld [vmem:[#allocation12 + $0x314] sm:$0xf]
        %v2985 = vld [vmem:[#allocation12 + $0x318] sm:$0xf]
        %v2986 = vld [vmem:[#allocation12 + $0x31c] sm:$0xf]
        %v2987 = vld [vmem:[#allocation12 + $0x320] sm:$0xf]
        %v2988 = vld [vmem:[#allocation12 + $0x324] sm:$0xf]
        %v2989 = vld [vmem:[#allocation12 + $0x328] sm:$0xf]
        %v2990 = vld [vmem:[#allocation12 + $0x32c] sm:$0xf]
        %v2991 = vld [vmem:[#allocation12 + $0x330] sm:$0xf]
        %v2992 = vld [vmem:[#allocation12 + $0x334] sm:$0xf]
        %v2993 = vld [vmem:[#allocation12 + $0x338] sm:$0xf]
        %v2994 = vld [vmem:[#allocation12 + $0x33c] sm:$0xf]
        %v2995 = vld [vmem:[#allocation12 + $0x340] sm:$0xf]
        %v2996 = vld [vmem:[#allocation12 + $0x344] sm:$0xf]
        %v2997 = vld [vmem:[#allocation12 + $0x348] sm:$0xf]
        %v2998 = vld [vmem:[#allocation12 + $0x34c] sm:$0xf]
        %v2999 = vld [vmem:[#allocation12 + $0x350] sm:$0xf]
        %v3000 = vld [vmem:[#allocation12 + $0x354] sm:$0xf]
        %v3001 = vld [vmem:[#allocation12 + $0x358] sm:$0xf]
        %v3002 = vld [vmem:[#allocation12 + $0x35c] sm:$0xf]
        %v3003 = vld [vmem:[#allocation12 + $0x360] sm:$0xf]
        %v3004 = vld [vmem:[#allocation12 + $0x364] sm:$0xf]
        %v3005 = vld [vmem:[#allocation12 + $0x368] sm:$0xf]
        %v3006 = vld [vmem:[#allocation12 + $0x36c] sm:$0xf]
        %v3007 = vld [vmem:[#allocation12 + $0x370] sm:$0xf]
        %v3008 = vld [vmem:[#allocation12 + $0x374] sm:$0xf]
        %v3009 = vld [vmem:[#allocation12 + $0x378] sm:$0xf]
        %v3010 = vld [vmem:[#allocation12 + $0x37c] sm:$0xf]
        %v3011 = vld [vmem:[#allocation12 + $0x380] sm:$0xf]
        %v3012 = vld [vmem:[#allocation12 + $0x384] sm:$0xf]
        %v3013 = vld [vmem:[#allocation12 + $0x388] sm:$0xf]
        %v3014 = vld [vmem:[#allocation12 + $0x38c] sm:$0xf]
        %v3015 = vld [vmem:[#allocation12 + $0x390] sm:$0xf]
        %v3016 = vld [vmem:[#allocation12 + $0x394] sm:$0xf]
        %v3017 = vld [vmem:[#allocation12 + $0x398] sm:$0xf]
        %v3018 = vld [vmem:[#allocation12 + $0x39c] sm:$0xf]
        %v3019 = vld [vmem:[#allocation12 + $0x3a0] sm:$0xf]
        %v3020 = vld [vmem:[#allocation12 + $0x3a4] sm:$0xf]
        %v3021 = vld [vmem:[#allocation12 + $0x3a8] sm:$0xf]
        %v3022 = vld [vmem:[#allocation12 + $0x3ac] sm:$0xf]
        %v3023 = vld [vmem:[#allocation12 + $0x3b0] sm:$0xf]
        %v3024 = vld [vmem:[#allocation12 + $0x3b4] sm:$0xf]
        %v3025 = vld [vmem:[#allocation12 + $0x3b8] sm:$0xf]
        %v3026 = vld [vmem:[#allocation12 + $0x3bc] sm:$0xf]
        %v3027 = vld [vmem:[#allocation12 + $0x3c0] sm:$0xf]
        %v3028 = vld [vmem:[#allocation12 + $0x3c4] sm:$0xf]
        %v3029 = vld [vmem:[#allocation12 + $0x3c8] sm:$0xf]
        %v3030 = vld [vmem:[#allocation12 + $0x3cc] sm:$0xf]
        %v3031 = vld [vmem:[#allocation12 + $0x3d0] sm:$0xf]
        %v3032 = vld [vmem:[#allocation12 + $0x3d4] sm:$0xf]
        %v3033 = vld [vmem:[#allocation12 + $0x3d8] sm:$0xf]
        %v3034 = vld [vmem:[#allocation12 + $0x3dc] sm:$0xf]
        %v3035 = vld [vmem:[#allocation12 + $0x3e0] sm:$0xf]
        %v3036 = vld [vmem:[#allocation12 + $0x3e4] sm:$0xf]
        %v3037 = vld [vmem:[#allocation12 + $0x3e8] sm:$0xf]
        %v3038 = vld [vmem:[#allocation12 + $0x3ec] sm:$0xf]
        %v3039 = vld [vmem:[#allocation12 + $0x3f0] sm:$0xf]
        %v3040 = vld [vmem:[#allocation12 + $0x3f4] sm:$0xf]
        %v3041 = vld [vmem:[#allocation12 + $0x3f8] sm:$0xf]
        %v3042 = vld [vmem:[#allocation12 + $0x3fc] sm:$0xf]
        %v3043 = vld [vmem:[%s8] sm:$0x1]
        %v3300 = vunpack.c.l.b16 %v2787
        %v3301 = vunpack.c.l.b16 %v2788
        %v3302 = vunpack.c.l.b16 %v2789
        %v3303 = vunpack.c.l.b16 %v2790
        %v3304 = vunpack.c.l.b16 %v2791
        %v3305 = vunpack.c.l.b16 %v2792
        %v3306 = vunpack.c.l.b16 %v2793
        %v3307 = vunpack.c.l.b16 %v2794
        %v3308 = vunpack.c.l.b16 %v2795
        %v3309 = vunpack.c.l.b16 %v2796
        %v3310 = vunpack.c.l.b16 %v2797
        %v3311 = vunpack.c.l.b16 %v2798
        %v3312 = vunpack.c.l.b16 %v2799
        %v3313 = vunpack.c.l.b16 %v2800
        %v3314 = vunpack.c.l.b16 %v2801
        %v3315 = vunpack.c.l.b16 %v2802
        %v3316 = vunpack.c.l.b16 %v2803
        %v3317 = vunpack.c.l.b16 %v2804
        %v3318 = vunpack.c.l.b16 %v2805
        %v3319 = vunpack.c.l.b16 %v2806
        %v3320 = vunpack.c.l.b16 %v2807
        %v3321 = vunpack.c.l.b16 %v2808
        %v3322 = vunpack.c.l.b16 %v2809
        %v3323 = vunpack.c.l.b16 %v2810
        %v3324 = vunpack.c.l.b16 %v2811
        %v3325 = vunpack.c.l.b16 %v2812
        %v3326 = vunpack.c.l.b16 %v2813
        %v3327 = vunpack.c.l.b16 %v2814
        %v3328 = vunpack.c.l.b16 %v2815
        %v3329 = vunpack.c.l.b16 %v2816
        %v3330 = vunpack.c.l.b16 %v2817
        %v3331 = vunpack.c.l.b16 %v2818
        %v3332 = vunpack.c.l.b16 %v2819
        %v3333 = vunpack.c.l.b16 %v2820
        %v3334 = vunpack.c.l.b16 %v2821
        %v3335 = vunpack.c.l.b16 %v2822
        %v3336 = vunpack.c.l.b16 %v2823
        %v3337 = vunpack.c.l.b16 %v2824
        %v3338 = vunpack.c.l.b16 %v2825
        %v3339 = vunpack.c.l.b16 %v2826
        %v3340 = vunpack.c.l.b16 %v2827
        %v3341 = vunpack.c.l.b16 %v2828
        %v3342 = vunpack.c.l.b16 %v2829
        %v3343 = vunpack.c.l.b16 %v2830
        %v3344 = vunpack.c.l.b16 %v2831
        %v3345 = vunpack.c.l.b16 %v2832
        %v3346 = vunpack.c.l.b16 %v2833
        %v3347 = vunpack.c.l.b16 %v2834
        %v3348 = vunpack.c.l.b16 %v2835
        %v3349 = vunpack.c.l.b16 %v2836
        %v3350 = vunpack.c.l.b16 %v2837
        %v3351 = vunpack.c.l.b16 %v2838
        %v3352 = vunpack.c.l.b16 %v2839
        %v3353 = vunpack.c.l.b16 %v2840
        %v3354 = vunpack.c.l.b16 %v2841
        %v3355 = vunpack.c.l.b16 %v2842
        %v3356 = vunpack.c.l.b16 %v2843
        %v3357 = vunpack.c.l.b16 %v2844
        %v3358 = vunpack.c.l.b16 %v2845
        %v3359 = vunpack.c.l.b16 %v2846
        %v3360 = vunpack.c.l.b16 %v2847
        %v3361 = vunpack.c.l.b16 %v2848
        %v3362 = vunpack.c.l.b16 %v2849
        %v3363 = vunpack.c.l.b16 %v2850
        %v3364 = vunpack.c.l.b16 %v2851
        %v3365 = vunpack.c.l.b16 %v2852
        %v3366 = vunpack.c.l.b16 %v2853
        %v3367 = vunpack.c.l.b16 %v2854
        %v3368 = vunpack.c.l.b16 %v2855
        %v3369 = vunpack.c.l.b16 %v2856
        %v3370 = vunpack.c.l.b16 %v2857
        %v3371 = vunpack.c.l.b16 %v2858
        %v3372 = vunpack.c.l.b16 %v2859
        %v3373 = vunpack.c.l.b16 %v2860
        %v3374 = vunpack.c.l.b16 %v2861
        %v3375 = vunpack.c.l.b16 %v2862
        %v3376 = vunpack.c.l.b16 %v2863
        %v3377 = vunpack.c.l.b16 %v2864
        %v3378 = vunpack.c.l.b16 %v2865
        %v3379 = vunpack.c.l.b16 %v2866
        %v3380 = vunpack.c.l.b16 %v2867
        %v3381 = vunpack.c.l.b16 %v2868
        %v3382 = vunpack.c.l.b16 %v2869
        %v3383 = vunpack.c.l.b16 %v2870
        %v3384 = vunpack.c.l.b16 %v2871
        %v3385 = vunpack.c.l.b16 %v2872
        %v3386 = vunpack.c.l.b16 %v2873
        %v3387 = vunpack.c.l.b16 %v2874
        %v3388 = vunpack.c.l.b16 %v2875
        %v3389 = vunpack.c.l.b16 %v2876
        %v3390 = vunpack.c.l.b16 %v2877
        %v3391 = vunpack.c.l.b16 %v2878
        %v3392 = vunpack.c.l.b16 %v2879
        %v3393 = vunpack.c.l.b16 %v2880
        %v3394 = vunpack.c.l.b16 %v2881
        %v3395 = vunpack.c.l.b16 %v2882
        %v3396 = vunpack.c.l.b16 %v2883
        %v3397 = vunpack.c.l.b16 %v2884
        %v3398 = vunpack.c.l.b16 %v2885
        %v3399 = vunpack.c.l.b16 %v2886
        %v3400 = vunpack.c.l.b16 %v2887
        %v3401 = vunpack.c.l.b16 %v2888
        %v3402 = vunpack.c.l.b16 %v2889
        %v3403 = vunpack.c.l.b16 %v2890
        %v3404 = vunpack.c.l.b16 %v2891
        %v3405 = vunpack.c.l.b16 %v2892
        %v3406 = vunpack.c.l.b16 %v2893
        %v3407 = vunpack.c.l.b16 %v2894
        %v3408 = vunpack.c.l.b16 %v2895
        %v3409 = vunpack.c.l.b16 %v2896
        %v3410 = vunpack.c.l.b16 %v2897
        %v3411 = vunpack.c.l.b16 %v2898
        %v3412 = vunpack.c.l.b16 %v2899
        %v3413 = vunpack.c.l.b16 %v2900
        %v3414 = vunpack.c.l.b16 %v2901
        %v3415 = vunpack.c.l.b16 %v2902
        %v3416 = vunpack.c.l.b16 %v2903
        %v3417 = vunpack.c.l.b16 %v2904
        %v3418 = vunpack.c.l.b16 %v2905
        %v3419 = vunpack.c.l.b16 %v2906
        %v3420 = vunpack.c.l.b16 %v2907
        %v3421 = vunpack.c.l.b16 %v2908
        %v3422 = vunpack.c.l.b16 %v2909
        %v3423 = vunpack.c.l.b16 %v2910
        %v3424 = vunpack.c.l.b16 %v2911
        %v3425 = vunpack.c.l.b16 %v2912
        %v3426 = vunpack.c.l.b16 %v2913
        %v3427 = vunpack.c.l.b16 %v2914
        %v3428 = vunpack.c.l.b16 %v2915
        %v3429 = vunpack.c.l.b16 %v2916
        %v3430 = vunpack.c.l.b16 %v2917
        %v3431 = vunpack.c.l.b16 %v2918
        %v3432 = vunpack.c.l.b16 %v2919
        %v3433 = vunpack.c.l.b16 %v2920
        %v3434 = vunpack.c.l.b16 %v2921
        %v3435 = vunpack.c.l.b16 %v2922
        %v3436 = vunpack.c.l.b16 %v2923
        %v3437 = vunpack.c.l.b16 %v2924
        %v3438 = vunpack.c.l.b16 %v2925
        %v3439 = vunpack.c.l.b16 %v2926
        %v3440 = vunpack.c.l.b16 %v2927
        %v3441 = vunpack.c.l.b16 %v2928
        %v3442 = vunpack.c.l.b16 %v2929
        %v3443 = vunpack.c.l.b16 %v2930
        %v3444 = vunpack.c.l.b16 %v2931
        %v3445 = vunpack.c.l.b16 %v2932
        %v3446 = vunpack.c.l.b16 %v2933
        %v3447 = vunpack.c.l.b16 %v2934
        %v3448 = vunpack.c.l.b16 %v2935
        %v3449 = vunpack.c.l.b16 %v2936
        %v3450 = vunpack.c.l.b16 %v2937
        %v3451 = vunpack.c.l.b16 %v2938
        %v3452 = vunpack.c.l.b16 %v2939
        %v3453 = vunpack.c.l.b16 %v2940
        %v3454 = vunpack.c.l.b16 %v2941
        %v3455 = vunpack.c.l.b16 %v2942
        %v3456 = vunpack.c.l.b16 %v2943
        %v3457 = vunpack.c.l.b16 %v2944
        %v3458 = vunpack.c.l.b16 %v2945
        %v3459 = vunpack.c.l.b16 %v2946
        %v3460 = vunpack.c.l.b16 %v2947
        %v3461 = vunpack.c.l.b16 %v2948
        %v3462 = vunpack.c.l.b16 %v2949
        %v3463 = vunpack.c.l.b16 %v2950
        %v3464 = vunpack.c.l.b16 %v2951
        %v3465 = vunpack.c.l.b16 %v2952
        %v3466 = vunpack.c.l.b16 %v2953
        %v3467 = vunpack.c.l.b16 %v2954
        %v3468 = vunpack.c.l.b16 %v2955
        %v3469 = vunpack.c.l.b16 %v2956
        %v3470 = vunpack.c.l.b16 %v2957
        %v3471 = vunpack.c.l.b16 %v2958
        %v3472 = vunpack.c.l.b16 %v2959
        %v3473 = vunpack.c.l.b16 %v2960
        %v3474 = vunpack.c.l.b16 %v2961
        %v3475 = vunpack.c.l.b16 %v2962
        %v3476 = vunpack.c.l.b16 %v2963
        %v3477 = vunpack.c.l.b16 %v2964
        %v3478 = vunpack.c.l.b16 %v2965
        %v3479 = vunpack.c.l.b16 %v2966
        %v3480 = vunpack.c.l.b16 %v2967
        %v3481 = vunpack.c.l.b16 %v2968
        %v3482 = vunpack.c.l.b16 %v2969
        %v3483 = vunpack.c.l.b16 %v2970
        %v3484 = vunpack.c.l.b16 %v2971
        %v3485 = vunpack.c.l.b16 %v2972
        %v3486 = vunpack.c.l.b16 %v2973
        %v3487 = vunpack.c.l.b16 %v2974
        %v3488 = vunpack.c.l.b16 %v2975
        %v3489 = vunpack.c.l.b16 %v2976
        %v3490 = vunpack.c.l.b16 %v2977
        %v3491 = vunpack.c.l.b16 %v2978
        %v3492 = vunpack.c.l.b16 %v2979
        %v3493 = vunpack.c.l.b16 %v2980
        %v3494 = vunpack.c.l.b16 %v2981
        %v3495 = vunpack.c.l.b16 %v2982
        %v3496 = vunpack.c.l.b16 %v2983
        %v3497 = vunpack.c.l.b16 %v2984
        %v3498 = vunpack.c.l.b16 %v2985
        %v3499 = vunpack.c.l.b16 %v2986
        %v3500 = vunpack.c.l.b16 %v2987
        %v3501 = vunpack.c.l.b16 %v2988
        %v3502 = vunpack.c.l.b16 %v2989
        %v3503 = vunpack.c.l.b16 %v2990
        %v3504 = vunpack.c.l.b16 %v2991
        %v3505 = vunpack.c.l.b16 %v2992
        %v3506 = vunpack.c.l.b16 %v2993
        %v3507 = vunpack.c.l.b16 %v2994
        %v3508 = vunpack.c.l.b16 %v2995
        %v3509 = vunpack.c.l.b16 %v2996
        %v3510 = vunpack.c.l.b16 %v2997
        %v3511 = vunpack.c.l.b16 %v2998
        %v3512 = vunpack.c.l.b16 %v2999
        %v3513 = vunpack.c.l.b16 %v3000
        %v3514 = vunpack.c.l.b16 %v3001
        %v3515 = vunpack.c.l.b16 %v3002
        %v3516 = vunpack.c.l.b16 %v3003
        %v3517 = vunpack.c.l.b16 %v3004
        %v3518 = vunpack.c.l.b16 %v3005
        %v3519 = vunpack.c.l.b16 %v3006
        %v3520 = vunpack.c.l.b16 %v3007
        %v3521 = vunpack.c.l.b16 %v3008
        %v3522 = vunpack.c.l.b16 %v3009
        %v3523 = vunpack.c.l.b16 %v3010
        %v3524 = vunpack.c.l.b16 %v3011
        %v3525 = vunpack.c.l.b16 %v3012
        %v3526 = vunpack.c.l.b16 %v3013
        %v3527 = vunpack.c.l.b16 %v3014
        %v3528 = vunpack.c.l.b16 %v3015
        %v3529 = vunpack.c.l.b16 %v3016
        %v3530 = vunpack.c.l.b16 %v3017
        %v3531 = vunpack.c.l.b16 %v3018
        %v3532 = vunpack.c.l.b16 %v3019
        %v3533 = vunpack.c.l.b16 %v3020
        %v3534 = vunpack.c.l.b16 %v3021
        %v3535 = vunpack.c.l.b16 %v3022
        %v3536 = vunpack.c.l.b16 %v3023
        %v3537 = vunpack.c.l.b16 %v3024
        %v3538 = vunpack.c.l.b16 %v3025
        %v3539 = vunpack.c.l.b16 %v3026
        %v3540 = vunpack.c.l.b16 %v3027
        %v3541 = vunpack.c.l.b16 %v3028
        %v3542 = vunpack.c.l.b16 %v3029
        %v3543 = vunpack.c.l.b16 %v3030
        %v3544 = vunpack.c.l.b16 %v3031
        %v3545 = vunpack.c.l.b16 %v3032
        %v3546 = vunpack.c.l.b16 %v3033
        %v3547 = vunpack.c.l.b16 %v3034
        %v3548 = vunpack.c.l.b16 %v3035
        %v3549 = vunpack.c.l.b16 %v3036
        %v3550 = vunpack.c.l.b16 %v3037
        %v3551 = vunpack.c.l.b16 %v3038
        %v3552 = vunpack.c.l.b16 %v3039
        %v3553 = vunpack.c.l.b16 %v3040
        %v3554 = vunpack.c.l.b16 %v3041
        %v3555 = vunpack.c.l.b16 %v3042
        %v3556 = vpack.c.b16 %v3301, %v3300
        %v3557 = vpack.c.b16 %v3303, %v3302
        %v3558 = vpack.c.b16 %v3305, %v3304
        %v3559 = vpack.c.b16 %v3307, %v3306
        %v3560 = vpack.c.b16 %v3309, %v3308
        %v3561 = vpack.c.b16 %v3311, %v3310
        %v3562 = vpack.c.b16 %v3313, %v3312
        %v3563 = vpack.c.b16 %v3315, %v3314
        %v3564 = vpack.c.b16 %v3317, %v3316
        %v3565 = vpack.c.b16 %v3319, %v3318
        %v3566 = vpack.c.b16 %v3321, %v3320
        %v3567 = vpack.c.b16 %v3323, %v3322
        %v3568 = vpack.c.b16 %v3325, %v3324
        %v3569 = vpack.c.b16 %v3327, %v3326
        %v3570 = vpack.c.b16 %v3329, %v3328
        %v3571 = vpack.c.b16 %v3331, %v3330
        %v3572 = vpack.c.b16 %v3333, %v3332
        %v3573 = vpack.c.b16 %v3335, %v3334
        %v3574 = vpack.c.b16 %v3337, %v3336
        %v3575 = vpack.c.b16 %v3339, %v3338
        %v3576 = vpack.c.b16 %v3341, %v3340
        %v3577 = vpack.c.b16 %v3343, %v3342
        %v3578 = vpack.c.b16 %v3345, %v3344
        %v3579 = vpack.c.b16 %v3347, %v3346
        %v3580 = vpack.c.b16 %v3349, %v3348
        %v3581 = vpack.c.b16 %v3351, %v3350
        %v3582 = vpack.c.b16 %v3353, %v3352
        %v3583 = vpack.c.b16 %v3355, %v3354
        %v3584 = vpack.c.b16 %v3357, %v3356
        %v3585 = vpack.c.b16 %v3359, %v3358
        %v3586 = vpack.c.b16 %v3361, %v3360
        %v3587 = vpack.c.b16 %v3363, %v3362
        %v3588 = vpack.c.b16 %v3365, %v3364
        %v3589 = vpack.c.b16 %v3367, %v3366
        %v3590 = vpack.c.b16 %v3369, %v3368
        %v3591 = vpack.c.b16 %v3371, %v3370
        %v3592 = vpack.c.b16 %v3373, %v3372
        %v3593 = vpack.c.b16 %v3375, %v3374
        %v3594 = vpack.c.b16 %v3377, %v3376
        %v3595 = vpack.c.b16 %v3379, %v3378
        %v3596 = vpack.c.b16 %v3381, %v3380
        %v3597 = vpack.c.b16 %v3383, %v3382
        %v3598 = vpack.c.b16 %v3385, %v3384
        %v3599 = vpack.c.b16 %v3387, %v3386
        %v3600 = vpack.c.b16 %v3389, %v3388
        %v3601 = vpack.c.b16 %v3391, %v3390
        %v3602 = vpack.c.b16 %v3393, %v3392
        %v3603 = vpack.c.b16 %v3395, %v3394
        %v3604 = vpack.c.b16 %v3397, %v3396
        %v3605 = vpack.c.b16 %v3399, %v3398
        %v3606 = vpack.c.b16 %v3401, %v3400
        %v3607 = vpack.c.b16 %v3403, %v3402
        %v3608 = vpack.c.b16 %v3405, %v3404
        %v3609 = vpack.c.b16 %v3407, %v3406
        %v3610 = vpack.c.b16 %v3409, %v3408
        %v3611 = vpack.c.b16 %v3411, %v3410
        %v3612 = vpack.c.b16 %v3413, %v3412
        %v3613 = vpack.c.b16 %v3415, %v3414
        %v3614 = vpack.c.b16 %v3417, %v3416
        %v3615 = vpack.c.b16 %v3419, %v3418
        %v3616 = vpack.c.b16 %v3421, %v3420
        %v3617 = vpack.c.b16 %v3423, %v3422
        %v3618 = vpack.c.b16 %v3425, %v3424
        %v3619 = vpack.c.b16 %v3427, %v3426
        %v3620 = vpack.c.b16 %v3429, %v3428
        %v3621 = vpack.c.b16 %v3431, %v3430
        %v3622 = vpack.c.b16 %v3433, %v3432
        %v3623 = vpack.c.b16 %v3435, %v3434
        %v3624 = vpack.c.b16 %v3437, %v3436
        %v3625 = vpack.c.b16 %v3439, %v3438
        %v3626 = vpack.c.b16 %v3441, %v3440
        %v3627 = vpack.c.b16 %v3443, %v3442
        %v3628 = vpack.c.b16 %v3445, %v3444
        %v3629 = vpack.c.b16 %v3447, %v3446
        %v3630 = vpack.c.b16 %v3449, %v3448
        %v3631 = vpack.c.b16 %v3451, %v3450
        %v3632 = vpack.c.b16 %v3453, %v3452
        %v3633 = vpack.c.b16 %v3455, %v3454
        %v3634 = vpack.c.b16 %v3457, %v3456
        %v3635 = vpack.c.b16 %v3459, %v3458
        %v3636 = vpack.c.b16 %v3461, %v3460
        %v3637 = vpack.c.b16 %v3463, %v3462
        %v3638 = vpack.c.b16 %v3465, %v3464
        %v3639 = vpack.c.b16 %v3467, %v3466
        %v3640 = vpack.c.b16 %v3469, %v3468
        %v3641 = vpack.c.b16 %v3471, %v3470
        %v3642 = vpack.c.b16 %v3473, %v3472
        %v3643 = vpack.c.b16 %v3475, %v3474
        %v3644 = vpack.c.b16 %v3477, %v3476
        %v3645 = vpack.c.b16 %v3479, %v3478
        %v3646 = vpack.c.b16 %v3481, %v3480
        %v3647 = vpack.c.b16 %v3483, %v3482
        %v3648 = vpack.c.b16 %v3485, %v3484
        %v3649 = vpack.c.b16 %v3487, %v3486
        %v3650 = vpack.c.b16 %v3489, %v3488
        %v3651 = vpack.c.b16 %v3491, %v3490
        %v3652 = vpack.c.b16 %v3493, %v3492
        %v3653 = vpack.c.b16 %v3495, %v3494
        %v3654 = vpack.c.b16 %v3497, %v3496
        %v3655 = vpack.c.b16 %v3499, %v3498
        %v3656 = vpack.c.b16 %v3501, %v3500
        %v3657 = vpack.c.b16 %v3503, %v3502
        %v3658 = vpack.c.b16 %v3505, %v3504
        %v3659 = vpack.c.b16 %v3507, %v3506
        %v3660 = vpack.c.b16 %v3509, %v3508
        %v3661 = vpack.c.b16 %v3511, %v3510
        %v3662 = vpack.c.b16 %v3513, %v3512
        %v3663 = vpack.c.b16 %v3515, %v3514
        %v3664 = vpack.c.b16 %v3517, %v3516
        %v3665 = vpack.c.b16 %v3519, %v3518
        %v3666 = vpack.c.b16 %v3521, %v3520
        %v3667 = vpack.c.b16 %v3523, %v3522
        %v3668 = vpack.c.b16 %v3525, %v3524
        %v3669 = vpack.c.b16 %v3527, %v3526
        %v3670 = vpack.c.b16 %v3529, %v3528
        %v3671 = vpack.c.b16 %v3531, %v3530
        %v3672 = vpack.c.b16 %v3533, %v3532
        %v3673 = vpack.c.b16 %v3535, %v3534
        %v3674 = vpack.c.b16 %v3537, %v3536
        %v3675 = vpack.c.b16 %v3539, %v3538
        %v3676 = vpack.c.b16 %v3541, %v3540
        %v3677 = vpack.c.b16 %v3543, %v3542
        %v3678 = vpack.c.b16 %v3545, %v3544
        %v3679 = vpack.c.b16 %v3547, %v3546
        %v3680 = vpack.c.b16 %v3549, %v3548
        %v3681 = vpack.c.b16 %v3551, %v3550
        %v3682 = vpack.c.b16 %v3553, %v3552
        %v3683 = vpack.c.b16 %v3555, %v3554
        %3812 = vmatprep.subr.bf16.mxu0 0
        %3813 = vmatpush1.bf16.msra.mxu0 %v3556
        %3814 = vmatprep.subr.bf16.mxu0 0
        %3815 = vmatpush1.bf16.msra.mxu0 %v3557
        %3816 = vmatprep.subr.bf16.mxu0 0
        %3817 = vmatpush1.bf16.msra.mxu0 %v3558
        %3818 = vmatprep.subr.bf16.mxu0 0
        %3819 = vmatpush1.bf16.msra.mxu0 %v3559
        %3820 = vmatprep.subr.bf16.mxu0 0
        %3821 = vmatpush1.bf16.msra.mxu0 %v3560
        %3822 = vmatprep.subr.bf16.mxu0 0
        %3823 = vmatpush1.bf16.msra.mxu0 %v3561
        %3824 = vmatprep.subr.bf16.mxu0 0
        %3825 = vmatpush1.bf16.msra.mxu0 %v3562
        %3826 = vmatprep.subr.bf16.mxu0 0
        %3827 = vmatpush1.bf16.msra.mxu0 %v3563
        %3828 = vmatprep.subr.bf16.mxu0 0
        %3829 = vmatpush1.bf16.msra.mxu0 %v3564
        %3830 = vmatprep.subr.bf16.mxu0 0
        %3831 = vmatpush1.bf16.msra.mxu0 %v3565
        %3832 = vmatprep.subr.bf16.mxu0 0
        %3833 = vmatpush1.bf16.msra.mxu0 %v3566
        %3834 = vmatprep.subr.bf16.mxu0 0
        %3835 = vmatpush1.bf16.msra.mxu0 %v3567
        %3836 = vmatprep.subr.bf16.mxu0 0
        %3837 = vmatpush1.bf16.msra.mxu0 %v3568
        %3838 = vmatprep.subr.bf16.mxu0 0
        %3839 = vmatpush1.bf16.msra.mxu0 %v3569
        %3840 = vmatprep.subr.bf16.mxu0 0
        %3841 = vmatpush1.bf16.msra.mxu0 %v3570
        %3842 = vmatprep.subr.bf16.mxu0 0
        %3843 = vmatpush1.bf16.msra.mxu0 %v3571
        %3844 = vmatprep.mubr.bf16.mxu0 %v2772
        %3845 = vmatmul.mubr.bf16.gmra.mrb[0].mxu0 %v2771
        %v3846 = vpop.f32.mrb[0].mxu0
        %v3847 = vadd.f32 %v3043, %v3846
        %v3848 = vpop.f32.mrb[0].mxu0
        %v3849 = vpop.f32.mrb[0].mxu0
        %v3850 = vpop.f32.mrb[0].mxu0
        %3851 = vdwg.mxu0
        %3852 = vmatprep.subr.bf16.mxu0 0
        %3853 = vmatpush1.bf16.msra.mxu0 %v3572
        %3854 = vmatprep.subr.bf16.mxu0 0
        %3855 = vmatpush1.bf16.msra.mxu0 %v3573
        %3856 = vmatprep.subr.bf16.mxu0 0
        %3857 = vmatpush1.bf16.msra.mxu0 %v3574
        %3858 = vmatprep.subr.bf16.mxu0 0
        %3859 = vmatpush1.bf16.msra.mxu0 %v3575
        %3860 = vmatprep.subr.bf16.mxu0 0
        %3861 = vmatpush1.bf16.msra.mxu0 %v3576
        %3862 = vmatprep.subr.bf16.mxu0 0
        %3863 = vmatpush1.bf16.msra.mxu0 %v3577
        %3864 = vmatprep.subr.bf16.mxu0 0
        %3865 = vmatpush1.bf16.msra.mxu0 %v3578
        %3866 = vmatprep.subr.bf16.mxu0 0
        %3867 = vmatpush1.bf16.msra.mxu0 %v3579
        %3868 = vmatprep.subr.bf16.mxu0 0
        %3869 = vmatpush1.bf16.msra.mxu0 %v3580
        %3870 = vmatprep.subr.bf16.mxu0 0
        %3871 = vmatpush1.bf16.msra.mxu0 %v3581
        %3872 = vmatprep.subr.bf16.mxu0 0
        %3873 = vmatpush1.bf16.msra.mxu0 %v3582
        %3874 = vmatprep.subr.bf16.mxu0 0
        %3875 = vmatpush1.bf16.msra.mxu0 %v3583
        %3876 = vmatprep.subr.bf16.mxu0 0
        %3877 = vmatpush1.bf16.msra.mxu0 %v3584
        %3878 = vmatprep.subr.bf16.mxu0 0
        %3879 = vmatpush1.bf16.msra.mxu0 %v3585
        %3880 = vmatprep.subr.bf16.mxu0 0
        %3881 = vmatpush1.bf16.msra.mxu0 %v3586
        %3882 = vmatprep.subr.bf16.mxu0 0
        %3883 = vmatpush1.bf16.msra.mxu0 %v3587
        %3884 = vmatprep.mubr.bf16.mxu0 %v2774
        %3885 = vmatmul.mubr.bf16.gmra.mrb[0].mxu0 %v2773
        %v3886 = vpop.f32.mrb[0].mxu0
        %v3887 = vadd.f32 %v3847, %v3886
        %v3888 = vpop.f32.mrb[0].mxu0
        %v3889 = vpop.f32.mrb[0].mxu0
        %v3890 = vpop.f32.mrb[0].mxu0
        %3891 = vdwg.mxu0
        %3892 = vmatprep.subr.bf16.mxu0 0
        %3893 = vmatpush1.bf16.msra.mxu0 %v3588
        %3894 = vmatprep.subr.bf16.mxu0 0
        %3895 = vmatpush1.bf16.msra.mxu0 %v3589
        %3896 = vmatprep.subr.bf16.mxu0 0
        %3897 = vmatpush1.bf16.msra.mxu0 %v3590
        %3898 = vmatprep.subr.bf16.mxu0 0
        %3899 = vmatpush1.bf16.msra.mxu0 %v3591
        %3900 = vmatprep.subr.bf16.mxu0 0
        %3901 = vmatpush1.bf16.msra.mxu0 %v3592
        %3902 = vmatprep.subr.bf16.mxu0 0
        %3903 = vmatpush1.bf16.msra.mxu0 %v3593
        %3904 = vmatprep.subr.bf16.mxu0 0
        %3905 = vmatpush1.bf16.msra.mxu0 %v3594
        %3906 = vmatprep.subr.bf16.mxu0 0
        %3907 = vmatpush1.bf16.msra.mxu0 %v3595
        %3908 = vmatprep.subr.bf16.mxu0 0
        %3909 = vmatpush1.bf16.msra.mxu0 %v3596
        %3910 = vmatprep.subr.bf16.mxu0 0
        %3911 = vmatpush1.bf16.msra.mxu0 %v3597
        %3912 = vmatprep.subr.bf16.mxu0 0
        %3913 = vmatpush1.bf16.msra.mxu0 %v3598
        %3914 = vmatprep.subr.bf16.mxu0 0
        %3915 = vmatpush1.bf16.msra.mxu0 %v3599
        %3916 = vmatprep.subr.bf16.mxu0 0
        %3917 = vmatpush1.bf16.msra.mxu0 %v3600
        %3918 = vmatprep.subr.bf16.mxu0 0
        %3919 = vmatpush1.bf16.msra.mxu0 %v3601
        %3920 = vmatprep.subr.bf16.mxu0 0
        %3921 = vmatpush1.bf16.msra.mxu0 %v3602
        %3922 = vmatprep.subr.bf16.mxu0 0
        %3923 = vmatpush1.bf16.msra.mxu0 %v3603
        %3924 = vmatprep.mubr.bf16.mxu0 %v2776
        %3925 = vmatmul.mubr.bf16.gmra.mrb[0].mxu0 %v2775
        %v3926 = vpop.f32.mrb[0].mxu0
        %v3927 = vadd.f32 %v3887, %v3926
        %v3928 = vpop.f32.mrb[0].mxu0
        %v3929 = vpop.f32.mrb[0].mxu0
        %v3930 = vpop.f32.mrb[0].mxu0
        %3931 = vdwg.mxu0
        %3932 = vmatprep.subr.bf16.mxu0 0
        %3933 = vmatpush1.bf16.msra.mxu0 %v3604
        %3934 = vmatprep.subr.bf16.mxu0 0
        %3935 = vmatpush1.bf16.msra.mxu0 %v3605
        %3936 = vmatprep.subr.bf16.mxu0 0
        %3937 = vmatpush1.bf16.msra.mxu0 %v3606
        %3938 = vmatprep.subr.bf16.mxu0 0
        %3939 = vmatpush1.bf16.msra.mxu0 %v3607
        %3940 = vmatprep.subr.bf16.mxu0 0
        %3941 = vmatpush1.bf16.msra.mxu0 %v3608
        %3942 = vmatprep.subr.bf16.mxu0 0
        %3943 = vmatpush1.bf16.msra.mxu0 %v3609
        %3944 = vmatprep.subr.bf16.mxu0 0
        %3945 = vmatpush1.bf16.msra.mxu0 %v3610
        %3946 = vmatprep.subr.bf16.mxu0 0
        %3947 = vmatpush1.bf16.msra.mxu0 %v3611
        %3948 = vmatprep.subr.bf16.mxu0 0
        %3949 = vmatpush1.bf16.msra.mxu0 %v3612
        %3950 = vmatprep.subr.bf16.mxu0 0
        %3951 = vmatpush1.bf16.msra.mxu0 %v3613
        %3952 = vmatprep.subr.bf16.mxu0 0
        %3953 = vmatpush1.bf16.msra.mxu0 %v3614
        %3954 = vmatprep.subr.bf16.mxu0 0
        %3955 = vmatpush1.bf16.msra.mxu0 %v3615
        %3956 = vmatprep.subr.bf16.mxu0 0
        %3957 = vmatpush1.bf16.msra.mxu0 %v3616
        %3958 = vmatprep.subr.bf16.mxu0 0
        %3959 = vmatpush1.bf16.msra.mxu0 %v3617
        %3960 = vmatprep.subr.bf16.mxu0 0
        %3961 = vmatpush1.bf16.msra.mxu0 %v3618
        %3962 = vmatprep.subr.bf16.mxu0 0
        %3963 = vmatpush1.bf16.msra.mxu0 %v3619
        %3964 = vmatprep.mubr.bf16.mxu0 %v2778
        %3965 = vmatmul.mubr.bf16.gmra.mrb[0].mxu0 %v2777
        %v3966 = vpop.f32.mrb[0].mxu0
        %v3967 = vadd.f32 %v3927, %v3966
        %v3968 = vpop.f32.mrb[0].mxu0
        %v3969 = vpop.f32.mrb[0].mxu0
        %v3970 = vpop.f32.mrb[0].mxu0
        %3971 = vdwg.mxu0
        %3972 = vmatprep.subr.bf16.mxu0 0
        %3973 = vmatpush1.bf16.msra.mxu0 %v3620
        %3974 = vmatprep.subr.bf16.mxu0 0
        %3975 = vmatpush1.bf16.msra.mxu0 %v3621
        %3976 = vmatprep.subr.bf16.mxu0 0
        %3977 = vmatpush1.bf16.msra.mxu0 %v3622
        %3978 = vmatprep.subr.bf16.mxu0 0
        %3979 = vmatpush1.bf16.msra.mxu0 %v3623
        %3980 = vmatprep.subr.bf16.mxu0 0
        %3981 = vmatpush1.bf16.msra.mxu0 %v3624
        %3982 = vmatprep.subr.bf16.mxu0 0
        %3983 = vmatpush1.bf16.msra.mxu0 %v3625
        %3984 = vmatprep.subr.bf16.mxu0 0
        %3985 = vmatpush1.bf16.msra.mxu0 %v3626
        %3986 = vmatprep.subr.bf16.mxu0 0
        %3987 = vmatpush1.bf16.msra.mxu0 %v3627
        %3988 = vmatprep.subr.bf16.mxu0 0
        %3989 = vmatpush1.bf16.msra.mxu0 %v3628
        %3990 = vmatprep.subr.bf16.mxu0 0
        %3991 = vmatpush1.bf16.msra.mxu0 %v3629
        %3992 = vmatprep.subr.bf16.mxu0 0
        %3993 = vmatpush1.bf16.msra.mxu0 %v3630
        %3994 = vmatprep.subr.bf16.mxu0 0
        %3995 = vmatpush1.bf16.msra.mxu0 %v3631
        %3996 = vmatprep.subr.bf16.mxu0 0
        %3997 = vmatpush1.bf16.msra.mxu0 %v3632
        %3998 = vmatprep.subr.bf16.mxu0 0
        %3999 = vmatpush1.bf16.msra.mxu0 %v3633
        %4000 = vmatprep.subr.bf16.mxu0 0
        %4001 = vmatpush1.bf16.msra.mxu0 %v3634
        %4002 = vmatprep.subr.bf16.mxu0 0
        %4003 = vmatpush1.bf16.msra.mxu0 %v3635
        %4004 = vmatprep.mubr.bf16.mxu0 %v2780
        %4005 = vmatmul.mubr.bf16.gmra.mrb[0].mxu0 %v2779
        %v4006 = vpop.f32.mrb[0].mxu0
        %v4007 = vadd.f32 %v3967, %v4006
        %v4008 = vpop.f32.mrb[0].mxu0
        %v4009 = vpop.f32.mrb[0].mxu0
        %v4010 = vpop.f32.mrb[0].mxu0
        %4011 = vdwg.mxu0
        %4012 = vmatprep.subr.bf16.mxu0 0
        %4013 = vmatpush1.bf16.msra.mxu0 %v3636
        %4014 = vmatprep.subr.bf16.mxu0 0
        %4015 = vmatpush1.bf16.msra.mxu0 %v3637
        %4016 = vmatprep.subr.bf16.mxu0 0
        %4017 = vmatpush1.bf16.msra.mxu0 %v3638
        %4018 = vmatprep.subr.bf16.mxu0 0
        %4019 = vmatpush1.bf16.msra.mxu0 %v3639
        %4020 = vmatprep.subr.bf16.mxu0 0
        %4021 = vmatpush1.bf16.msra.mxu0 %v3640
        %4022 = vmatprep.subr.bf16.mxu0 0
        %4023 = vmatpush1.bf16.msra.mxu0 %v3641
        %4024 = vmatprep.subr.bf16.mxu0 0
        %4025 = vmatpush1.bf16.msra.mxu0 %v3642
        %4026 = vmatprep.subr.bf16.mxu0 0
        %4027 = vmatpush1.bf16.msra.mxu0 %v3643
        %4028 = vmatprep.subr.bf16.mxu0 0
        %4029 = vmatpush1.bf16.msra.mxu0 %v3644
        %4030 = vmatprep.subr.bf16.mxu0 0
        %4031 = vmatpush1.bf16.msra.mxu0 %v3645
        %4032 = vmatprep.subr.bf16.mxu0 0
        %4033 = vmatpush1.bf16.msra.mxu0 %v3646
        %4034 = vmatprep.subr.bf16.mxu0 0
        %4035 = vmatpush1.bf16.msra.mxu0 %v3647
        %4036 = vmatprep.subr.bf16.mxu0 0
        %4037 = vmatpush1.bf16.msra.mxu0 %v3648
        %4038 = vmatprep.subr.bf16.mxu0 0
        %4039 = vmatpush1.bf16.msra.mxu0 %v3649
        %4040 = vmatprep.subr.bf16.mxu0 0
        %4041 = vmatpush1.bf16.msra.mxu0 %v3650
        %4042 = vmatprep.subr.bf16.mxu0 0
        %4043 = vmatpush1.bf16.msra.mxu0 %v3651
        %4044 = vmatprep.mubr.bf16.mxu0 %v2782
        %4045 = vmatmul.mubr.bf16.gmra.mrb[0].mxu0 %v2781
        %v4046 = vpop.f32.mrb[0].mxu0
        %v4047 = vadd.f32 %v4007, %v4046
        %v4048 = vpop.f32.mrb[0].mxu0
        %v4049 = vpop.f32.mrb[0].mxu0
        %v4050 = vpop.f32.mrb[0].mxu0
        %4051 = vdwg.mxu0
        %4052 = vmatprep.subr.bf16.mxu0 0
        %4053 = vmatpush1.bf16.msra.mxu0 %v3652
        %4054 = vmatprep.subr.bf16.mxu0 0
        %4055 = vmatpush1.bf16.msra.mxu0 %v3653
        %4056 = vmatprep.subr.bf16.mxu0 0
        %4057 = vmatpush1.bf16.msra.mxu0 %v3654
        %4058 = vmatprep.subr.bf16.mxu0 0
        %4059 = vmatpush1.bf16.msra.mxu0 %v3655
        %4060 = vmatprep.subr.bf16.mxu0 0
        %4061 = vmatpush1.bf16.msra.mxu0 %v3656
        %4062 = vmatprep.subr.bf16.mxu0 0
        %4063 = vmatpush1.bf16.msra.mxu0 %v3657
        %4064 = vmatprep.subr.bf16.mxu0 0
        %4065 = vmatpush1.bf16.msra.mxu0 %v3658
        %4066 = vmatprep.subr.bf16.mxu0 0
        %4067 = vmatpush1.bf16.msra.mxu0 %v3659
        %4068 = vmatprep.subr.bf16.mxu0 0
        %4069 = vmatpush1.bf16.msra.mxu0 %v3660
        %4070 = vmatprep.subr.bf16.mxu0 0
        %4071 = vmatpush1.bf16.msra.mxu0 %v3661
        %4072 = vmatprep.subr.bf16.mxu0 0
        %4073 = vmatpush1.bf16.msra.mxu0 %v3662
        %4074 = vmatprep.subr.bf16.mxu0 0
        %4075 = vmatpush1.bf16.msra.mxu0 %v3663
        %4076 = vmatprep.subr.bf16.mxu0 0
        %4077 = vmatpush1.bf16.msra.mxu0 %v3664
        %4078 = vmatprep.subr.bf16.mxu0 0
        %4079 = vmatpush1.bf16.msra.mxu0 %v3665
        %4080 = vmatprep.subr.bf16.mxu0 0
        %4081 = vmatpush1.bf16.msra.mxu0 %v3666
        %4082 = vmatprep.subr.bf16.mxu0 0
        %4083 = vmatpush1.bf16.msra.mxu0 %v3667
        %4084 = vmatprep.mubr.bf16.mxu0 %v2784
        %4085 = vmatmul.mubr.bf16.gmra.mrb[0].mxu0 %v2783
        %v4086 = vpop.f32.mrb[0].mxu0
        %v4087 = vadd.f32 %v4047, %v4086
        %v4088 = vpop.f32.mrb[0].mxu0
        %v4089 = vpop.f32.mrb[0].mxu0
        %v4090 = vpop.f32.mrb[0].mxu0
        %4091 = vdwg.mxu0
        %4092 = vmatprep.subr.bf16.mxu0 0
        %4093 = vmatpush1.bf16.msra.mxu0 %v3668
        %4094 = vmatprep.subr.bf16.mxu0 0
        %4095 = vmatpush1.bf16.msra.mxu0 %v3669
        %4096 = vmatprep.subr.bf16.mxu0 0
        %4097 = vmatpush1.bf16.msra.mxu0 %v3670
        %4098 = vmatprep.subr.bf16.mxu0 0
        %4099 = vmatpush1.bf16.msra.mxu0 %v3671
        %4100 = vmatprep.subr.bf16.mxu0 0
        %4101 = vmatpush1.bf16.msra.mxu0 %v3672
        %4102 = vmatprep.subr.bf16.mxu0 0
        %4103 = vmatpush1.bf16.msra.mxu0 %v3673
        %4104 = vmatprep.subr.bf16.mxu0 0
        %4105 = vmatpush1.bf16.msra.mxu0 %v3674
        %4106 = vmatprep.subr.bf16.mxu0 0
        %4107 = vmatpush1.bf16.msra.mxu0 %v3675
        %4108 = vmatprep.subr.bf16.mxu0 0
        %4109 = vmatpush1.bf16.msra.mxu0 %v3676
        %4110 = vmatprep.subr.bf16.mxu0 0
        %4111 = vmatpush1.bf16.msra.mxu0 %v3677
        %4112 = vmatprep.subr.bf16.mxu0 0
        %4113 = vmatpush1.bf16.msra.mxu0 %v3678
        %4114 = vmatprep.subr.bf16.mxu0 0
        %4115 = vmatpush1.bf16.msra.mxu0 %v3679
        %4116 = vmatprep.subr.bf16.mxu0 0
        %4117 = vmatpush1.bf16.msra.mxu0 %v3680
        %4118 = vmatprep.subr.bf16.mxu0 0
        %4119 = vmatpush1.bf16.msra.mxu0 %v3681
        %4120 = vmatprep.subr.bf16.mxu0 0
        %4121 = vmatpush1.bf16.msra.mxu0 %v3682
        %4122 = vmatprep.subr.bf16.mxu0 0
        %4123 = vmatpush1.bf16.msra.mxu0 %v3683
        %4124 = vmatprep.mubr.bf16.mxu0 %v2786
        %4125 = vmatmul.mubr.bf16.gmra.mrb[0].mxu0 %v2785
        %v4126 = vpop.f32.mrb[0].mxu0
        %v4127 = vadd.f32 %v4087, %v4126
        %v4128 = vpop.f32.mrb[0].mxu0
        %v4129 = vpop.f32.mrb[0].mxu0
        %v4130 = vpop.f32.mrb[0].mxu0
        %4131 = vdwg.mxu0
        %v4132 = vmax.f32 %v4127, 0.0
        %v4133 = vpack.c.bf16 %v4132, %v4132
        %v4134 = vld [vmem:[#allocation13] sm:$0xf]
        %v4135 = vld [vmem:[#allocation13 + $0x4] sm:$0xf]
        %v4136 = vld [vmem:[#allocation13 + $0x8] sm:$0xf]
        %v4137 = vld [vmem:[#allocation13 + $0xc] sm:$0xf]
        %v4138 = vld [vmem:[#allocation13 + $0x10] sm:$0xf]
        %v4139 = vld [vmem:[#allocation13 + $0x14] sm:$0xf]
        %v4140 = vld [vmem:[#allocation13 + $0x18] sm:$0xf]
        %v4141 = vld [vmem:[#allocation13 + $0x1c] sm:$0xf]
        %v4142 = vld [vmem:[#allocation13 + $0x20] sm:$0xf]
        %v4143 = vld [vmem:[#allocation13 + $0x24] sm:$0xf]
        %v4144 = vld [vmem:[#allocation13 + $0x28] sm:$0xf]
        %v4145 = vld [vmem:[#allocation13 + $0x2c] sm:$0xf]
        %v4146 = vld [vmem:[#allocation13 + $0x30] sm:$0xf]
        %v4147 = vld [vmem:[#allocation13 + $0x34] sm:$0xf]
        %v4148 = vld [vmem:[#allocation13 + $0x38] sm:$0xf]
        %v4149 = vld [vmem:[#allocation13 + $0x3c] sm:$0xf]
        %v4150 = vld [vmem:[%s10] sm:$0x1]
        %v4167 = vunpack.c.l.b16 %v4134
        %v4168 = vunpack.c.l.b16 %v4135
        %v4169 = vunpack.c.l.b16 %v4136
        %v4170 = vunpack.c.l.b16 %v4137
        %v4171 = vunpack.c.l.b16 %v4138
        %v4172 = vunpack.c.l.b16 %v4139
        %v4173 = vunpack.c.l.b16 %v4140
        %v4174 = vunpack.c.l.b16 %v4141
        %v4175 = vunpack.c.l.b16 %v4142
        %v4176 = vunpack.c.l.b16 %v4143
        %v4177 = vunpack.c.l.b16 %v4144
        %v4178 = vunpack.c.l.b16 %v4145
        %v4179 = vunpack.c.l.b16 %v4146
        %v4180 = vunpack.c.l.b16 %v4147
        %v4181 = vunpack.c.l.b16 %v4148
        %v4182 = vunpack.c.l.b16 %v4149
        %v4183 = vpack.c.b16 %v4168, %v4167
        %v4184 = vpack.c.b16 %v4170, %v4169
        %v4185 = vpack.c.b16 %v4172, %v4171
        %v4186 = vpack.c.b16 %v4174, %v4173
        %v4187 = vpack.c.b16 %v4176, %v4175
        %v4188 = vpack.c.b16 %v4178, %v4177
        %v4189 = vpack.c.b16 %v4180, %v4179
        %v4190 = vpack.c.b16 %v4182, %v4181
        %4199 = vmatprep.subr.bf16.mxu0 0
        %4200 = vmatpush1.bf16.msra.mxu0 %v4183
        %4201 = vmatprep.subr.bf16.mxu0 0
        %4202 = vmatpush1.bf16.msra.mxu0 %v4184
        %4203 = vmatprep.subr.bf16.mxu0 0
        %4204 = vmatpush1.bf16.msra.mxu0 %v4185
        %4205 = vmatprep.subr.bf16.mxu0 0
        %4206 = vmatpush1.bf16.msra.mxu0 %v4186
        %4207 = vmatprep.subr.bf16.mxu0 0
        %4208 = vmatpush1.bf16.msra.mxu0 %v4187
        %4209 = vmatprep.subr.bf16.mxu0 0
        %4210 = vmatpush1.bf16.msra.mxu0 %v4188
        %4211 = vmatprep.subr.bf16.mxu0 0
        %4212 = vmatpush1.bf16.msra.mxu0 %v4189
        %4213 = vmatprep.subr.bf16.mxu0 0
        %4214 = vmatpush1.bf16.msra.mxu0 %v4190
        %4215 = vmatprep.subr.bf16.mxu0 0
        %4216 = vmatpush1.bf16.msra.mxu0 0
        %4217 = vmatprep.subr.bf16.mxu0 0
        %4218 = vmatpush1.bf16.msra.mxu0 0
        %4219 = vmatprep.subr.bf16.mxu0 0
        %4220 = vmatpush1.bf16.msra.mxu0 0
        %4221 = vmatprep.subr.bf16.mxu0 0
        %4222 = vmatpush1.bf16.msra.mxu0 0
        %4223 = vmatprep.subr.bf16.mxu0 0
        %4224 = vmatpush1.bf16.msra.mxu0 0
        %4225 = vmatprep.subr.bf16.mxu0 0
        %4226 = vmatpush1.bf16.msra.mxu0 0
        %4227 = vmatprep.subr.bf16.mxu0 0
        %4228 = vmatpush1.bf16.msra.mxu0 0
        %4229 = vmatprep.subr.bf16.mxu0 0
        %4230 = vmatpush1.bf16.msra.mxu0 0
        %4231 = vmatprep.mubr.bf16.mxu0 0
        %4232 = vmatmul.mubr.bf16.gmra.mrb[0].mxu0 %v4133
        %v4233 = vpop.f32.mrb[0].mxu0
        %v4234 = vadd.f32 %v4150, %v4233
        %v4235 = vpop.f32.mrb[0].mxu0
        %v4236 = vpop.f32.mrb[0].mxu0
        %v4237 = vpop.f32.mrb[0].mxu0
        %4238 = vdwg.mxu0
        %4239 = vst [vmem:[%s476] sm:$0x1] %v4234
        %s4240 = sand.u32 %s275, 1
        %s4241 = scalar_lea.sflag [#allocation6], %s4240
        %s4242 = sand.u32 %s275, 1
        %s4243 = scalar_lea.vmem [#allocation15], %s4242
        // Predicated region
        $region89: #{simple_cnn_forward.1} parent=63 // pred_check
          %p4244 = pneg %p285
        $region90: #{simple_cnn_forward.1} parent=63 // pred_check_branch
          %4246 = sbr.rel (%p4244) target = $region92
        $region91: #{simple_cnn_forward.1} parent=63 // pred_region
          %s4248 = ssub.s32 16, 16
          %4249 = vsyncadd %s4241, %s4248
          %s4250 = smul.addr %s31, 16
          %s4251 = scalar_lea.hbm %s11, %s4250
          %s4253 = sshll.u32 %s4243, 4
          %s4254 = int_to_ptr.vmem [resolvable:$true] %s4253
          %4256 = dma.vmem_to_hbm [thread:$0]  %s4254, 16, %s4251, %s4241
        $region92: #{simple_cnn_forward.1} parent=63 // pred_fallthru
          _
      $region64: #{simple_cnn_forward.1} parent=5 // pred_fallthru
        _
      %p4257 = scmp.le.s32.totalorder 2, %s26
      // Predicated region
      $region93: #{simple_cnn_forward.1} parent=5 // pred_check
        %p4258 = pneg %p4257
      $region94: #{simple_cnn_forward.1} parent=5 // pred_check_branch
        %4260 = sbr.rel (%p4258) target = $region96
      $region95: #{simple_cnn_forward.1} parent=5 // pred_region
        %s4261 = ssub.s32 %s26, 2
        // Predicated region
        $region97: #{simple_cnn_forward.1} parent=95 // pred_check
          %p4262 = pneg %p291
        $region98: #{simple_cnn_forward.1} parent=95 // pred_check_branch
          %4264 = sbr.rel (%p4262) target = $region100
        $region99: #{simple_cnn_forward.1} parent=95 // pred_region
          %s4265 = sand.u32 %s276, 1
          %s4266 = scalar_lea.sflag [#allocation6], %s4265
          %s4267 = sand.u32 %s276, 1
          %s4268 = scalar_lea.vmem [#allocation15], %s4267
          %4269 = dma.done %s4266, 16
        $region100: #{simple_cnn_forward.1} parent=95 // pred_fallthru
          _
      $region96: #{simple_cnn_forward.1} parent=5 // pred_fallthru
        _
    $region6: #{simple_cnn_forward.1} parent=1 // loop_footer
      %s30 = sadd.s32 1, %s26
    $region7: #{simple_cnn_forward.1} parent=1 // loop_footer_branch
      %25 = sbr.rel target = $region3
    $region8: #{simple_cnn_forward.1} parent=1 // loop_exit
      _
    %4270 = vsyncpa [#allocation5], 1
    %s4271 = scalar_lea.sflag [#allocation5], 1
    %4272 = vsyncpa %s4271, 1
    %4273 = vsyncpa [#allocation8], 1
    %4274 = vsyncpa [#allocation11], 1
    %4275 = vsyncpa [#allocation14], 1
    %4276 = vsyncpa [#allocation6], 1
    %s4277 = scalar_lea.sflag [#allocation6], 1
    %4278 = vsyncpa %s4277, 1

</llo_original>
